<compile_context>
chip_gen: v6e
topology: v6e:2x2x1
jax: 0.10.0
libtpu: 0.0.40
codegen_flags: <defaults>
</compile_context>

<pallas_src>
import functools

import jax
import jax.numpy as jnp
from jax.experimental import pallas as pl
from jax.experimental.pallas import tpu as pltpu


def _linear_attention_kernel(q_ref, k_ref, v_ref, ew_ref, eb_ref, fw_ref,
                             fb_ref, o_ref, ke_sc, vf_sc, *, dim, group,
                             head_dim):
    qi = pl.program_id(1)

    # Compute KE^T and VF once per batch group; reuse across all Q tiles.
    @pl.when(qi == 0)
    def _():
        k = k_ref[0]                       # (S, G*D), native dtype
        v = v_ref[0]                       # (S, G*D), native dtype
        # One wide (KP,S) x (S,G*D) MXU matmul per projection, f32 accumulate.
        ke = jnp.dot(ew_ref[...], k, preferred_element_type=jnp.float32)
        ke = ke + eb_ref[...]              # (KP,1) bias broadcast, once/group
        # Fold 1/sqrt(dim) into KE so (TQ,KP) score tiles never need scaling.
        ke = ke * (1.0 / jnp.sqrt(jnp.float32(dim)))
        ke_sc[...] = ke.astype(ke_sc.dtype)
        vf = jnp.dot(fw_ref[...], v, preferred_element_type=jnp.float32)
        vf_sc[...] = (vf + fb_ref[...]).astype(vf_sc.dtype)

    q = q_ref[0]                           # (TQ, G*D), native dtype
    ke = ke_sc[...]                        # (KP, G*D)
    vf = vf_sc[...]                        # (KP, G*D)

    outs = []
    for g in range(group):                 # static, small unrolled loop
        lo, hi = g * head_dim, (g + 1) * head_dim
        q_g = q[:, lo:hi]                  # (TQ, D)
        ke_g = ke[:, lo:hi]                # (KP, D)
        # scores = Q_g @ KE_g^T  (contract head_dim) -> (TQ, KP), f32 acc.
        s = jax.lax.dot_general(
            q_g, ke_g,
            dimension_numbers=(((1,), (1,)), ((), ())),
            preferred_element_type=jnp.float32)
        # Numerically stable softmax over k_proj, in f32.
        s_max = jnp.max(s, axis=-1, keepdims=True)
        p = jnp.exp(s - s_max)
        p = p * pl.reciprocal(jnp.sum(p, axis=-1, keepdims=True), approx=True)
        # TODO(synk): training-mode dropout on P (pltpu.prng_random_bits mask)
        # is not wired in; eval-mode dropout is the identity.
        vf_g = vf[:, lo:hi]                # (KP, D)
        outs.append(jnp.dot(p.astype(vf_g.dtype), vf_g,
                            preferred_element_type=jnp.float32))

    out = outs[0] if group == 1 else jnp.concatenate(outs, axis=-1)
    o_ref[0] = out.astype(o_ref.dtype)     # one lane-dense (TQ, G*D) store


def _pick_group(batch, head_dim, max_lanes=512):
    # Largest divisor of `batch` whose packed lane width G*D stays <= max_lanes.
    for g in range(batch, 0, -1):
        if batch % g == 0 and g * head_dim <= max_lanes:
            return g
    return 1


def _pick_q_tile(seq, cap=128):
    # Largest multiple-of-8 divisor of seq not exceeding `cap`; else whole seq.
    for t in range(cap, 7, -8):
        if seq % t == 0:
            return t
    return seq


def linear_attention_heads(Q, K, V, E_w, E_b, F_w, F_b, *, dim):
    B, S, D = Q.shape
    KP = E_w.shape[0]

    G = _pick_group(B, D)
    BG = B // G
    TQ = _pick_q_tile(S)
    GD = G * D

    # Layout plumbing: pack G batch elements along the lane axis so the kernel
    # sees lane-dense (S, G*D) slabs (wide MXU tiles, unmasked output stores).
    def to_slab(x):
        return x.reshape(BG, G, S, D).transpose(0, 2, 1, 3).reshape(BG, S, GD)

    Qs, Ks, Vs = to_slab(Q), to_slab(K), to_slab(V)
    # Biases kept in their native dtype; added once per batch group on the
    # (KP, G*D) accumulation, so the padded (KP,1) block cost is negligible.
    eb2 = E_b.reshape(KP, 1)
    fb2 = F_b.reshape(KP, 1)

    kernel = functools.partial(_linear_attention_kernel, dim=dim, group=G,
                               head_dim=D)

    itemsize = jnp.dtype(Q.dtype).itemsize
    w_itemsize = jnp.dtype(E_w.dtype).itemsize
    # Double-buffered working-set estimate (keeps v7x's 64 MiB honest).
    # Note: E_w/F_w/bias and the K/V slab index_maps are constant along the
    # Q-tile axis, so they are DMA'd at most once per batch group; the second
    # pipeline buffer is merely idle VMEM.
    working_set = (
        2 * TQ * GD * itemsize          # Q blocks
        + 2 * 2 * S * GD * itemsize     # K, V blocks
        + 2 * 2 * KP * S * w_itemsize   # E_w, F_w
        + 2 * 2 * KP * 128 * 4          # biases (lane padded)
        + 2 * TQ * GD * itemsize        # out blocks
        + 2 * KP * GD * 4               # KE / VF scratch
    )
    vmem_limit = int(min(64 * 1024 * 1024,
                         max(2 * working_set, 8 * 1024 * 1024)))

    cost = pl.CostEstimate(
        flops=8 * B * S * D * KP,       # 2 projections + scores + PV
        transcendentals=B * S * KP,     # softmax exp
        bytes_accessed=(4 * B * S * D * itemsize
                        + 2 * KP * S * w_itemsize
                        + 2 * KP * jnp.dtype(E_b.dtype).itemsize),
    )

    out_slab = pl.pallas_call(
        kernel,
        out_shape=jax.ShapeDtypeStruct((BG, S, GD), Q.dtype),
        grid_spec=pltpu.PrefetchScalarGridSpec(
            num_scalar_prefetch=0,
            grid=(BG, S // TQ),
            in_specs=[
                pl.BlockSpec((1, TQ, GD), lambda b, q: (b, q, 0)),   # Q slab
                pl.BlockSpec((1, S, GD), lambda b, q: (b, 0, 0)),    # K slab
                pl.BlockSpec((1, S, GD), lambda b, q: (b, 0, 0)),    # V slab
                pl.BlockSpec((KP, S), lambda b, q: (0, 0)),          # E weight
                pl.BlockSpec((KP, 1), lambda b, q: (0, 0)),          # E bias
                pl.BlockSpec((KP, S), lambda b, q: (0, 0)),          # F weight
                pl.BlockSpec((KP, 1), lambda b, q: (0, 0)),          # F bias
            ],
            out_specs=pl.BlockSpec((1, TQ, GD), lambda b, q: (b, q, 0)),
            scratch_shapes=[
                pltpu.VMEM((KP, GD), Q.dtype),    # KE^T (biased + pre-scaled)
                pltpu.VMEM((KP, GD), V.dtype),    # VF
            ],
        ),
        compiler_params=pltpu.CompilerParams(
            dimension_semantics=("parallel", "arbitrary"),
            vmem_limit_bytes=vmem_limit,
        ),
        cost_estimate=cost,
    )(Qs, Ks, Vs, E_w, eb2, F_w, fb2)

    # Undo the lane packing: (BG, S, G*D) -> (B, S, D).
    return out_slab.reshape(BG, S, G, D).transpose(0, 2, 1, 3).reshape(B, S, D)


def _reference(Q, K, V, E_w, E_b, F_w, F_b, dim):
    # Pure-JAX mirror of the PyTorch forward (eval mode, full_attention=False).
    Kt = jnp.swapaxes(K, 1, 2)                        # (B, D, S)
    KE = jnp.einsum('bds,ks->bdk', Kt, E_w) + E_b     # (B, D, k_proj)
    S_ = jnp.einsum('bnd,bdk->bnk', Q, KE) / jnp.sqrt(jnp.float32(dim))
    P = jax.nn.softmax(S_, axis=-1)
    Vt = jnp.swapaxes(V, 1, 2)                        # (B, D, S)
    VF = jnp.einsum('bds,ks->bdk', Vt, F_w) + F_b     # (B, D, k_proj)
    VF = jnp.swapaxes(VF, 1, 2)                       # (B, k_proj, D)
    return jnp.einsum('bnk,bkd->bnd', P, VF)


if __name__ == "__main__":
    B, SEQ, DIM, KPROJ = 4, 256, 32, 32   # batch, seq_len, head_dim, proj dim

    key = jax.random.PRNGKey(0)
    kq, kk, kv, kew, keb, kfw, kfb = jax.random.split(key, 7)

    Q = jax.random.normal(kq, (B, SEQ, DIM), dtype=jnp.float32)
    K = jax.random.normal(kk, (B, SEQ, DIM), dtype=jnp.float32)
    V = jax.random.normal(kv, (B, SEQ, DIM), dtype=jnp.float32)

    # Deterministic nn.Linear-style parameters: E, F : seq -> k_proj.
    bound = 1.0 / (SEQ ** 0.5)
    E_w = jax.random.uniform(kew, (KPROJ, SEQ), jnp.float32, -bound, bound)
    E_b = jax.random.uniform(keb, (KPROJ,), jnp.float32, -bound, bound)
    F_w = jax.random.uniform(kfw, (KPROJ, SEQ), jnp.float32, -bound, bound)
    F_b = jax.random.uniform(kfb, (KPROJ,), jnp.float32, -bound, bound)

    out = linear_attention_heads(Q, K, V, E_w, E_b, F_w, F_b, dim=DIM)
    out = jax.block_until_ready(out)

    ref = _reference(Q, K, V, E_w, E_b, F_w, F_b, DIM)
    assert out.shape == (B, SEQ, DIM)
    assert jnp.allclose(out, ref, atol=2e-3, rtol=2e-3), "mismatch vs reference"

    print("KERNEL_OK")
</pallas_src>

<mosaic_0001>
module attributes {stable_mosaic.version = 11 : i64} {
  func.func @_linear_attention_kernel(%arg0: i32, %arg1: i32, %arg2: memref<1x128x128xf32, #tpu.memory_space<vmem>>, %arg3: memref<1x256x128xf32, #tpu.memory_space<vmem>>, %arg4: memref<1x256x128xf32, #tpu.memory_space<vmem>>, %arg5: memref<32x256xf32, #tpu.memory_space<vmem>>, %arg6: memref<32x1xf32, #tpu.memory_space<vmem>>, %arg7: memref<32x256xf32, #tpu.memory_space<vmem>>, %arg8: memref<32x1xf32, #tpu.memory_space<vmem>>, %arg9: memref<1x128x128xf32, #tpu.memory_space<vmem>>, %arg10: memref<32x128xf32, #tpu.memory_space<vmem>>, %arg11: memref<32x128xf32, #tpu.memory_space<vmem>>) attributes {dimension_semantics = [#tpu.dimension_semantics<parallel>, #tpu.dimension_semantics<arbitrary>], iteration_bounds = array<i64: 1, 2>, scalar_prefetch = 0 : i64, scratch_operands = 2 : i64, tpu.core_type = #tpu.core_type<tc>, window_params = [{transform_indices = @transform_0, window_bounds = array<i64: 1, 128, 128>}, {transform_indices = @transform_1, window_bounds = array<i64: 1, 256, 128>}, {transform_indices = @transform_2, window_bounds = array<i64: 1, 256, 128>}, {pipeline_mode = #tpu.pipeline_mode<synchronous>, transform_indices = @transform_3, window_bounds = array<i64: 32, 256>}, {pipeline_mode = #tpu.pipeline_mode<synchronous>, transform_indices = @transform_4, window_bounds = array<i64: 32, 1>}, {pipeline_mode = #tpu.pipeline_mode<synchronous>, transform_indices = @transform_5, window_bounds = array<i64: 32, 256>}, {pipeline_mode = #tpu.pipeline_mode<synchronous>, transform_indices = @transform_6, window_bounds = array<i64: 32, 1>}, {transform_indices = @transform_7, window_bounds = array<i64: 1, 128, 128>}]} {
    %c0_i32 = arith.constant 0 : i32
    %0 = arith.cmpi eq, %arg1, %c0_i32 : i32
    %1 = arith.extui %0 : i1 to i32
    %c0_i32_0 = arith.constant 0 : i32
    %2 = arith.cmpi ne, %1, %c0_i32_0 : i32
    scf.if %2 {
      %c0_25 = arith.constant 0 : index
      %c0_26 = arith.constant 0 : index
      %c0_27 = arith.constant 0 : index
      %71 = vector.load %arg3[%c0_25, %c0_26, %c0_27] : memref<1x256x128xf32, #tpu.memory_space<vmem>>, vector<1x256x128xf32>
      %72 = vector.shape_cast %71 : vector<1x256x128xf32> to vector<256x128xf32>
      %c0_28 = arith.constant 0 : index
      %c0_29 = arith.constant 0 : index
      %c0_30 = arith.constant 0 : index
      %73 = vector.load %arg4[%c0_28, %c0_29, %c0_30] : memref<1x256x128xf32, #tpu.memory_space<vmem>>, vector<1x256x128xf32>
      %74 = vector.shape_cast %73 : vector<1x256x128xf32> to vector<256x128xf32>
      %c0_31 = arith.constant 0 : index
      %c0_32 = arith.constant 0 : index
      %75 = vector.load %arg5[%c0_31, %c0_32] : memref<32x256xf32, #tpu.memory_space<vmem>>, vector<32x256xf32>
      %cst_33 = arith.constant dense<0.000000e+00> : vector<32x128xf32>
      %76 = tpu.matmul %75, %72, %cst_33 {dimension_numbers = #tpu.dot_dimension_numbers<[1], [0], [0], [1], [0, 0, 1, 1], [], []>} : vector<32x256xf32>, vector<256x128xf32>, vector<32x128xf32> -> vector<32x128xf32>
      %c0_34 = arith.constant 0 : index
      %c0_35 = arith.constant 0 : index
      %77 = vector.load %arg6[%c0_34, %c0_35] : memref<32x1xf32, #tpu.memory_space<vmem>>, vector<32x1xf32>
      %78 = vector.broadcast %77 : vector<32x1xf32> to vector<32x128xf32>
      %79 = arith.addf %76, %78 : vector<32x128xf32>
      %cst_36 = arith.constant 3.200000e+01 : f32
      %80 = math.sqrt %cst_36 : f32
      %cst_37 = arith.constant 1.000000e+00 : f32
      %81 = arith.divf %cst_37, %80 : f32
      %82 = vector.broadcast %81 : f32 to vector<32x128xf32>
      %83 = arith.mulf %79, %82 : vector<32x128xf32>
      %c0_38 = arith.constant 0 : index
      %c0_39 = arith.constant 0 : index
      %84 = vector.load %arg10[%c0_38, %c0_39] : memref<32x128xf32, #tpu.memory_space<vmem>>, vector<32x128xf32>
      tpu.vector_store %arg10[%c0_38, %c0_39], %83 {strides = array<i32>} : memref<32x128xf32, #tpu.memory_space<vmem>>, vector<32x128xf32>,
      %c0_40 = arith.constant 0 : index
      %c0_41 = arith.constant 0 : index
      %85 = vector.load %arg7[%c0_40, %c0_41] : memref<32x256xf32, #tpu.memory_space<vmem>>, vector<32x256xf32>
      %cst_42 = arith.constant dense<0.000000e+00> : vector<32x128xf32>
      %86 = tpu.matmul %85, %74, %cst_42 {dimension_numbers = #tpu.dot_dimension_numbers<[1], [0], [0], [1], [0, 0, 1, 1], [], []>} : vector<32x256xf32>, vector<256x128xf32>, vector<32x128xf32> -> vector<32x128xf32>
      %c0_43 = arith.constant 0 : index
      %c0_44 = arith.constant 0 : index
      %87 = vector.load %arg8[%c0_43, %c0_44] : memref<32x1xf32, #tpu.memory_space<vmem>>, vector<32x1xf32>
      %88 = vector.broadcast %87 : vector<32x1xf32> to vector<32x128xf32>
      %89 = arith.addf %86, %88 : vector<32x128xf32>
      %c0_45 = arith.constant 0 : index
      %c0_46 = arith.constant 0 : index
      %90 = vector.load %arg11[%c0_45, %c0_46] : memref<32x128xf32, #tpu.memory_space<vmem>>, vector<32x128xf32>
      tpu.vector_store %arg11[%c0_45, %c0_46], %89 {strides = array<i32>} : memref<32x128xf32, #tpu.memory_space<vmem>>, vector<32x128xf32>,
    } else {
    }
    %c0 = arith.constant 0 : index
    %c0_1 = arith.constant 0 : index
    %c0_2 = arith.constant 0 : index
    %3 = vector.load %arg2[%c0, %c0_1, %c0_2] : memref<1x128x128xf32, #tpu.memory_space<vmem>>, vector<1x128x128xf32>
    %4 = vector.shape_cast %3 : vector<1x128x128xf32> to vector<128x128xf32>
    %c0_3 = arith.constant 0 : index
    %c0_4 = arith.constant 0 : index
    %5 = vector.load %arg10[%c0_3, %c0_4] : memref<32x128xf32, #tpu.memory_space<vmem>>, vector<32x128xf32>
    %c0_5 = arith.constant 0 : index
    %c0_6 = arith.constant 0 : index
    %6 = vector.load %arg11[%c0_5, %c0_6] : memref<32x128xf32, #tpu.memory_space<vmem>>, vector<32x128xf32>
    %7 = vector.extract_strided_slice %4 {offsets = [0, 0], sizes = [128, 32], strides = [1, 1]} : vector<128x128xf32> to vector<128x32xf32>
    %8 = vector.extract_strided_slice %5 {offsets = [0, 0], sizes = [32, 32], strides = [1, 1]} : vector<32x128xf32> to vector<32x32xf32>
    %cst = arith.constant dense<0.000000e+00> : vector<128x32xf32>
    %9 = tpu.matmul %7, %8, %cst {dimension_numbers = #tpu.dot_dimension_numbers<[1], [1], [0], [0], [0, 0, 1, 0], [], []>} : vector<128x32xf32>, vector<32x32xf32>, vector<128x32xf32> -> vector<128x32xf32>
    %cst_7 = arith.constant dense<0xFF800000> : vector<128xf32>
    %10 = vector.multi_reduction <maximumf>, %9, %cst_7 [1] : vector<128x32xf32> to vector<128xf32>
    %11 = vector.shape_cast %10 : vector<128xf32> to vector<128x1xf32>
    %12 = vector.broadcast %11 : vector<128x1xf32> to vector<128x32xf32>
    %13 = arith.subf %9, %12 : vector<128x32xf32>
    %14 = math.exp %13 : vector<128x32xf32>
    %cst_8 = arith.constant dense<0.000000e+00> : vector<128xf32>
    %15 = vector.multi_reduction <add>, %14, %cst_8 [1] : vector<128x32xf32> to vector<128xf32>
    %16 = vector.shape_cast %15 : vector<128xf32> to vector<128x1xf32>
    %17 = tpu.reciprocal %16 {approx = true} : vector<128x1xf32> -> vector<128x1xf32>
    %18 = vector.broadcast %17 : vector<128x1xf32> to vector<128x32xf32>
    %19 = arith.mulf %14, %18 : vector<128x32xf32>
    %20 = vector.extract_strided_slice %6 {offsets = [0, 0], sizes = [32, 32], strides = [1, 1]} : vector<32x128xf32> to vector<32x32xf32>
    %cst_9 = arith.constant dense<0.000000e+00> : vector<128x32xf32>
    %21 = tpu.matmul %19, %20, %cst_9 {dimension_numbers = #tpu.dot_dimension_numbers<[1], [0], [0], [1], [0, 0, 1, 1], [], []>} : vector<128x32xf32>, vector<32x32xf32>, vector<128x32xf32> -> vector<128x32xf32>
    %22 = vector.extract_strided_slice %4 {offsets = [0, 32], sizes = [128, 32], strides = [1, 1]} : vector<128x128xf32> to vector<128x32xf32>
    %23 = vector.extract_strided_slice %5 {offsets = [0, 32], sizes = [32, 32], strides = [1, 1]} : vector<32x128xf32> to vector<32x32xf32>
    %cst_10 = arith.constant dense<0.000000e+00> : vector<128x32xf32>
    %24 = tpu.matmul %22, %23, %cst_10 {dimension_numbers = #tpu.dot_dimension_numbers<[1], [1], [0], [0], [0, 0, 1, 0], [], []>} : vector<128x32xf32>, vector<32x32xf32>, vector<128x32xf32> -> vector<128x32xf32>
    %cst_11 = arith.constant dense<0xFF800000> : vector<128xf32>
    %25 = vector.multi_reduction <maximumf>, %24, %cst_11 [1] : vector<128x32xf32> to vector<128xf32>
    %26 = vector.shape_cast %25 : vector<128xf32> to vector<128x1xf32>
    %27 = vector.broadcast %26 : vector<128x1xf32> to vector<128x32xf32>
    %28 = arith.subf %24, %27 : vector<128x32xf32>
    %29 = math.exp %28 : vector<128x32xf32>
    %cst_12 = arith.constant dense<0.000000e+00> : vector<128xf32>
    %30 = vector.multi_reduction <add>, %29, %cst_12 [1] : vector<128x32xf32> to vector<128xf32>
    %31 = vector.shape_cast %30 : vector<128xf32> to vector<128x1xf32>
    %32 = tpu.reciprocal %31 {approx = true} : vector<128x1xf32> -> vector<128x1xf32>
    %33 = vector.broadcast %32 : vector<128x1xf32> to vector<128x32xf32>
    %34 = arith.mulf %29, %33 : vector<128x32xf32>
    %35 = vector.extract_strided_slice %6 {offsets = [0, 32], sizes = [32, 32], strides = [1, 1]} : vector<32x128xf32> to vector<32x32xf32>
    %cst_13 = arith.constant dense<0.000000e+00> : vector<128x32xf32>
    %36 = tpu.matmul %34, %35, %cst_13 {dimension_numbers = #tpu.dot_dimension_numbers<[1], [0], [0], [1], [0, 0, 1, 1], [], []>} : vector<128x32xf32>, vector<32x32xf32>, vector<128x32xf32> -> vector<128x32xf32>
    %37 = vector.extract_strided_slice %4 {offsets = [0, 64], sizes = [128, 32], strides = [1, 1]} : vector<128x128xf32> to vector<128x32xf32>
    %38 = vector.extract_strided_slice %5 {offsets = [0, 64], sizes = [32, 32], strides = [1, 1]} : vector<32x128xf32> to vector<32x32xf32>
    %cst_14 = arith.constant dense<0.000000e+00> : vector<128x32xf32>
    %39 = tpu.matmul %37, %38, %cst_14 {dimension_numbers = #tpu.dot_dimension_numbers<[1], [1], [0], [0], [0, 0, 1, 0], [], []>} : vector<128x32xf32>, vector<32x32xf32>, vector<128x32xf32> -> vector<128x32xf32>
    %cst_15 = arith.constant dense<0xFF800000> : vector<128xf32>
    %40 = vector.multi_reduction <maximumf>, %39, %cst_15 [1] : vector<128x32xf32> to vector<128xf32>
    %41 = vector.shape_cast %40 : vector<128xf32> to vector<128x1xf32>
    %42 = vector.broadcast %41 : vector<128x1xf32> to vector<128x32xf32>
    %43 = arith.subf %39, %42 : vector<128x32xf32>
    %44 = math.exp %43 : vector<128x32xf32>
    %cst_16 = arith.constant dense<0.000000e+00> : vector<128xf32>
    %45 = vector.multi_reduction <add>, %44, %cst_16 [1] : vector<128x32xf32> to vector<128xf32>
    %46 = vector.shape_cast %45 : vector<128xf32> to vector<128x1xf32>
    %47 = tpu.reciprocal %46 {approx = true} : vector<128x1xf32> -> vector<128x1xf32>
    %48 = vector.broadcast %47 : vector<128x1xf32> to vector<128x32xf32>
    %49 = arith.mulf %44, %48 : vector<128x32xf32>
    %50 = vector.extract_strided_slice %6 {offsets = [0, 64], sizes = [32, 32], strides = [1, 1]} : vector<32x128xf32> to vector<32x32xf32>
    %cst_17 = arith.constant dense<0.000000e+00> : vector<128x32xf32>
    %51 = tpu.matmul %49, %50, %cst_17 {dimension_numbers = #tpu.dot_dimension_numbers<[1], [0], [0], [1], [0, 0, 1, 1], [], []>} : vector<128x32xf32>, vector<32x32xf32>, vector<128x32xf32> -> vector<128x32xf32>
    %52 = vector.extract_strided_slice %4 {offsets = [0, 96], sizes = [128, 32], strides = [1, 1]} : vector<128x128xf32> to vector<128x32xf32>
    %53 = vector.extract_strided_slice %5 {offsets = [0, 96], sizes = [32, 32], strides = [1, 1]} : vector<32x128xf32> to vector<32x32xf32>
    %cst_18 = arith.constant dense<0.000000e+00> : vector<128x32xf32>
    %54 = tpu.matmul %52, %53, %cst_18 {dimension_numbers = #tpu.dot_dimension_numbers<[1], [1], [0], [0], [0, 0, 1, 0], [], []>} : vector<128x32xf32>, vector<32x32xf32>, vector<128x32xf32> -> vector<128x32xf32>
    %cst_19 = arith.constant dense<0xFF800000> : vector<128xf32>
    %55 = vector.multi_reduction <maximumf>, %54, %cst_19 [1] : vector<128x32xf32> to vector<128xf32>
    %56 = vector.shape_cast %55 : vector<128xf32> to vector<128x1xf32>
    %57 = vector.broadcast %56 : vector<128x1xf32> to vector<128x32xf32>
    %58 = arith.subf %54, %57 : vector<128x32xf32>
    %59 = math.exp %58 : vector<128x32xf32>
    %cst_20 = arith.constant dense<0.000000e+00> : vector<128xf32>
    %60 = vector.multi_reduction <add>, %59, %cst_20 [1] : vector<128x32xf32> to vector<128xf32>
    %61 = vector.shape_cast %60 : vector<128xf32> to vector<128x1xf32>
    %62 = tpu.reciprocal %61 {approx = true} : vector<128x1xf32> -> vector<128x1xf32>
    %63 = vector.broadcast %62 : vector<128x1xf32> to vector<128x32xf32>
    %64 = arith.mulf %59, %63 : vector<128x32xf32>
    %65 = vector.extract_strided_slice %6 {offsets = [0, 96], sizes = [32, 32], strides = [1, 1]} : vector<32x128xf32> to vector<32x32xf32>
    %cst_21 = arith.constant dense<0.000000e+00> : vector<128x32xf32>
    %66 = tpu.matmul %64, %65, %cst_21 {dimension_numbers = #tpu.dot_dimension_numbers<[1], [0], [0], [1], [0, 0, 1, 1], [], []>} : vector<128x32xf32>, vector<32x32xf32>, vector<128x32xf32> -> vector<128x32xf32>
    %67 = tpu.concatenate %21, %36, %51, %66 in 1 : vector<128x32xf32>, vector<128x32xf32>, vector<128x32xf32>, vector<128x32xf32> -> vector<128x128xf32>
    %c0_22 = arith.constant 0 : index
    %c0_23 = arith.constant 0 : index
    %c0_24 = arith.constant 0 : index
    %68 = vector.load %arg9[%c0_22, %c0_23, %c0_24] : memref<1x128x128xf32, #tpu.memory_space<vmem>>, vector<1x128x128xf32>
    %69 = vector.shape_cast %68 : vector<1x128x128xf32> to vector<128x128xf32>
    %70 = vector.shape_cast %67 : vector<128x128xf32> to vector<1x128x128xf32>
    tpu.vector_store %arg9[%c0_22, %c0_23, %c0_24], %70 {strides = array<i32>} : memref<1x128x128xf32, #tpu.memory_space<vmem>>, vector<1x128x128xf32>,
    return
  }
  func.func @transform_0(%arg0: i32, %arg1: i32) -> (i32, i32, i32) {
    %c0_i32 = arith.constant 0 : i32
    %c0_i32_0 = arith.constant 0 : i32
    return %arg0, %arg1, %c0_i32 : i32, i32, i32
  }
  func.func @transform_1(%arg0: i32, %arg1: i32) -> (i32, i32, i32) {
    %c0_i32 = arith.constant 0 : i32
    %c0_i32_0 = arith.constant 0 : i32
    %c0_i32_1 = arith.constant 0 : i32
    return %arg0, %c0_i32, %c0_i32_0 : i32, i32, i32
  }
  func.func @transform_2(%arg0: i32, %arg1: i32) -> (i32, i32, i32) {
    %c0_i32 = arith.constant 0 : i32
    %c0_i32_0 = arith.constant 0 : i32
    %c0_i32_1 = arith.constant 0 : i32
    return %arg0, %c0_i32, %c0_i32_0 : i32, i32, i32
  }
  func.func @transform_3(%arg0: i32, %arg1: i32) -> (i32, i32) {
    %c0_i32 = arith.constant 0 : i32
    %c0_i32_0 = arith.constant 0 : i32
    %c0_i32_1 = arith.constant 0 : i32
    return %c0_i32, %c0_i32_0 : i32, i32
  }
  func.func @transform_4(%arg0: i32, %arg1: i32) -> (i32, i32) {
    %c0_i32 = arith.constant 0 : i32
    %c0_i32_0 = arith.constant 0 : i32
    %c0_i32_1 = arith.constant 0 : i32
    return %c0_i32, %c0_i32_0 : i32, i32
  }
  func.func @transform_5(%arg0: i32, %arg1: i32) -> (i32, i32) {
    %c0_i32 = arith.constant 0 : i32
    %c0_i32_0 = arith.constant 0 : i32
    %c0_i32_1 = arith.constant 0 : i32
    return %c0_i32, %c0_i32_0 : i32, i32
  }
  func.func @transform_6(%arg0: i32, %arg1: i32) -> (i32, i32) {
    %c0_i32 = arith.constant 0 : i32
    %c0_i32_0 = arith.constant 0 : i32
    %c0_i32_1 = arith.constant 0 : i32
    return %c0_i32, %c0_i32_0 : i32, i32
  }
  func.func @transform_7(%arg0: i32, %arg1: i32) -> (i32, i32, i32) {
    %c0_i32 = arith.constant 0 : i32
    %c0_i32_0 = arith.constant 0 : i32
    return %arg0, %arg1, %c0_i32 : i32, i32, i32
  }
}

</mosaic_0001>

<llo_original>
// kernel: tpu_custom_call.1
$region0: #{tpu_custom_call.1}
  #allocation0 [shape = 'u32[]', space=smem, size = 0x4, offset = 0x4, fixed_abs, tag = 'smem constant byte address 0x4 - core index']
  #allocation1 [shape = 'u32[144,128]{1,0:T(1,128)}', space=vmem, size = 0x12000, scoped, tag = 'internal scratch']
  #allocation2 [shape = 'f32[32,128]{1,0:T(8,128)}', space=vmem, size = 0x4000, scoped, tag = 'scratch operand']
  #allocation3 [shape = 'f32[32,128]{1,0:T(8,128)}', space=vmem, size = 0x4000, scoped, tag = 'scratch operand']
  %s0 = inlined_call_operand.hbm [shape: f32[1,256,128], index: 0, kind: input, shape index: {}]
  %s1 = inlined_call_operand.hbm [shape: f32[1,256,128], index: 1, kind: input, shape index: {}]
  %s2 = inlined_call_operand.hbm [shape: f32[1,256,128], index: 2, kind: input, shape index: {}]
  %s3 = inlined_call_operand.vmem [shape: f32[32,256], index: 3, kind: input, shape index: {}]
  %s4 = inlined_call_operand.vmem [shape: f32[32,1], index: 4, kind: input, shape index: {}]
  %s5 = inlined_call_operand.hbm [shape: f32[32,256], index: 5, kind: input, shape index: {}]
  %s6 = inlined_call_operand.vmem [shape: f32[32,1], index: 6, kind: input, shape index: {}]
  %s7 = inlined_call_operand.hbm [shape: f32[1,256,128], index: 7, kind: output, shape index: {}]
  %s8 = sld [smem:[#allocation0]]
  $region81: #{tpu_custom_call.1} parent=0
    _
  %s10 = ssub.s32 1, %s8
  %s11 = scalar_select 0, %s10, %s8
  $region1: #{tpu_custom_call.1} parent=0
    #allocation4 [shape = 'u8[131072]{0}', space=vmem, size = 0x20000, scoped, tag = 'input window, operand 0']
    #allocation5 [shape = 's32[2]{0}', space=sflag, size = 0x8, scoped, tag = 'scoped memory for tpu_custom_call.1']
    #allocation6 [shape = 's32[2]{0}', space=sflag, size = 0x8, scoped, tag = 'scoped memory for tpu_custom_call.1']
    #allocation7 [shape = 'u8[131072]{0}', space=vmem, size = 0x20000, scoped, tag = 'input window, operand 1, single buffered']
    #allocation8 [shape = 's32[1]{0}', space=sflag, size = 0x4, scoped, tag = 'scoped memory for tpu_custom_call.1']
    #allocation9 [shape = 'u8[131072]{0}', space=vmem, size = 0x20000, scoped, tag = 'input window, operand 2, single buffered']
    #allocation10 [shape = 'u8[32768]{0}', space=vmem, size = 0x8000, scoped, tag = 'input window, operand 5, single buffered']
    #allocation11 [shape = 's32[1]{0}', space=sflag, size = 0x4, scoped, tag = 'scoped memory for tpu_custom_call.1']
    #allocation12 [shape = 'u8[131072]{0}', space=vmem, size = 0x20000, scoped, tag = 'output window, operand 0']
    %12 = vsyncpa [#allocation5], 0
    %s13 = scalar_lea.sflag [#allocation5], 1
    %14 = vsyncpa %s13, 0
    %15 = vsyncpa [#allocation8], 0
    %16 = vsyncpa [#allocation11], 0
    %17 = vsyncpa [#allocation6], 0
    %s18 = scalar_lea.sflag [#allocation6], 1
    %19 = vsyncpa %s18, 0
    loop: start=0, step=1, limit=4
    $region2: #{tpu_custom_call.1} parent=1 // loop_pre_header
      _
    $region3: #{tpu_custom_call.1} parent=1 // loop_header
      %s21 = sphi 0, %s25
      %p22 = scmp.ge.s32.totalorder %s21, 4
      %s28 = sphi 0, %s40
      %s29 = sphi 0, %s36
      %s30 = sphi 0, %s28
      %s31 = sphi 0, %s29
      %s32 = sphi 0, %s30
      %s33 = sphi 0, %s31
      %s45 = sphi 0, %s47
      %s48 = sphi 0, %s45
      %s49 = sphi 0, %s48
      %s65 = sphi 0, %s49
      %s71 = sphi 0, %s73
      %s74 = sphi 0, %s71
      %s75 = sphi 0, %s74
      %s91 = sphi 0, %s75
      %s97 = sphi 0, %s99
      %s100 = sphi 0, %s97
      %s101 = sphi 0, %s100
      %s117 = sphi 0, %s101
      %s121 = sphi 0, %s121
      %s123 = sphi 0, %s121
      %s124 = sphi 0, %s123
      %s138 = sphi 0, %s124
      %s142 = sphi 0, %s142
      %s144 = sphi 0, %s142
      %s145 = sphi 0, %s144
      %s159 = sphi 0, %s145
      %s163 = sphi 0, %s163
      %s165 = sphi 0, %s163
      %s166 = sphi 0, %s165
      %s180 = sphi 0, %s166
      %s184 = sphi 0, %s184
      %s186 = sphi 0, %s184
      %s187 = sphi 0, %s186
      %s201 = sphi 0, %s187
      %s209 = sphi 0, %s211
      %s212 = sphi 0, %s209
      %s213 = sphi 0, %s212
      %s229 = sphi 0, %s213
    $region4: #{tpu_custom_call.1} parent=1 // loop_header_branch
      %24 = sbr.rel (%p22) target = $region8
    $region5: #{tpu_custom_call.1} parent=1 // loop_body
      %s26 = ssub.s32 %s21, 1
      %s27 = ssub.s32 %s21, 2
      %s34 = sadd.s32 1, %s29
      %p35 = scmp.ge.s32.totalorder %s34, 2
      %s36 = scalar_select %p35, 0, %s34
      %s37 = sadd.s32 1, %s28
      %s38 = scalar_select %p35, %s37, %s28
      %p39 = scmp.ge.s32.totalorder %s38, 1
      %s40 = scalar_select %p39, 0, %s38
      %s41 = ssub.s32 %s28, %s40
      %s42 = ssub.s32 %s29, %s36
      %s43 = sor.u32 %s41, %s42
      %p44 = scmp.eq.s32.totalorder %s43, 0
      %s46 = sadd.s32 %s45, 1
      %s47 = scalar_select %p44, %s45, %s46
      %p50 = pneg %p44
      %p51 = scmp.eq.s32.totalorder %s21, 1
      %p52 = por %p50, %p51
      %p53 = scmp.ne.s32.totalorder %s45, %s48
      %p54 = scmp.eq.s32.totalorder %s21, 0
      %p55 = por %p53, %p54
      %p56 = scmp.ne.s32.totalorder %s45, %s48
      %p57 = scmp.eq.s32.totalorder %s26, 1
      %p58 = por %p56, %p57
      %p59 = scmp.ne.s32.totalorder %s48, %s49
      %p60 = scmp.eq.s32.totalorder %s26, 0
      %p61 = por %p59, %p60
      %p62 = scmp.ne.s32.totalorder %s48, %s49
      %p63 = scmp.eq.s32.totalorder %s27, 1
      %p64 = por %p62, %p63
      %p66 = scmp.ne.s32.totalorder %s49, %s65
      %p67 = scmp.eq.s32.totalorder %s27, 0
      %p68 = por %p66, %p67
      %s69 = ssub.s32 %s28, %s40
      %p70 = scmp.eq.s32.totalorder %s69, 0
      %s72 = sadd.s32 %s71, 1
      %s73 = scalar_select %p70, %s71, %s72
      %p76 = pneg %p70
      %p77 = scmp.eq.s32.totalorder %s21, 1
      %p78 = por %p76, %p77
      %p79 = scmp.ne.s32.totalorder %s71, %s74
      %p80 = scmp.eq.s32.totalorder %s21, 0
      %p81 = por %p79, %p80
      %p82 = scmp.ne.s32.totalorder %s71, %s74
      %p83 = scmp.eq.s32.totalorder %s26, 1
      %p84 = por %p82, %p83
      %p85 = scmp.ne.s32.totalorder %s74, %s75
      %p86 = scmp.eq.s32.totalorder %s26, 0
      %p87 = por %p85, %p86
      %p88 = scmp.ne.s32.totalorder %s74, %s75
      %p89 = scmp.eq.s32.totalorder %s27, 1
      %p90 = por %p88, %p89
      %p92 = scmp.ne.s32.totalorder %s75, %s91
      %p93 = scmp.eq.s32.totalorder %s27, 0
      %p94 = por %p92, %p93
      %s95 = ssub.s32 %s28, %s40
      %p96 = scmp.eq.s32.totalorder %s95, 0
      %s98 = sadd.s32 %s97, 1
      %s99 = scalar_select %p96, %s97, %s98
      %p102 = pneg %p96
      %p103 = scmp.eq.s32.totalorder %s21, 1
      %p104 = por %p102, %p103
      %p105 = scmp.ne.s32.totalorder %s97, %s100
      %p106 = scmp.eq.s32.totalorder %s21, 0
      %p107 = por %p105, %p106
      %p108 = scmp.ne.s32.totalorder %s97, %s100
      %p109 = scmp.eq.s32.totalorder %s26, 1
      %p110 = por %p108, %p109
      %p111 = scmp.ne.s32.totalorder %s100, %s101
      %p112 = scmp.eq.s32.totalorder %s26, 0
      %p113 = por %p111, %p112
      %p114 = scmp.ne.s32.totalorder %s100, %s101
      %p115 = scmp.eq.s32.totalorder %s27, 1
      %p116 = por %p114, %p115
      %p118 = scmp.ne.s32.totalorder %s101, %s117
      %p119 = scmp.eq.s32.totalorder %s27, 0
      %p120 = por %p118, %p119
      %s122 = sadd.s32 %s121, 1
      %p125 = scmp.eq.s32.totalorder %s21, 1
      %p126 = scmp.ne.s32.totalorder %s121, %s123
      %p127 = scmp.eq.s32.totalorder %s21, 0
      %p128 = por %p126, %p127
      %p129 = scmp.ne.s32.totalorder %s121, %s123
      %p130 = scmp.eq.s32.totalorder %s26, 1
      %p131 = por %p129, %p130
      %p132 = scmp.ne.s32.totalorder %s123, %s124
      %p133 = scmp.eq.s32.totalorder %s26, 0
      %p134 = por %p132, %p133
      %p135 = scmp.ne.s32.totalorder %s123, %s124
      %p136 = scmp.eq.s32.totalorder %s27, 1
      %p137 = por %p135, %p136
      %p139 = scmp.ne.s32.totalorder %s124, %s138
      %p140 = scmp.eq.s32.totalorder %s27, 0
      %p141 = por %p139, %p140
      %s143 = sadd.s32 %s142, 1
      %p146 = scmp.eq.s32.totalorder %s21, 1
      %p147 = scmp.ne.s32.totalorder %s142, %s144
      %p148 = scmp.eq.s32.totalorder %s21, 0
      %p149 = por %p147, %p148
      %p150 = scmp.ne.s32.totalorder %s142, %s144
      %p151 = scmp.eq.s32.totalorder %s26, 1
      %p152 = por %p150, %p151
      %p153 = scmp.ne.s32.totalorder %s144, %s145
      %p154 = scmp.eq.s32.totalorder %s26, 0
      %p155 = por %p153, %p154
      %p156 = scmp.ne.s32.totalorder %s144, %s145
      %p157 = scmp.eq.s32.totalorder %s27, 1
      %p158 = por %p156, %p157
      %p160 = scmp.ne.s32.totalorder %s145, %s159
      %p161 = scmp.eq.s32.totalorder %s27, 0
      %p162 = por %p160, %p161
      %s164 = sadd.s32 %s163, 1
      %p167 = scmp.eq.s32.totalorder %s21, 1
      %p168 = scmp.ne.s32.totalorder %s163, %s165
      %p169 = scmp.eq.s32.totalorder %s21, 0
      %p170 = por %p168, %p169
      %p171 = scmp.ne.s32.totalorder %s163, %s165
      %p172 = scmp.eq.s32.totalorder %s26, 1
      %p173 = por %p171, %p172
      %p174 = scmp.ne.s32.totalorder %s165, %s166
      %p175 = scmp.eq.s32.totalorder %s26, 0
      %p176 = por %p174, %p175
      %p177 = scmp.ne.s32.totalorder %s165, %s166
      %p178 = scmp.eq.s32.totalorder %s27, 1
      %p179 = por %p177, %p178
      %p181 = scmp.ne.s32.totalorder %s166, %s180
      %p182 = scmp.eq.s32.totalorder %s27, 0
      %p183 = por %p181, %p182
      %s185 = sadd.s32 %s184, 1
      %p188 = scmp.eq.s32.totalorder %s21, 1
      %p189 = scmp.ne.s32.totalorder %s184, %s186
      %p190 = scmp.eq.s32.totalorder %s21, 0
      %p191 = por %p189, %p190
      %p192 = scmp.ne.s32.totalorder %s184, %s186
      %p193 = scmp.eq.s32.totalorder %s26, 1
      %p194 = por %p192, %p193
      %p195 = scmp.ne.s32.totalorder %s186, %s187
      %p196 = scmp.eq.s32.totalorder %s26, 0
      %p197 = por %p195, %p196
      %p198 = scmp.ne.s32.totalorder %s186, %s187
      %p199 = scmp.eq.s32.totalorder %s27, 1
      %p200 = por %p198, %p199
      %p202 = scmp.ne.s32.totalorder %s187, %s201
      %p203 = scmp.eq.s32.totalorder %s27, 0
      %p204 = por %p202, %p203
      %s205 = ssub.s32 %s28, %s40
      %s206 = ssub.s32 %s29, %s36
      %s207 = sor.u32 %s205, %s206
      %p208 = scmp.eq.s32.totalorder %s207, 0
      %s210 = sadd.s32 %s209, 1
      %s211 = scalar_select %p208, %s209, %s210
      %p214 = pneg %p208
      %p215 = scmp.eq.s32.totalorder %s21, 1
      %p216 = por %p214, %p215
      %p217 = scmp.ne.s32.totalorder %s209, %s212
      %p218 = scmp.eq.s32.totalorder %s21, 0
      %p219 = por %p217, %p218
      %p220 = scmp.ne.s32.totalorder %s209, %s212
      %p221 = scmp.eq.s32.totalorder %s26, 1
      %p222 = por %p220, %p221
      %p223 = scmp.ne.s32.totalorder %s212, %s213
      %p224 = scmp.eq.s32.totalorder %s26, 0
      %p225 = por %p223, %p224
      %p226 = scmp.ne.s32.totalorder %s212, %s213
      %p227 = scmp.eq.s32.totalorder %s27, 1
      %p228 = por %p226, %p227
      %p230 = scmp.ne.s32.totalorder %s213, %s229
      %p231 = scmp.eq.s32.totalorder %s27, 0
      %p232 = por %p230, %p231
      %p233 = scmp.le.s32.totalorder 1, %s21
      %p234 = scmp.lt.s32.totalorder %s21, 3
      %p235 = pnand %p233, %p234
      %p236 = pneg %p235
      // Predicated region
      $region9: #{tpu_custom_call.1} parent=5 // pred_check
        _
      $region10: #{tpu_custom_call.1} parent=5 // pred_check_branch
        %238 = sbr.rel (%p235) target = $region12
      $region11: #{tpu_custom_call.1} parent=5 // pred_region
        %s239 = ssub.s32 %s21, 1
        // Predicated region
        $region13: #{tpu_custom_call.1} parent=11 // pred_check
          %p240 = pneg %p87
        $region14: #{tpu_custom_call.1} parent=11 // pred_check_branch
          %242 = sbr.rel (%p240) target = $region16
        $region15: #{tpu_custom_call.1} parent=11 // pred_region
          %s244 = ssub.s32 4096, 4096
          %245 = vsyncadd [#allocation8], %s244
          %s246 = smul.addr %s30, 32
          %s247 = smul.addr %s246, 128
          %s248 = scalar_lea.hbm %s1, %s247
          %s249 = sshll.u32 [#allocation7], 4
          %s250 = int_to_ptr.vmem [resolvable:$true] %s249
          %255 = dma.hbm_to_vmem [thread:$0]  %s248, 4096, %s250, [#allocation8], 128, 128, 8
        $region16: #{tpu_custom_call.1} parent=11 // pred_fallthru
          _
        // Predicated region
        $region17: #{tpu_custom_call.1} parent=11 // pred_check
          %p256 = pneg %p113
        $region18: #{tpu_custom_call.1} parent=11 // pred_check_branch
          %258 = sbr.rel (%p256) target = $region20
        $region19: #{tpu_custom_call.1} parent=11 // pred_region
          %s260 = ssub.s32 4096, 4096
          %261 = vsyncadd [#allocation8], %s260
          %s262 = smul.addr %s30, 32
          %s263 = smul.addr %s262, 128
          %s264 = scalar_lea.hbm %s2, %s263
          %s265 = sshll.u32 [#allocation9], 4
          %s266 = int_to_ptr.vmem [resolvable:$true] %s265
          %271 = dma.hbm_to_vmem [thread:$0]  %s264, 4096, %s266, [#allocation8], 128, 128, 8
        $region20: #{tpu_custom_call.1} parent=11 // pred_fallthru
          _
        // Predicated region
        $region21: #{tpu_custom_call.1} parent=11 // pred_check
          %p272 = pneg %p134
        $region22: #{tpu_custom_call.1} parent=11 // pred_check_branch
          %274 = sbr.rel (%p272) target = $region24
        $region23: #{tpu_custom_call.1} parent=11 // pred_region
          _
        $region24: #{tpu_custom_call.1} parent=11 // pred_fallthru
          _
        // Predicated region
        $region25: #{tpu_custom_call.1} parent=11 // pred_check
          %p275 = pneg %p155
        $region26: #{tpu_custom_call.1} parent=11 // pred_check_branch
          %277 = sbr.rel (%p275) target = $region28
        $region27: #{tpu_custom_call.1} parent=11 // pred_region
          _
        $region28: #{tpu_custom_call.1} parent=11 // pred_fallthru
          _
        // Predicated region
        $region29: #{tpu_custom_call.1} parent=11 // pred_check
          %p278 = pneg %p176
        $region30: #{tpu_custom_call.1} parent=11 // pred_check_branch
          %280 = sbr.rel (%p278) target = $region32
        $region31: #{tpu_custom_call.1} parent=11 // pred_region
          %s282 = ssub.s32 1024, 1024
          %283 = vsyncadd [#allocation11], %s282
          %s284 = sshll.u32 [#allocation10], 4
          %s285 = int_to_ptr.vmem [resolvable:$true] %s284
          %290 = dma.hbm_to_vmem [thread:$0]  %s5, 1024, %s285, [#allocation11], 256, 256, 16
        $region32: #{tpu_custom_call.1} parent=11 // pred_fallthru
          _
        // Predicated region
        $region33: #{tpu_custom_call.1} parent=11 // pred_check
          %p291 = pneg %p197
        $region34: #{tpu_custom_call.1} parent=11 // pred_check_branch
          %293 = sbr.rel (%p291) target = $region36
        $region35: #{tpu_custom_call.1} parent=11 // pred_region
          _
        $region36: #{tpu_custom_call.1} parent=11 // pred_fallthru
          _
      $region12: #{tpu_custom_call.1} parent=5 // pred_fallthru
        _
      %p294 = scmp.lt.s32.totalorder %s21, 2
      // Predicated region
      $region37: #{tpu_custom_call.1} parent=5 // pred_check
        %p295 = pneg %p294
      $region38: #{tpu_custom_call.1} parent=5 // pred_check_branch
        %297 = sbr.rel (%p295) target = $region40
      $region39: #{tpu_custom_call.1} parent=5 // pred_region
        // Predicated region
        $region41: #{tpu_custom_call.1} parent=39 // pred_check
          %p298 = pneg %p55
        $region42: #{tpu_custom_call.1} parent=39 // pred_check_branch
          %300 = sbr.rel (%p298) target = $region44
        $region43: #{tpu_custom_call.1} parent=39 // pred_region
          %s301 = sand.u32 %s45, 1
          %s302 = scalar_lea.sflag [#allocation5], %s301
          %s303 = sand.u32 %s45, 1
          %s304 = smul.addr %s303, 128
          %s305 = scalar_lea.vmem [#allocation4], %s304
          %s306 = smul.u32 16, %s29
          %s308 = ssub.s32 2048, 2048
          %309 = vsyncadd %s302, %s308
          %s310 = smul.addr %s28, 32
          %s311 = sadd.s32 %s306, %s310
          %s312 = smul.addr %s311, 128
          %s313 = scalar_lea.hbm %s0, %s312
          %s314 = sshll.u32 %s305, 4
          %s315 = int_to_ptr.vmem [resolvable:$true] %s314
          %320 = dma.hbm_to_vmem [thread:$0]  %s313, 2048, %s315, %s302, 128, 128, 8
        $region44: #{tpu_custom_call.1} parent=39 // pred_fallthru
          _
      $region40: #{tpu_custom_call.1} parent=5 // pred_fallthru
        _
      %p321 = scmp.le.s32.totalorder 1, %s21
      %p322 = scmp.lt.s32.totalorder %s21, 3
      %p323 = pnand %p321, %p322
      %p324 = pneg %p323
      // Predicated region
      $region45: #{tpu_custom_call.1} parent=5 // pred_check
        _
      $region46: #{tpu_custom_call.1} parent=5 // pred_check_branch
        %326 = sbr.rel (%p323) target = $region48
      $region47: #{tpu_custom_call.1} parent=5 // pred_region
        %s327 = ssub.s32 %s21, 1
        %s328 = sand.u32 %s48, 1
        %s329 = scalar_lea.sflag [#allocation5], %s328
        %s330 = sand.u32 %s48, 1
        %s331 = smul.addr %s330, 128
        %s332 = scalar_lea.vmem [#allocation4], %s331
        // Predicated region
        $region49: #{tpu_custom_call.1} parent=47 // pred_check
          %p333 = pneg %p61
        $region50: #{tpu_custom_call.1} parent=47 // pred_check_branch
          %335 = sbr.rel (%p333) target = $region52
        $region51: #{tpu_custom_call.1} parent=47 // pred_region
          %336 = dma.done %s329, 2048
        $region52: #{tpu_custom_call.1} parent=47 // pred_fallthru
          _
        // Predicated region
        $region53: #{tpu_custom_call.1} parent=47 // pred_check
          %p337 = pneg %p87
        $region54: #{tpu_custom_call.1} parent=47 // pred_check_branch
          %339 = sbr.rel (%p337) target = $region56
        $region55: #{tpu_custom_call.1} parent=47 // pred_region
          %340 = dma.done [#allocation8], 4096
        $region56: #{tpu_custom_call.1} parent=47 // pred_fallthru
          _
        // Predicated region
        $region57: #{tpu_custom_call.1} parent=47 // pred_check
          %p341 = pneg %p113
        $region58: #{tpu_custom_call.1} parent=47 // pred_check_branch
          %343 = sbr.rel (%p341) target = $region60
        $region59: #{tpu_custom_call.1} parent=47 // pred_region
          %344 = dma.done [#allocation8], 4096
        $region60: #{tpu_custom_call.1} parent=47 // pred_fallthru
          _
        // Predicated region
        $region61: #{tpu_custom_call.1} parent=47 // pred_check
          %p345 = pneg %p176
        $region62: #{tpu_custom_call.1} parent=47 // pred_check_branch
          %347 = sbr.rel (%p345) target = $region64
        $region63: #{tpu_custom_call.1} parent=47 // pred_region
          %348 = dma.done [#allocation11], 1024
        $region64: #{tpu_custom_call.1} parent=47 // pred_fallthru
          _
        %s349 = sand.u32 %s48, 1
        %s350 = scalar_lea.sflag [#allocation5], %s349
        %s351 = sand.u32 %s48, 1
        %s352 = smul.addr %s351, 128
        %s353 = scalar_lea.vmem [#allocation4], %s352
        %p354 = pneg %p61
        %p355 = pneg %p58
        %p356 = pneg %p87
        %p357 = pneg %p84
        %p358 = pneg %p113
        %p359 = pneg %p110
        %p360 = pneg %p134
        %p361 = pneg %p131
        %p362 = pneg %p155
        %p363 = pneg %p152
        %p364 = pneg %p176
        %p365 = pneg %p173
        %p366 = pneg %p197
        %p367 = pneg %p194
        %p368 = pneg %p225
        %p369 = pneg %p222
        %s370 = sand.u32 %s212, 1
        %s371 = scalar_lea.sflag [#allocation6], %s370
        %s372 = sand.u32 %s212, 1
        %s373 = smul.addr %s372, 128
        %s374 = scalar_lea.vmem [#allocation12], %s373
        %s375 = smul.u32 16, %s31
        %s376 = smul.u32 16, %s31
        %p377 = scmp.eq.s32.totalorder %s31, 0
        // Predicated region
        $region65: #{tpu_custom_call.1} parent=47 // pred_check
          %p378 = pneg %p377
        $region66: #{tpu_custom_call.1} parent=47 // pred_check_branch
          %380 = sbr.rel (%p378) target = $region68
        $region67: #{tpu_custom_call.1} parent=47 // pred_region
          %v381 = vld [vmem:[#allocation7] sm:$0xff]
          %v382 = vld [vmem:[#allocation7 + $0x8] sm:$0xff]
          %v383 = vld [vmem:[#allocation7 + $0x10] sm:$0xff]
          %v384 = vld [vmem:[#allocation7 + $0x18] sm:$0xff]
          %v385 = vld [vmem:[#allocation7 + $0x20] sm:$0xff]
          %v386 = vld [vmem:[#allocation7 + $0x28] sm:$0xff]
          %v387 = vld [vmem:[#allocation7 + $0x30] sm:$0xff]
          %v388 = vld [vmem:[#allocation7 + $0x38] sm:$0xff]
          %v389 = vld [vmem:[#allocation7 + $0x40] sm:$0xff]
          %v390 = vld [vmem:[#allocation7 + $0x48] sm:$0xff]
          %v391 = vld [vmem:[#allocation7 + $0x50] sm:$0xff]
          %v392 = vld [vmem:[#allocation7 + $0x58] sm:$0xff]
          %v393 = vld [vmem:[#allocation7 + $0x60] sm:$0xff]
          %v394 = vld [vmem:[#allocation7 + $0x68] sm:$0xff]
          %v395 = vld [vmem:[#allocation7 + $0x70] sm:$0xff]
          %v396 = vld [vmem:[#allocation7 + $0x78] sm:$0xff]
          %v397 = vld [vmem:[#allocation7 + $0x80] sm:$0xff]
          %v398 = vld [vmem:[#allocation7 + $0x88] sm:$0xff]
          %v399 = vld [vmem:[#allocation7 + $0x90] sm:$0xff]
          %v400 = vld [vmem:[#allocation7 + $0x98] sm:$0xff]
          %v401 = vld [vmem:[#allocation7 + $0xa0] sm:$0xff]
          %v402 = vld [vmem:[#allocation7 + $0xa8] sm:$0xff]
          %v403 = vld [vmem:[#allocation7 + $0xb0] sm:$0xff]
          %v404 = vld [vmem:[#allocation7 + $0xb8] sm:$0xff]
          %v405 = vld [vmem:[#allocation7 + $0xc0] sm:$0xff]
          %v406 = vld [vmem:[#allocation7 + $0xc8] sm:$0xff]
          %v407 = vld [vmem:[#allocation7 + $0xd0] sm:$0xff]
          %v408 = vld [vmem:[#allocation7 + $0xd8] sm:$0xff]
          %v409 = vld [vmem:[#allocation7 + $0xe0] sm:$0xff]
          %v410 = vld [vmem:[#allocation7 + $0xe8] sm:$0xff]
          %v411 = vld [vmem:[#allocation7 + $0xf0] sm:$0xff]
          %v412 = vld [vmem:[#allocation7 + $0xf8] sm:$0xff]
          %v413 = vld [vmem:[#allocation9] sm:$0xff]
          %v414 = vld [vmem:[#allocation9 + $0x8] sm:$0xff]
          %v415 = vld [vmem:[#allocation9 + $0x10] sm:$0xff]
          %v416 = vld [vmem:[#allocation9 + $0x18] sm:$0xff]
          %v417 = vld [vmem:[#allocation9 + $0x20] sm:$0xff]
          %v418 = vld [vmem:[#allocation9 + $0x28] sm:$0xff]
          %v419 = vld [vmem:[#allocation9 + $0x30] sm:$0xff]
          %v420 = vld [vmem:[#allocation9 + $0x38] sm:$0xff]
          %v421 = vld [vmem:[#allocation9 + $0x40] sm:$0xff]
          %v422 = vld [vmem:[#allocation9 + $0x48] sm:$0xff]
          %v423 = vld [vmem:[#allocation9 + $0x50] sm:$0xff]
          %v424 = vld [vmem:[#allocation9 + $0x58] sm:$0xff]
          %v425 = vld [vmem:[#allocation9 + $0x60] sm:$0xff]
          %v426 = vld [vmem:[#allocation9 + $0x68] sm:$0xff]
          %v427 = vld [vmem:[#allocation9 + $0x70] sm:$0xff]
          %v428 = vld [vmem:[#allocation9 + $0x78] sm:$0xff]
          %v429 = vld [vmem:[#allocation9 + $0x80] sm:$0xff]
          %v430 = vld [vmem:[#allocation9 + $0x88] sm:$0xff]
          %v431 = vld [vmem:[#allocation9 + $0x90] sm:$0xff]
          %v432 = vld [vmem:[#allocation9 + $0x98] sm:$0xff]
          %v433 = vld [vmem:[#allocation9 + $0xa0] sm:$0xff]
          %v434 = vld [vmem:[#allocation9 + $0xa8] sm:$0xff]
          %v435 = vld [vmem:[#allocation9 + $0xb0] sm:$0xff]
          %v436 = vld [vmem:[#allocation9 + $0xb8] sm:$0xff]
          %v437 = vld [vmem:[#allocation9 + $0xc0] sm:$0xff]
          %v438 = vld [vmem:[#allocation9 + $0xc8] sm:$0xff]
          %v439 = vld [vmem:[#allocation9 + $0xd0] sm:$0xff]
          %v440 = vld [vmem:[#allocation9 + $0xd8] sm:$0xff]
          %v441 = vld [vmem:[#allocation9 + $0xe0] sm:$0xff]
          %v442 = vld [vmem:[#allocation9 + $0xe8] sm:$0xff]
          %v443 = vld [vmem:[#allocation9 + $0xf0] sm:$0xff]
          %v444 = vld [vmem:[#allocation9 + $0xf8] sm:$0xff]
          %v445 = vld [vmem:[%s3] sm:$0xff]
          %v446 = vld [vmem:[%s3 + $0x8] sm:$0xff]
          %v447 = vld [vmem:[%s3 + $0x10] sm:$0xff]
          %v448 = vld [vmem:[%s3 + $0x18] sm:$0xff]
          %v449 = vld [vmem:[%s3 + $0x20] sm:$0xff]
          %v450 = vld [vmem:[%s3 + $0x28] sm:$0xff]
          %v451 = vld [vmem:[%s3 + $0x30] sm:$0xff]
          %v452 = vld [vmem:[%s3 + $0x38] sm:$0xff]
          %v453 = vld [vmem:[%s4] sm:$0xff]
          %v454 = vld [vmem:[%s4 + $0x8] sm:$0xff]
          %v455 = vld [vmem:[%s4 + $0x10] sm:$0xff]
          %v456 = vld [vmem:[%s4 + $0x18] sm:$0xff]
          %458 = vset.pattern.permute.xlu0 0
          %459 = vperm.xlu0 %458, %v453
          %v460 = vpop.permute.xlu0 %459
          %463 = vset.pattern.permute.xlu0 0
          %464 = vperm.xlu0 %463, %v454
          %v465 = vpop.permute.xlu0 %464
          %468 = vset.pattern.permute.xlu0 0
          %469 = vperm.xlu0 %468, %v455
          %v470 = vpop.permute.xlu0 %469
          %473 = vset.pattern.permute.xlu0 0
          %474 = vperm.xlu0 %473, %v456
          %v475 = vpop.permute.xlu0 %474
          %477 = vmatprep.subr.mxu0 0.0
          %478 = vmatpush1.msra.mxu0 %v396
          %479 = vmatprep.subr.mxu0 0.0
          %480 = vmatpush1.msra.mxu0 %v395
          %481 = vmatprep.subr.mxu0 0.0
          %482 = vmatpush1.msra.mxu0 %v394
          %483 = vmatprep.subr.mxu0 0.0
          %484 = vmatpush1.msra.mxu0 %v393
          %485 = vmatprep.subr.mxu0 0.0
          %486 = vmatpush1.msra.mxu0 %v392
          %487 = vmatprep.subr.mxu0 0.0
          %488 = vmatpush1.msra.mxu0 %v391
          %489 = vmatprep.subr.mxu0 0.0
          %490 = vmatpush1.msra.mxu0 %v390
          %491 = vmatprep.subr.mxu0 0.0
          %492 = vmatpush1.msra.mxu0 %v389
          %493 = vmatprep.subr.mxu0 0.0
          %494 = vmatpush1.msra.mxu0 %v388
          %495 = vmatprep.subr.mxu0 0.0
          %496 = vmatpush1.msra.mxu0 %v387
          %497 = vmatprep.subr.mxu0 0.0
          %498 = vmatpush1.msra.mxu0 %v386
          %499 = vmatprep.subr.mxu0 0.0
          %500 = vmatpush1.msra.mxu0 %v385
          %501 = vmatprep.subr.mxu0 0.0
          %502 = vmatpush1.msra.mxu0 %v384
          %503 = vmatprep.subr.mxu0 0.0
          %504 = vmatpush1.msra.mxu0 %v383
          %505 = vmatprep.subr.mxu0 0.0
          %506 = vmatpush1.msra.mxu0 %v382
          %507 = vmatprep.subr.mxu0 0.0
          %508 = vmatpush1.msra.mxu0 %v381
          %509 = vmatprep.subr.mxu0 0.0
          %510 = vmatpush2.msra.mxu0 %v412
          %511 = vmatprep.subr.mxu0 0.0
          %512 = vmatpush2.msra.mxu0 %v411
          %513 = vmatprep.subr.mxu0 0.0
          %514 = vmatpush2.msra.mxu0 %v410
          %515 = vmatprep.subr.mxu0 0.0
          %516 = vmatpush2.msra.mxu0 %v409
          %517 = vmatprep.subr.mxu0 0.0
          %518 = vmatpush2.msra.mxu0 %v408
          %519 = vmatprep.subr.mxu0 0.0
          %520 = vmatpush2.msra.mxu0 %v407
          %521 = vmatprep.subr.mxu0 0.0
          %522 = vmatpush2.msra.mxu0 %v406
          %523 = vmatprep.subr.mxu0 0.0
          %524 = vmatpush2.msra.mxu0 %v405
          %525 = vmatprep.subr.mxu0 0.0
          %526 = vmatpush2.msra.mxu0 %v404
          %527 = vmatprep.subr.mxu0 0.0
          %528 = vmatpush2.msra.mxu0 %v403
          %529 = vmatprep.subr.mxu0 0.0
          %530 = vmatpush2.msra.mxu0 %v402
          %531 = vmatprep.subr.mxu0 0.0
          %532 = vmatpush2.msra.mxu0 %v401
          %533 = vmatprep.subr.mxu0 0.0
          %534 = vmatpush2.msra.mxu0 %v400
          %535 = vmatprep.subr.mxu0 0.0
          %536 = vmatpush2.msra.mxu0 %v399
          %537 = vmatprep.subr.mxu0 0.0
          %538 = vmatpush2.msra.mxu0 %v398
          %539 = vmatprep.subr.mxu0 0.0
          %540 = vmatpush2.msra.mxu0 %v397
          %541 = vmatprep.mubr.f32.mxu0 %v446
          %542 = vmatmul.mubr.f32.gmra.mxu0 %v445
          %v543 = vpop.f32.mrf.mxu0
          %v544 = vadd.f32 %v460, %v543
          %v545 = vpop.f32.mrf.mxu0
          %546 = vmatprep.mubr.f32.mxu0 %v448
          %547 = vmatmul.mubr.f32.gmra.mxu0 %v447
          %v548 = vpop.f32.mrf.mxu0
          %v549 = vadd.f32 %v465, %v548
          %v550 = vpop.f32.mrf.mxu0
          %551 = vmatprep.mubr.f32.mxu0 %v450
          %552 = vmatmul.mubr.f32.gmra.mxu0 %v449
          %v553 = vpop.f32.mrf.mxu0
          %v554 = vadd.f32 %v470, %v553
          %v555 = vpop.f32.mrf.mxu0
          %556 = vmatprep.mubr.f32.mxu0 %v452
          %557 = vmatmul.mubr.f32.gmra.mxu0 %v451
          %v558 = vpop.f32.mrf.mxu0
          %v559 = vadd.f32 %v475, %v558
          %v560 = vpop.f32.mrf.mxu0
          %561 = vdwg.mxu0
          %v562 = vmul.f32 %v544, 0.17677669
          %v563 = vmul.f32 %v549, 0.17677669
          %v564 = vmul.f32 %v554, 0.17677669
          %v565 = vmul.f32 %v559, 0.17677669
          %566 = vst [vmem:[#allocation2] sm:$0xff] %v562
          %567 = vst [vmem:[#allocation2 + $0x8] sm:$0xff] %v563
          %568 = vst [vmem:[#allocation2 + $0x10] sm:$0xff] %v564
          %569 = vst [vmem:[#allocation2 + $0x18] sm:$0xff] %v565
          %v570 = vld [vmem:[#allocation10] sm:$0xff]
          %v571 = vld [vmem:[#allocation10 + $0x8] sm:$0xff]
          %v572 = vld [vmem:[#allocation10 + $0x10] sm:$0xff]
          %v573 = vld [vmem:[#allocation10 + $0x18] sm:$0xff]
          %v574 = vld [vmem:[#allocation10 + $0x20] sm:$0xff]
          %v575 = vld [vmem:[#allocation10 + $0x28] sm:$0xff]
          %v576 = vld [vmem:[#allocation10 + $0x30] sm:$0xff]
          %v577 = vld [vmem:[#allocation10 + $0x38] sm:$0xff]
          %v578 = vld [vmem:[%s6] sm:$0xff]
          %v579 = vld [vmem:[%s6 + $0x8] sm:$0xff]
          %v580 = vld [vmem:[%s6 + $0x10] sm:$0xff]
          %v581 = vld [vmem:[%s6 + $0x18] sm:$0xff]
          %583 = vset.pattern.permute.xlu0 0
          %584 = vperm.xlu0 %583, %v578
          %v585 = vpop.permute.xlu0 %584
          %588 = vset.pattern.permute.xlu0 0
          %589 = vperm.xlu0 %588, %v579
          %v590 = vpop.permute.xlu0 %589
          %593 = vset.pattern.permute.xlu0 0
          %594 = vperm.xlu0 %593, %v580
          %v595 = vpop.permute.xlu0 %594
          %598 = vset.pattern.permute.xlu0 0
          %599 = vperm.xlu0 %598, %v581
          %v600 = vpop.permute.xlu0 %599
          %602 = vmatprep.subr.mxu0 0.0
          %603 = vmatpush1.msra.mxu0 %v428
          %604 = vmatprep.subr.mxu0 0.0
          %605 = vmatpush1.msra.mxu0 %v427
          %606 = vmatprep.subr.mxu0 0.0
          %607 = vmatpush1.msra.mxu0 %v426
          %608 = vmatprep.subr.mxu0 0.0
          %609 = vmatpush1.msra.mxu0 %v425
          %610 = vmatprep.subr.mxu0 0.0
          %611 = vmatpush1.msra.mxu0 %v424
          %612 = vmatprep.subr.mxu0 0.0
          %613 = vmatpush1.msra.mxu0 %v423
          %614 = vmatprep.subr.mxu0 0.0
          %615 = vmatpush1.msra.mxu0 %v422
          %616 = vmatprep.subr.mxu0 0.0
          %617 = vmatpush1.msra.mxu0 %v421
          %618 = vmatprep.subr.mxu0 0.0
          %619 = vmatpush1.msra.mxu0 %v420
          %620 = vmatprep.subr.mxu0 0.0
          %621 = vmatpush1.msra.mxu0 %v419
          %622 = vmatprep.subr.mxu0 0.0
          %623 = vmatpush1.msra.mxu0 %v418
          %624 = vmatprep.subr.mxu0 0.0
          %625 = vmatpush1.msra.mxu0 %v417
          %626 = vmatprep.subr.mxu0 0.0
          %627 = vmatpush1.msra.mxu0 %v416
          %628 = vmatprep.subr.mxu0 0.0
          %629 = vmatpush1.msra.mxu0 %v415
          %630 = vmatprep.subr.mxu0 0.0
          %631 = vmatpush1.msra.mxu0 %v414
          %632 = vmatprep.subr.mxu0 0.0
          %633 = vmatpush1.msra.mxu0 %v413
          %634 = vmatprep.subr.mxu0 0.0
          %635 = vmatpush2.msra.mxu0 %v444
          %636 = vmatprep.subr.mxu0 0.0
          %637 = vmatpush2.msra.mxu0 %v443
          %638 = vmatprep.subr.mxu0 0.0
          %639 = vmatpush2.msra.mxu0 %v442
          %640 = vmatprep.subr.mxu0 0.0
          %641 = vmatpush2.msra.mxu0 %v441
          %642 = vmatprep.subr.mxu0 0.0
          %643 = vmatpush2.msra.mxu0 %v440
          %644 = vmatprep.subr.mxu0 0.0
          %645 = vmatpush2.msra.mxu0 %v439
          %646 = vmatprep.subr.mxu0 0.0
          %647 = vmatpush2.msra.mxu0 %v438
          %648 = vmatprep.subr.mxu0 0.0
          %649 = vmatpush2.msra.mxu0 %v437
          %650 = vmatprep.subr.mxu0 0.0
          %651 = vmatpush2.msra.mxu0 %v436
          %652 = vmatprep.subr.mxu0 0.0
          %653 = vmatpush2.msra.mxu0 %v435
          %654 = vmatprep.subr.mxu0 0.0
          %655 = vmatpush2.msra.mxu0 %v434
          %656 = vmatprep.subr.mxu0 0.0
          %657 = vmatpush2.msra.mxu0 %v433
          %658 = vmatprep.subr.mxu0 0.0
          %659 = vmatpush2.msra.mxu0 %v432
          %660 = vmatprep.subr.mxu0 0.0
          %661 = vmatpush2.msra.mxu0 %v431
          %662 = vmatprep.subr.mxu0 0.0
          %663 = vmatpush2.msra.mxu0 %v430
          %664 = vmatprep.subr.mxu0 0.0
          %665 = vmatpush2.msra.mxu0 %v429
          %666 = vmatprep.mubr.f32.mxu0 %v571
          %667 = vmatmul.mubr.f32.gmra.mxu0 %v570
          %v668 = vpop.f32.mrf.mxu0
          %v669 = vadd.f32 %v585, %v668
          %v670 = vpop.f32.mrf.mxu0
          %671 = vmatprep.mubr.f32.mxu0 %v573
          %672 = vmatmul.mubr.f32.gmra.mxu0 %v572
          %v673 = vpop.f32.mrf.mxu0
          %v674 = vadd.f32 %v590, %v673
          %v675 = vpop.f32.mrf.mxu0
          %676 = vmatprep.mubr.f32.mxu0 %v575
          %677 = vmatmul.mubr.f32.gmra.mxu0 %v574
          %v678 = vpop.f32.mrf.mxu0
          %v679 = vadd.f32 %v595, %v678
          %v680 = vpop.f32.mrf.mxu0
          %681 = vmatprep.mubr.f32.mxu0 %v577
          %682 = vmatmul.mubr.f32.gmra.mxu0 %v576
          %v683 = vpop.f32.mrf.mxu0
          %v684 = vadd.f32 %v600, %v683
          %v685 = vpop.f32.mrf.mxu0
          %686 = vdwg.mxu0
          %687 = vst [vmem:[#allocation3] sm:$0xff] %v669
          %688 = vst [vmem:[#allocation3 + $0x8] sm:$0xff] %v674
          %689 = vst [vmem:[#allocation3 + $0x10] sm:$0xff] %v679
          %690 = vst [vmem:[#allocation3 + $0x18] sm:$0xff] %v684
        $region68: #{tpu_custom_call.1} parent=47 // pred_fallthru
          _
        %v691 = vld [vmem:[%s332] sm:$0xff]
        %v692 = vld [vmem:[%s332 + $0x8] sm:$0xff]
        %v693 = vld [vmem:[%s332 + $0x10] sm:$0xff]
        %v694 = vld [vmem:[%s332 + $0x18] sm:$0xff]
        %v695 = vld [vmem:[%s332 + $0x20] sm:$0xff]
        %v696 = vld [vmem:[%s332 + $0x28] sm:$0xff]
        %v697 = vld [vmem:[%s332 + $0x30] sm:$0xff]
        %v698 = vld [vmem:[%s332 + $0x38] sm:$0xff]
        %v699 = vld [vmem:[%s332 + $0x40] sm:$0xff]
        %v700 = vld [vmem:[%s332 + $0x48] sm:$0xff]
        %v701 = vld [vmem:[%s332 + $0x50] sm:$0xff]
        %v702 = vld [vmem:[%s332 + $0x58] sm:$0xff]
        %v703 = vld [vmem:[%s332 + $0x60] sm:$0xff]
        %v704 = vld [vmem:[%s332 + $0x68] sm:$0xff]
        %v705 = vld [vmem:[%s332 + $0x70] sm:$0xff]
        %v706 = vld [vmem:[%s332 + $0x78] sm:$0xff]
        %v707 = vld [vmem:[#allocation2] sm:$0xff]
        %v708 = vld [vmem:[#allocation2 + $0x8] sm:$0xff]
        %v709 = vld [vmem:[#allocation2 + $0x10] sm:$0xff]
        %v710 = vld [vmem:[#allocation2 + $0x18] sm:$0xff]
        %v711 = vld [vmem:[#allocation3] sm:$0xff]
        %v712 = vld [vmem:[#allocation3 + $0x8] sm:$0xff]
        %v713 = vld [vmem:[#allocation3 + $0x10] sm:$0xff]
        %v714 = vld [vmem:[#allocation3 + $0x18] sm:$0xff]
        %vm715 = vcmask 261120
        %v717 = vsel %vm715, %v691, 0
        %v720 = vsel %vm715, %v692, 0
        %v723 = vsel %vm715, %v693, 0
        %v726 = vsel %vm715, %v694, 0
        %v729 = vsel %vm715, %v695, 0
        %v732 = vsel %vm715, %v696, 0
        %v735 = vsel %vm715, %v697, 0
        %v738 = vsel %vm715, %v698, 0
        %v741 = vsel %vm715, %v699, 0
        %v744 = vsel %vm715, %v700, 0
        %v747 = vsel %vm715, %v701, 0
        %v750 = vsel %vm715, %v702, 0
        %v753 = vsel %vm715, %v703, 0
        %v756 = vsel %vm715, %v704, 0
        %v759 = vsel %vm715, %v705, 0
        %v762 = vsel %vm715, %v706, 0
        %v765 = vsel %vm715, %v707, 0
        %v768 = vsel %vm715, %v708, 0
        %v771 = vsel %vm715, %v709, 0
        %v774 = vsel %vm715, %v710, 0
        %776 = vmatprep.subr.mxu0 0.0
        %777 = vmatpush1.xpose.msra.mxu0 0.0
        %778 = vmatprep.subr.mxu0 0.0
        %779 = vmatpush1.xpose.msra.mxu0 0.0
        %780 = vmatprep.subr.mxu0 0.0
        %781 = vmatpush1.xpose.msra.mxu0 0.0
        %782 = vmatprep.subr.mxu0 0.0
        %783 = vmatpush1.xpose.msra.mxu0 0.0
        %784 = vmatprep.subr.mxu0 0.0
        %785 = vmatpush1.xpose.msra.mxu0 0.0
        %786 = vmatprep.subr.mxu0 0.0
        %787 = vmatpush1.xpose.msra.mxu0 0.0
        %788 = vmatprep.subr.mxu0 0.0
        %789 = vmatpush1.xpose.msra.mxu0 0.0
        %790 = vmatprep.subr.mxu0 0.0
        %791 = vmatpush1.xpose.msra.mxu0 0.0
        %792 = vmatprep.subr.mxu0 0.0
        %793 = vmatpush1.xpose.msra.mxu0 0.0
        %794 = vmatprep.subr.mxu0 0.0
        %795 = vmatpush1.xpose.msra.mxu0 0.0
        %796 = vmatprep.subr.mxu0 0.0
        %797 = vmatpush1.xpose.msra.mxu0 0.0
        %798 = vmatprep.subr.mxu0 0.0
        %799 = vmatpush1.xpose.msra.mxu0 0.0
        %800 = vmatprep.subr.mxu0 0.0
        %801 = vmatpush1.xpose.msra.mxu0 %v774
        %802 = vmatprep.subr.mxu0 0.0
        %803 = vmatpush1.xpose.msra.mxu0 %v771
        %804 = vmatprep.subr.mxu0 0.0
        %805 = vmatpush1.xpose.msra.mxu0 %v768
        %806 = vmatprep.subr.mxu0 0.0
        %807 = vmatpush1.xpose.msra.mxu0 %v765
        %808 = vmatprep.subr.mxu0 0.0
        %809 = vmatpush2.xpose.msra.mxu0 0.0
        %810 = vmatprep.subr.mxu0 0.0
        %811 = vmatpush2.xpose.msra.mxu0 0.0
        %812 = vmatprep.subr.mxu0 0.0
        %813 = vmatpush2.xpose.msra.mxu0 0.0
        %814 = vmatprep.subr.mxu0 0.0
        %815 = vmatpush2.xpose.msra.mxu0 0.0
        %816 = vmatprep.subr.mxu0 0.0
        %817 = vmatpush2.xpose.msra.mxu0 0.0
        %818 = vmatprep.subr.mxu0 0.0
        %819 = vmatpush2.xpose.msra.mxu0 0.0
        %820 = vmatprep.subr.mxu0 0.0
        %821 = vmatpush2.xpose.msra.mxu0 0.0
        %822 = vmatprep.subr.mxu0 0.0
        %823 = vmatpush2.xpose.msra.mxu0 0.0
        %824 = vmatprep.subr.mxu0 0.0
        %825 = vmatpush2.xpose.msra.mxu0 0.0
        %826 = vmatprep.subr.mxu0 0.0
        %827 = vmatpush2.xpose.msra.mxu0 0.0
        %828 = vmatprep.subr.mxu0 0.0
        %829 = vmatpush2.xpose.msra.mxu0 0.0
        %830 = vmatprep.subr.mxu0 0.0
        %831 = vmatpush2.xpose.msra.mxu0 0.0
        %832 = vmatprep.subr.mxu0 0.0
        %833 = vmatpush2.xpose.msra.mxu0 0.0
        %834 = vmatprep.subr.mxu0 0.0
        %835 = vmatpush2.xpose.msra.mxu0 0.0
        %836 = vmatprep.subr.mxu0 0.0
        %837 = vmatpush2.xpose.msra.mxu0 0.0
        %838 = vmatprep.subr.mxu0 0.0
        %839 = vmatpush2.xpose.msra.mxu0 0.0
        %840 = vmatprep.mubr.f32.mxu0 0.0
        %841 = vmatmul.mubr.f32.gmra.mxu0 %v717
        %v842 = vpop.f32.mrf.mxu0
        %v843 = vadd.f32 0.0, %v842
        %v844 = vpop.f32.mrf.mxu0
        %845 = vmatprep.mubr.f32.mxu0 0.0
        %846 = vmatmul.mubr.f32.gmra.mxu0 %v720
        %v847 = vpop.f32.mrf.mxu0
        %v848 = vadd.f32 0.0, %v847
        %v849 = vpop.f32.mrf.mxu0
        %850 = vmatprep.mubr.f32.mxu0 0.0
        %851 = vmatmul.mubr.f32.gmra.mxu0 %v723
        %v852 = vpop.f32.mrf.mxu0
        %v853 = vadd.f32 0.0, %v852
        %v854 = vpop.f32.mrf.mxu0
        %855 = vmatprep.mubr.f32.mxu0 0.0
        %856 = vmatmul.mubr.f32.gmra.mxu0 %v726
        %v857 = vpop.f32.mrf.mxu0
        %v858 = vadd.f32 0.0, %v857
        %v859 = vpop.f32.mrf.mxu0
        %860 = vmatprep.mubr.f32.mxu0 0.0
        %861 = vmatmul.mubr.f32.gmra.mxu0 %v729
        %v862 = vpop.f32.mrf.mxu0
        %v863 = vadd.f32 0.0, %v862
        %v864 = vpop.f32.mrf.mxu0
        %865 = vmatprep.mubr.f32.mxu0 0.0
        %866 = vmatmul.mubr.f32.gmra.mxu0 %v732
        %v867 = vpop.f32.mrf.mxu0
        %v868 = vadd.f32 0.0, %v867
        %v869 = vpop.f32.mrf.mxu0
        %870 = vmatprep.mubr.f32.mxu0 0.0
        %871 = vmatmul.mubr.f32.gmra.mxu0 %v735
        %v872 = vpop.f32.mrf.mxu0
        %v873 = vadd.f32 0.0, %v872
        %v874 = vpop.f32.mrf.mxu0
        %875 = vmatprep.mubr.f32.mxu0 0.0
        %876 = vmatmul.mubr.f32.gmra.mxu0 %v738
        %v877 = vpop.f32.mrf.mxu0
        %v878 = vadd.f32 0.0, %v877
        %v879 = vpop.f32.mrf.mxu0
        %880 = vmatprep.mubr.f32.mxu0 0.0
        %881 = vmatmul.mubr.f32.gmra.mxu0 %v741
        %v882 = vpop.f32.mrf.mxu0
        %v883 = vadd.f32 0.0, %v882
        %v884 = vpop.f32.mrf.mxu0
        %885 = vmatprep.mubr.f32.mxu0 0.0
        %886 = vmatmul.mubr.f32.gmra.mxu0 %v744
        %v887 = vpop.f32.mrf.mxu0
        %v888 = vadd.f32 0.0, %v887
        %v889 = vpop.f32.mrf.mxu0
        %890 = vmatprep.mubr.f32.mxu0 0.0
        %891 = vmatmul.mubr.f32.gmra.mxu0 %v747
        %v892 = vpop.f32.mrf.mxu0
        %v893 = vadd.f32 0.0, %v892
        %v894 = vpop.f32.mrf.mxu0
        %895 = vmatprep.mubr.f32.mxu0 0.0
        %896 = vmatmul.mubr.f32.gmra.mxu0 %v750
        %v897 = vpop.f32.mrf.mxu0
        %v898 = vadd.f32 0.0, %v897
        %v899 = vpop.f32.mrf.mxu0
        %900 = vmatprep.mubr.f32.mxu0 0.0
        %901 = vmatmul.mubr.f32.gmra.mxu0 %v753
        %v902 = vpop.f32.mrf.mxu0
        %v903 = vadd.f32 0.0, %v902
        %v904 = vpop.f32.mrf.mxu0
        %905 = vmatprep.mubr.f32.mxu0 0.0
        %906 = vmatmul.mubr.f32.gmra.mxu0 %v756
        %v907 = vpop.f32.mrf.mxu0
        %v908 = vadd.f32 0.0, %v907
        %v909 = vpop.f32.mrf.mxu0
        %910 = vmatprep.mubr.f32.mxu0 0.0
        %911 = vmatmul.mubr.f32.gmra.mxu0 %v759
        %v912 = vpop.f32.mrf.mxu0
        %v913 = vadd.f32 0.0, %v912
        %v914 = vpop.f32.mrf.mxu0
        %915 = vmatprep.mubr.f32.mxu0 0.0
        %916 = vmatmul.mubr.f32.gmra.mxu0 %v762
        %v917 = vpop.f32.mrf.mxu0
        %v918 = vadd.f32 0.0, %v917
        %v919 = vpop.f32.mrf.mxu0
        %920 = vdwg.mxu0
        %v921 = vsel %vm715, %v843, -inf
        %922 = vmax.xlane.f32.xlu0 %v921
        %v923 = vpop.xlane.xlu0 %922
        %v924 = vsel %vm715, %v848, -inf
        %925 = vmax.xlane.f32.xlu0 %v924
        %v926 = vpop.xlane.xlu0 %925
        %v927 = vsel %vm715, %v853, -inf
        %928 = vmax.xlane.f32.xlu0 %v927
        %v929 = vpop.xlane.xlu0 %928
        %v930 = vsel %vm715, %v858, -inf
        %931 = vmax.xlane.f32.xlu0 %v930
        %v932 = vpop.xlane.xlu0 %931
        %v933 = vsel %vm715, %v863, -inf
        %934 = vmax.xlane.f32.xlu0 %v933
        %v935 = vpop.xlane.xlu0 %934
        %v936 = vsel %vm715, %v868, -inf
        %937 = vmax.xlane.f32.xlu0 %v936
        %v938 = vpop.xlane.xlu0 %937
        %v939 = vsel %vm715, %v873, -inf
        %940 = vmax.xlane.f32.xlu0 %v939
        %v941 = vpop.xlane.xlu0 %940
        %v942 = vsel %vm715, %v878, -inf
        %943 = vmax.xlane.f32.xlu0 %v942
        %v944 = vpop.xlane.xlu0 %943
        %v945 = vsel %vm715, %v883, -inf
        %946 = vmax.xlane.f32.xlu0 %v945
        %v947 = vpop.xlane.xlu0 %946
        %v948 = vsel %vm715, %v888, -inf
        %949 = vmax.xlane.f32.xlu0 %v948
        %v950 = vpop.xlane.xlu0 %949
        %v951 = vsel %vm715, %v893, -inf
        %952 = vmax.xlane.f32.xlu0 %v951
        %v953 = vpop.xlane.xlu0 %952
        %v954 = vsel %vm715, %v898, -inf
        %955 = vmax.xlane.f32.xlu0 %v954
        %v956 = vpop.xlane.xlu0 %955
        %v957 = vsel %vm715, %v903, -inf
        %958 = vmax.xlane.f32.xlu0 %v957
        %v959 = vpop.xlane.xlu0 %958
        %v960 = vsel %vm715, %v908, -inf
        %961 = vmax.xlane.f32.xlu0 %v960
        %v962 = vpop.xlane.xlu0 %961
        %v963 = vsel %vm715, %v913, -inf
        %964 = vmax.xlane.f32.xlu0 %v963
        %v965 = vpop.xlane.xlu0 %964
        %v966 = vsel %vm715, %v918, -inf
        %967 = vmax.xlane.f32.xlu0 %v966
        %v968 = vpop.xlane.xlu0 %967
        %v969 = vsub.f32 %v843, %v923
        %v970 = vsub.f32 %v848, %v926
        %v971 = vsub.f32 %v853, %v929
        %v972 = vsub.f32 %v858, %v932
        %v973 = vsub.f32 %v863, %v935
        %v974 = vsub.f32 %v868, %v938
        %v975 = vsub.f32 %v873, %v941
        %v976 = vsub.f32 %v878, %v944
        %v977 = vsub.f32 %v883, %v947
        %v978 = vsub.f32 %v888, %v950
        %v979 = vsub.f32 %v893, %v953
        %v980 = vsub.f32 %v898, %v956
        %v981 = vsub.f32 %v903, %v959
        %v982 = vsub.f32 %v908, %v962
        %v983 = vsub.f32 %v913, %v965
        %v984 = vsub.f32 %v918, %v968
        %v985 = vmul.f32 %v969, 1.442695
        %v986 = vpow.pop %v985
        %v987 = vmul.f32 %v970, 1.442695
        %v988 = vpow.pop %v987
        %v989 = vmul.f32 %v971, 1.442695
        %v990 = vpow.pop %v989
        %v991 = vmul.f32 %v972, 1.442695
        %v992 = vpow.pop %v991
        %v993 = vmul.f32 %v973, 1.442695
        %v994 = vpow.pop %v993
        %v995 = vmul.f32 %v974, 1.442695
        %v996 = vpow.pop %v995
        %v997 = vmul.f32 %v975, 1.442695
        %v998 = vpow.pop %v997
        %v999 = vmul.f32 %v976, 1.442695
        %v1000 = vpow.pop %v999
        %v1001 = vmul.f32 %v977, 1.442695
        %v1002 = vpow.pop %v1001
        %v1003 = vmul.f32 %v978, 1.442695
        %v1004 = vpow.pop %v1003
        %v1005 = vmul.f32 %v979, 1.442695
        %v1006 = vpow.pop %v1005
        %v1007 = vmul.f32 %v980, 1.442695
        %v1008 = vpow.pop %v1007
        %v1009 = vmul.f32 %v981, 1.442695
        %v1010 = vpow.pop %v1009
        %v1011 = vmul.f32 %v982, 1.442695
        %v1012 = vpow.pop %v1011
        %v1013 = vmul.f32 %v983, 1.442695
        %v1014 = vpow.pop %v1013
        %v1015 = vmul.f32 %v984, 1.442695
        %v1016 = vpow.pop %v1015
        %v1017 = vsel %vm715, %v986, 0.0
        %1018 = vadd.xlane.f32.xlu0 %v1017
        %v1019 = vpop.xlane.xlu0 %1018
        %v1020 = vsel %vm715, %v988, 0.0
        %1021 = vadd.xlane.f32.xlu0 %v1020
        %v1022 = vpop.xlane.xlu0 %1021
        %v1023 = vsel %vm715, %v990, 0.0
        %1024 = vadd.xlane.f32.xlu0 %v1023
        %v1025 = vpop.xlane.xlu0 %1024
        %v1026 = vsel %vm715, %v992, 0.0
        %1027 = vadd.xlane.f32.xlu0 %v1026
        %v1028 = vpop.xlane.xlu0 %1027
        %v1029 = vsel %vm715, %v994, 0.0
        %1030 = vadd.xlane.f32.xlu0 %v1029
        %v1031 = vpop.xlane.xlu0 %1030
        %v1032 = vsel %vm715, %v996, 0.0
        %1033 = vadd.xlane.f32.xlu0 %v1032
        %v1034 = vpop.xlane.xlu0 %1033
        %v1035 = vsel %vm715, %v998, 0.0
        %1036 = vadd.xlane.f32.xlu0 %v1035
        %v1037 = vpop.xlane.xlu0 %1036
        %v1038 = vsel %vm715, %v1000, 0.0
        %1039 = vadd.xlane.f32.xlu0 %v1038
        %v1040 = vpop.xlane.xlu0 %1039
        %v1041 = vsel %vm715, %v1002, 0.0
        %1042 = vadd.xlane.f32.xlu0 %v1041
        %v1043 = vpop.xlane.xlu0 %1042
        %v1044 = vsel %vm715, %v1004, 0.0
        %1045 = vadd.xlane.f32.xlu0 %v1044
        %v1046 = vpop.xlane.xlu0 %1045
        %v1047 = vsel %vm715, %v1006, 0.0
        %1048 = vadd.xlane.f32.xlu0 %v1047
        %v1049 = vpop.xlane.xlu0 %1048
        %v1050 = vsel %vm715, %v1008, 0.0
        %1051 = vadd.xlane.f32.xlu0 %v1050
        %v1052 = vpop.xlane.xlu0 %1051
        %v1053 = vsel %vm715, %v1010, 0.0
        %1054 = vadd.xlane.f32.xlu0 %v1053
        %v1055 = vpop.xlane.xlu0 %1054
        %v1056 = vsel %vm715, %v1012, 0.0
        %1057 = vadd.xlane.f32.xlu0 %v1056
        %v1058 = vpop.xlane.xlu0 %1057
        %v1059 = vsel %vm715, %v1014, 0.0
        %1060 = vadd.xlane.f32.xlu0 %v1059
        %v1061 = vpop.xlane.xlu0 %1060
        %v1062 = vsel %vm715, %v1016, 0.0
        %1063 = vadd.xlane.f32.xlu0 %v1062
        %v1064 = vpop.xlane.xlu0 %1063
        %v1065 = vrcp.pop %v1019
        %v1066 = vrcp.pop %v1022
        %v1067 = vrcp.pop %v1025
        %v1068 = vrcp.pop %v1028
        %v1069 = vrcp.pop %v1031
        %v1070 = vrcp.pop %v1034
        %v1071 = vrcp.pop %v1037
        %v1072 = vrcp.pop %v1040
        %v1073 = vrcp.pop %v1043
        %v1074 = vrcp.pop %v1046
        %v1075 = vrcp.pop %v1049
        %v1076 = vrcp.pop %v1052
        %v1077 = vrcp.pop %v1055
        %v1078 = vrcp.pop %v1058
        %v1079 = vrcp.pop %v1061
        %v1080 = vrcp.pop %v1064
        %v1081 = vmul.f32 %v986, %v1065
        %v1082 = vmul.f32 %v988, %v1066
        %v1083 = vmul.f32 %v990, %v1067
        %v1084 = vmul.f32 %v992, %v1068
        %v1085 = vmul.f32 %v994, %v1069
        %v1086 = vmul.f32 %v996, %v1070
        %v1087 = vmul.f32 %v998, %v1071
        %v1088 = vmul.f32 %v1000, %v1072
        %v1089 = vmul.f32 %v1002, %v1073
        %v1090 = vmul.f32 %v1004, %v1074
        %v1091 = vmul.f32 %v1006, %v1075
        %v1092 = vmul.f32 %v1008, %v1076
        %v1093 = vmul.f32 %v1010, %v1077
        %v1094 = vmul.f32 %v1012, %v1078
        %v1095 = vmul.f32 %v1014, %v1079
        %v1096 = vmul.f32 %v1016, %v1080
        %v1098 = vsel %vm715, %v1081, 0
        %v1101 = vsel %vm715, %v1082, 0
        %v1104 = vsel %vm715, %v1083, 0
        %v1107 = vsel %vm715, %v1084, 0
        %v1110 = vsel %vm715, %v1085, 0
        %v1113 = vsel %vm715, %v1086, 0
        %v1116 = vsel %vm715, %v1087, 0
        %v1119 = vsel %vm715, %v1088, 0
        %v1122 = vsel %vm715, %v1089, 0
        %v1125 = vsel %vm715, %v1090, 0
        %v1128 = vsel %vm715, %v1091, 0
        %v1131 = vsel %vm715, %v1092, 0
        %v1134 = vsel %vm715, %v1093, 0
        %v1137 = vsel %vm715, %v1094, 0
        %v1140 = vsel %vm715, %v1095, 0
        %v1143 = vsel %vm715, %v1096, 0
        %1145 = vmatprep.subr.mxu0 0.0
        %1146 = vmatpush1.msra.mxu0 0.0
        %1147 = vmatprep.subr.mxu0 0.0
        %1148 = vmatpush1.msra.mxu0 0.0
        %1149 = vmatprep.subr.mxu0 0.0
        %1150 = vmatpush1.msra.mxu0 0.0
        %1151 = vmatprep.subr.mxu0 0.0
        %1152 = vmatpush1.msra.mxu0 0.0
        %1153 = vmatprep.subr.mxu0 0.0
        %1154 = vmatpush1.msra.mxu0 0.0
        %1155 = vmatprep.subr.mxu0 0.0
        %1156 = vmatpush1.msra.mxu0 0.0
        %1157 = vmatprep.subr.mxu0 0.0
        %1158 = vmatpush1.msra.mxu0 0.0
        %1159 = vmatprep.subr.mxu0 0.0
        %1160 = vmatpush1.msra.mxu0 0.0
        %1161 = vmatprep.subr.mxu0 0.0
        %1162 = vmatpush1.msra.mxu0 0.0
        %1163 = vmatprep.subr.mxu0 0.0
        %1164 = vmatpush1.msra.mxu0 0.0
        %1165 = vmatprep.subr.mxu0 0.0
        %1166 = vmatpush1.msra.mxu0 0.0
        %1167 = vmatprep.subr.mxu0 0.0
        %1168 = vmatpush1.msra.mxu0 0.0
        %1169 = vmatprep.subr.mxu0 0.0
        %1170 = vmatpush1.msra.mxu0 %v714
        %1171 = vmatprep.subr.mxu0 0.0
        %1172 = vmatpush1.msra.mxu0 %v713
        %1173 = vmatprep.subr.mxu0 0.0
        %1174 = vmatpush1.msra.mxu0 %v712
        %1175 = vmatprep.subr.mxu0 0.0
        %1176 = vmatpush1.msra.mxu0 %v711
        %1177 = vmatprep.subr.mxu0 0.0
        %1178 = vmatpush2.msra.mxu0 0.0
        %1179 = vmatprep.subr.mxu0 0.0
        %1180 = vmatpush2.msra.mxu0 0.0
        %1181 = vmatprep.subr.mxu0 0.0
        %1182 = vmatpush2.msra.mxu0 0.0
        %1183 = vmatprep.subr.mxu0 0.0
        %1184 = vmatpush2.msra.mxu0 0.0
        %1185 = vmatprep.subr.mxu0 0.0
        %1186 = vmatpush2.msra.mxu0 0.0
        %1187 = vmatprep.subr.mxu0 0.0
        %1188 = vmatpush2.msra.mxu0 0.0
        %1189 = vmatprep.subr.mxu0 0.0
        %1190 = vmatpush2.msra.mxu0 0.0
        %1191 = vmatprep.subr.mxu0 0.0
        %1192 = vmatpush2.msra.mxu0 0.0
        %1193 = vmatprep.subr.mxu0 0.0
        %1194 = vmatpush2.msra.mxu0 0.0
        %1195 = vmatprep.subr.mxu0 0.0
        %1196 = vmatpush2.msra.mxu0 0.0
        %1197 = vmatprep.subr.mxu0 0.0
        %1198 = vmatpush2.msra.mxu0 0.0
        %1199 = vmatprep.subr.mxu0 0.0
        %1200 = vmatpush2.msra.mxu0 0.0
        %1201 = vmatprep.subr.mxu0 0.0
        %1202 = vmatpush2.msra.mxu0 0.0
        %1203 = vmatprep.subr.mxu0 0.0
        %1204 = vmatpush2.msra.mxu0 0.0
        %1205 = vmatprep.subr.mxu0 0.0
        %1206 = vmatpush2.msra.mxu0 0.0
        %1207 = vmatprep.subr.mxu0 0.0
        %1208 = vmatpush2.msra.mxu0 0.0
        %1209 = vmatprep.mubr.f32.mxu0 0.0
        %1210 = vmatmul.mubr.f32.gmra.mxu0 %v1098
        %v1211 = vpop.f32.mrf.mxu0
        %v1212 = vadd.f32 0.0, %v1211
        %v1213 = vpop.f32.mrf.mxu0
        %1214 = vmatprep.mubr.f32.mxu0 0.0
        %1215 = vmatmul.mubr.f32.gmra.mxu0 %v1101
        %v1216 = vpop.f32.mrf.mxu0
        %v1217 = vadd.f32 0.0, %v1216
        %v1218 = vpop.f32.mrf.mxu0
        %1219 = vmatprep.mubr.f32.mxu0 0.0
        %1220 = vmatmul.mubr.f32.gmra.mxu0 %v1104
        %v1221 = vpop.f32.mrf.mxu0
        %v1222 = vadd.f32 0.0, %v1221
        %v1223 = vpop.f32.mrf.mxu0
        %1224 = vmatprep.mubr.f32.mxu0 0.0
        %1225 = vmatmul.mubr.f32.gmra.mxu0 %v1107
        %v1226 = vpop.f32.mrf.mxu0
        %v1227 = vadd.f32 0.0, %v1226
        %v1228 = vpop.f32.mrf.mxu0
        %1229 = vmatprep.mubr.f32.mxu0 0.0
        %1230 = vmatmul.mubr.f32.gmra.mxu0 %v1110
        %v1231 = vpop.f32.mrf.mxu0
        %v1232 = vadd.f32 0.0, %v1231
        %v1233 = vpop.f32.mrf.mxu0
        %1234 = vmatprep.mubr.f32.mxu0 0.0
        %1235 = vmatmul.mubr.f32.gmra.mxu0 %v1113
        %v1236 = vpop.f32.mrf.mxu0
        %v1237 = vadd.f32 0.0, %v1236
        %v1238 = vpop.f32.mrf.mxu0
        %1239 = vmatprep.mubr.f32.mxu0 0.0
        %1240 = vmatmul.mubr.f32.gmra.mxu0 %v1116
        %v1241 = vpop.f32.mrf.mxu0
        %v1242 = vadd.f32 0.0, %v1241
        %v1243 = vpop.f32.mrf.mxu0
        %1244 = vmatprep.mubr.f32.mxu0 0.0
        %1245 = vmatmul.mubr.f32.gmra.mxu0 %v1119
        %v1246 = vpop.f32.mrf.mxu0
        %v1247 = vadd.f32 0.0, %v1246
        %v1248 = vpop.f32.mrf.mxu0
        %1249 = vmatprep.mubr.f32.mxu0 0.0
        %1250 = vmatmul.mubr.f32.gmra.mxu0 %v1122
        %v1251 = vpop.f32.mrf.mxu0
        %v1252 = vadd.f32 0.0, %v1251
        %v1253 = vpop.f32.mrf.mxu0
        %1254 = vmatprep.mubr.f32.mxu0 0.0
        %1255 = vmatmul.mubr.f32.gmra.mxu0 %v1125
        %v1256 = vpop.f32.mrf.mxu0
        %v1257 = vadd.f32 0.0, %v1256
        %v1258 = vpop.f32.mrf.mxu0
        %1259 = vmatprep.mubr.f32.mxu0 0.0
        %1260 = vmatmul.mubr.f32.gmra.mxu0 %v1128
        %v1261 = vpop.f32.mrf.mxu0
        %v1262 = vadd.f32 0.0, %v1261
        %v1263 = vpop.f32.mrf.mxu0
        %1264 = vmatprep.mubr.f32.mxu0 0.0
        %1265 = vmatmul.mubr.f32.gmra.mxu0 %v1131
        %v1266 = vpop.f32.mrf.mxu0
        %v1267 = vadd.f32 0.0, %v1266
        %v1268 = vpop.f32.mrf.mxu0
        %1269 = vmatprep.mubr.f32.mxu0 0.0
        %1270 = vmatmul.mubr.f32.gmra.mxu0 %v1134
        %v1271 = vpop.f32.mrf.mxu0
        %v1272 = vadd.f32 0.0, %v1271
        %v1273 = vpop.f32.mrf.mxu0
        %1274 = vmatprep.mubr.f32.mxu0 0.0
        %1275 = vmatmul.mubr.f32.gmra.mxu0 %v1137
        %v1276 = vpop.f32.mrf.mxu0
        %v1277 = vadd.f32 0.0, %v1276
        %v1278 = vpop.f32.mrf.mxu0
        %1279 = vmatprep.mubr.f32.mxu0 0.0
        %1280 = vmatmul.mubr.f32.gmra.mxu0 %v1140
        %v1281 = vpop.f32.mrf.mxu0
        %v1282 = vadd.f32 0.0, %v1281
        %v1283 = vpop.f32.mrf.mxu0
        %1284 = vmatprep.mubr.f32.mxu0 0.0
        %1285 = vmatmul.mubr.f32.gmra.mxu0 %v1143
        %v1286 = vpop.f32.mrf.mxu0
        %v1287 = vadd.f32 0.0, %v1286
        %v1288 = vpop.f32.mrf.mxu0
        %1289 = vdwg.mxu0
        %1290 = vrot.lane.b32.xlu0 %v691, 96
        %v1291 = vpop.permute.xlu0 %1290
        %1292 = vrot.lane.b32.xlu0 %v692, 96
        %v1293 = vpop.permute.xlu0 %1292
        %1294 = vrot.lane.b32.xlu0 %v693, 96
        %v1295 = vpop.permute.xlu0 %1294
        %1296 = vrot.lane.b32.xlu0 %v694, 96
        %v1297 = vpop.permute.xlu0 %1296
        %1298 = vrot.lane.b32.xlu0 %v695, 96
        %v1299 = vpop.permute.xlu0 %1298
        %1300 = vrot.lane.b32.xlu0 %v696, 96
        %v1301 = vpop.permute.xlu0 %1300
        %1302 = vrot.lane.b32.xlu0 %v697, 96
        %v1303 = vpop.permute.xlu0 %1302
        %1304 = vrot.lane.b32.xlu0 %v698, 96
        %v1305 = vpop.permute.xlu0 %1304
        %1306 = vrot.lane.b32.xlu0 %v699, 96
        %v1307 = vpop.permute.xlu0 %1306
        %1308 = vrot.lane.b32.xlu0 %v700, 96
        %v1309 = vpop.permute.xlu0 %1308
        %1310 = vrot.lane.b32.xlu0 %v701, 96
        %v1311 = vpop.permute.xlu0 %1310
        %1312 = vrot.lane.b32.xlu0 %v702, 96
        %v1313 = vpop.permute.xlu0 %1312
        %1314 = vrot.lane.b32.xlu0 %v703, 96
        %v1315 = vpop.permute.xlu0 %1314
        %1316 = vrot.lane.b32.xlu0 %v704, 96
        %v1317 = vpop.permute.xlu0 %1316
        %1318 = vrot.lane.b32.xlu0 %v705, 96
        %v1319 = vpop.permute.xlu0 %1318
        %1320 = vrot.lane.b32.xlu0 %v706, 96
        %v1321 = vpop.permute.xlu0 %1320
        %1322 = vrot.lane.b32.xlu0 %v707, 96
        %v1323 = vpop.permute.xlu0 %1322
        %1324 = vrot.lane.b32.xlu0 %v708, 96
        %v1325 = vpop.permute.xlu0 %1324
        %1326 = vrot.lane.b32.xlu0 %v709, 96
        %v1327 = vpop.permute.xlu0 %1326
        %1328 = vrot.lane.b32.xlu0 %v710, 96
        %v1329 = vpop.permute.xlu0 %1328
        %v1330 = vsel %vm715, %v1291, 0
        %v1332 = vsel %vm715, %v1293, 0
        %v1334 = vsel %vm715, %v1295, 0
        %v1336 = vsel %vm715, %v1297, 0
        %v1338 = vsel %vm715, %v1299, 0
        %v1340 = vsel %vm715, %v1301, 0
        %v1342 = vsel %vm715, %v1303, 0
        %v1344 = vsel %vm715, %v1305, 0
        %v1346 = vsel %vm715, %v1307, 0
        %v1348 = vsel %vm715, %v1309, 0
        %v1350 = vsel %vm715, %v1311, 0
        %v1352 = vsel %vm715, %v1313, 0
        %v1354 = vsel %vm715, %v1315, 0
        %v1356 = vsel %vm715, %v1317, 0
        %v1358 = vsel %vm715, %v1319, 0
        %v1360 = vsel %vm715, %v1321, 0
        %v1362 = vsel %vm715, %v1323, 0
        %v1364 = vsel %vm715, %v1325, 0
        %v1366 = vsel %vm715, %v1327, 0
        %v1368 = vsel %vm715, %v1329, 0
        %1370 = vmatprep.subr.mxu0 0.0
        %1371 = vmatpush1.xpose.msra.mxu0 0.0
        %1372 = vmatprep.subr.mxu0 0.0
        %1373 = vmatpush1.xpose.msra.mxu0 0.0
        %1374 = vmatprep.subr.mxu0 0.0
        %1375 = vmatpush1.xpose.msra.mxu0 0.0
        %1376 = vmatprep.subr.mxu0 0.0
        %1377 = vmatpush1.xpose.msra.mxu0 0.0
        %1378 = vmatprep.subr.mxu0 0.0
        %1379 = vmatpush1.xpose.msra.mxu0 0.0
        %1380 = vmatprep.subr.mxu0 0.0
        %1381 = vmatpush1.xpose.msra.mxu0 0.0
        %1382 = vmatprep.subr.mxu0 0.0
        %1383 = vmatpush1.xpose.msra.mxu0 0.0
        %1384 = vmatprep.subr.mxu0 0.0
        %1385 = vmatpush1.xpose.msra.mxu0 0.0
        %1386 = vmatprep.subr.mxu0 0.0
        %1387 = vmatpush1.xpose.msra.mxu0 0.0
        %1388 = vmatprep.subr.mxu0 0.0
        %1389 = vmatpush1.xpose.msra.mxu0 0.0
        %1390 = vmatprep.subr.mxu0 0.0
        %1391 = vmatpush1.xpose.msra.mxu0 0.0
        %1392 = vmatprep.subr.mxu0 0.0
        %1393 = vmatpush1.xpose.msra.mxu0 0.0
        %1394 = vmatprep.subr.mxu0 0.0
        %1395 = vmatpush1.xpose.msra.mxu0 %v1368
        %1396 = vmatprep.subr.mxu0 0.0
        %1397 = vmatpush1.xpose.msra.mxu0 %v1366
        %1398 = vmatprep.subr.mxu0 0.0
        %1399 = vmatpush1.xpose.msra.mxu0 %v1364
        %1400 = vmatprep.subr.mxu0 0.0
        %1401 = vmatpush1.xpose.msra.mxu0 %v1362
        %1402 = vmatprep.subr.mxu0 0.0
        %1403 = vmatpush2.xpose.msra.mxu0 0.0
        %1404 = vmatprep.subr.mxu0 0.0
        %1405 = vmatpush2.xpose.msra.mxu0 0.0
        %1406 = vmatprep.subr.mxu0 0.0
        %1407 = vmatpush2.xpose.msra.mxu0 0.0
        %1408 = vmatprep.subr.mxu0 0.0
        %1409 = vmatpush2.xpose.msra.mxu0 0.0
        %1410 = vmatprep.subr.mxu0 0.0
        %1411 = vmatpush2.xpose.msra.mxu0 0.0
        %1412 = vmatprep.subr.mxu0 0.0
        %1413 = vmatpush2.xpose.msra.mxu0 0.0
        %1414 = vmatprep.subr.mxu0 0.0
        %1415 = vmatpush2.xpose.msra.mxu0 0.0
        %1416 = vmatprep.subr.mxu0 0.0
        %1417 = vmatpush2.xpose.msra.mxu0 0.0
        %1418 = vmatprep.subr.mxu0 0.0
        %1419 = vmatpush2.xpose.msra.mxu0 0.0
        %1420 = vmatprep.subr.mxu0 0.0
        %1421 = vmatpush2.xpose.msra.mxu0 0.0
        %1422 = vmatprep.subr.mxu0 0.0
        %1423 = vmatpush2.xpose.msra.mxu0 0.0
        %1424 = vmatprep.subr.mxu0 0.0
        %1425 = vmatpush2.xpose.msra.mxu0 0.0
        %1426 = vmatprep.subr.mxu0 0.0
        %1427 = vmatpush2.xpose.msra.mxu0 0.0
        %1428 = vmatprep.subr.mxu0 0.0
        %1429 = vmatpush2.xpose.msra.mxu0 0.0
        %1430 = vmatprep.subr.mxu0 0.0
        %1431 = vmatpush2.xpose.msra.mxu0 0.0
        %1432 = vmatprep.subr.mxu0 0.0
        %1433 = vmatpush2.xpose.msra.mxu0 0.0
        %1434 = vmatprep.mubr.f32.mxu0 0.0
        %1435 = vmatmul.mubr.f32.gmra.mxu0 %v1330
        %v1436 = vpop.f32.mrf.mxu0
        %v1437 = vadd.f32 0.0, %v1436
        %v1438 = vpop.f32.mrf.mxu0
        %1439 = vmatprep.mubr.f32.mxu0 0.0
        %1440 = vmatmul.mubr.f32.gmra.mxu0 %v1332
        %v1441 = vpop.f32.mrf.mxu0
        %v1442 = vadd.f32 0.0, %v1441
        %v1443 = vpop.f32.mrf.mxu0
        %1444 = vmatprep.mubr.f32.mxu0 0.0
        %1445 = vmatmul.mubr.f32.gmra.mxu0 %v1334
        %v1446 = vpop.f32.mrf.mxu0
        %v1447 = vadd.f32 0.0, %v1446
        %v1448 = vpop.f32.mrf.mxu0
        %1449 = vmatprep.mubr.f32.mxu0 0.0
        %1450 = vmatmul.mubr.f32.gmra.mxu0 %v1336
        %v1451 = vpop.f32.mrf.mxu0
        %v1452 = vadd.f32 0.0, %v1451
        %v1453 = vpop.f32.mrf.mxu0
        %1454 = vmatprep.mubr.f32.mxu0 0.0
        %1455 = vmatmul.mubr.f32.gmra.mxu0 %v1338
        %v1456 = vpop.f32.mrf.mxu0
        %v1457 = vadd.f32 0.0, %v1456
        %v1458 = vpop.f32.mrf.mxu0
        %1459 = vmatprep.mubr.f32.mxu0 0.0
        %1460 = vmatmul.mubr.f32.gmra.mxu0 %v1340
        %v1461 = vpop.f32.mrf.mxu0
        %v1462 = vadd.f32 0.0, %v1461
        %v1463 = vpop.f32.mrf.mxu0
        %1464 = vmatprep.mubr.f32.mxu0 0.0
        %1465 = vmatmul.mubr.f32.gmra.mxu0 %v1342
        %v1466 = vpop.f32.mrf.mxu0
        %v1467 = vadd.f32 0.0, %v1466
        %v1468 = vpop.f32.mrf.mxu0
        %1469 = vmatprep.mubr.f32.mxu0 0.0
        %1470 = vmatmul.mubr.f32.gmra.mxu0 %v1344
        %v1471 = vpop.f32.mrf.mxu0
        %v1472 = vadd.f32 0.0, %v1471
        %v1473 = vpop.f32.mrf.mxu0
        %1474 = vmatprep.mubr.f32.mxu0 0.0
        %1475 = vmatmul.mubr.f32.gmra.mxu0 %v1346
        %v1476 = vpop.f32.mrf.mxu0
        %v1477 = vadd.f32 0.0, %v1476
        %v1478 = vpop.f32.mrf.mxu0
        %1479 = vmatprep.mubr.f32.mxu0 0.0
        %1480 = vmatmul.mubr.f32.gmra.mxu0 %v1348
        %v1481 = vpop.f32.mrf.mxu0
        %v1482 = vadd.f32 0.0, %v1481
        %v1483 = vpop.f32.mrf.mxu0
        %1484 = vmatprep.mubr.f32.mxu0 0.0
        %1485 = vmatmul.mubr.f32.gmra.mxu0 %v1350
        %v1486 = vpop.f32.mrf.mxu0
        %v1487 = vadd.f32 0.0, %v1486
        %v1488 = vpop.f32.mrf.mxu0
        %1489 = vmatprep.mubr.f32.mxu0 0.0
        %1490 = vmatmul.mubr.f32.gmra.mxu0 %v1352
        %v1491 = vpop.f32.mrf.mxu0
        %v1492 = vadd.f32 0.0, %v1491
        %v1493 = vpop.f32.mrf.mxu0
        %1494 = vmatprep.mubr.f32.mxu0 0.0
        %1495 = vmatmul.mubr.f32.gmra.mxu0 %v1354
        %v1496 = vpop.f32.mrf.mxu0
        %v1497 = vadd.f32 0.0, %v1496
        %v1498 = vpop.f32.mrf.mxu0
        %1499 = vmatprep.mubr.f32.mxu0 0.0
        %1500 = vmatmul.mubr.f32.gmra.mxu0 %v1356
        %v1501 = vpop.f32.mrf.mxu0
        %v1502 = vadd.f32 0.0, %v1501
        %v1503 = vpop.f32.mrf.mxu0
        %1504 = vmatprep.mubr.f32.mxu0 0.0
        %1505 = vmatmul.mubr.f32.gmra.mxu0 %v1358
        %v1506 = vpop.f32.mrf.mxu0
        %v1507 = vadd.f32 0.0, %v1506
        %v1508 = vpop.f32.mrf.mxu0
        %1509 = vmatprep.mubr.f32.mxu0 0.0
        %1510 = vmatmul.mubr.f32.gmra.mxu0 %v1360
        %v1511 = vpop.f32.mrf.mxu0
        %v1512 = vadd.f32 0.0, %v1511
        %v1513 = vpop.f32.mrf.mxu0
        %1514 = vdwg.mxu0
        %v1515 = vsel %vm715, %v1437, -inf
        %1516 = vmax.xlane.f32.xlu0 %v1515
        %v1517 = vpop.xlane.xlu0 %1516
        %v1518 = vsel %vm715, %v1442, -inf
        %1519 = vmax.xlane.f32.xlu0 %v1518
        %v1520 = vpop.xlane.xlu0 %1519
        %v1521 = vsel %vm715, %v1447, -inf
        %1522 = vmax.xlane.f32.xlu0 %v1521
        %v1523 = vpop.xlane.xlu0 %1522
        %v1524 = vsel %vm715, %v1452, -inf
        %1525 = vmax.xlane.f32.xlu0 %v1524
        %v1526 = vpop.xlane.xlu0 %1525
        %v1527 = vsel %vm715, %v1457, -inf
        %1528 = vmax.xlane.f32.xlu0 %v1527
        %v1529 = vpop.xlane.xlu0 %1528
        %v1530 = vsel %vm715, %v1462, -inf
        %1531 = vmax.xlane.f32.xlu0 %v1530
        %v1532 = vpop.xlane.xlu0 %1531
        %v1533 = vsel %vm715, %v1467, -inf
        %1534 = vmax.xlane.f32.xlu0 %v1533
        %v1535 = vpop.xlane.xlu0 %1534
        %v1536 = vsel %vm715, %v1472, -inf
        %1537 = vmax.xlane.f32.xlu0 %v1536
        %v1538 = vpop.xlane.xlu0 %1537
        %v1539 = vsel %vm715, %v1477, -inf
        %1540 = vmax.xlane.f32.xlu0 %v1539
        %v1541 = vpop.xlane.xlu0 %1540
        %v1542 = vsel %vm715, %v1482, -inf
        %1543 = vmax.xlane.f32.xlu0 %v1542
        %v1544 = vpop.xlane.xlu0 %1543
        %v1545 = vsel %vm715, %v1487, -inf
        %1546 = vmax.xlane.f32.xlu0 %v1545
        %v1547 = vpop.xlane.xlu0 %1546
        %v1548 = vsel %vm715, %v1492, -inf
        %1549 = vmax.xlane.f32.xlu0 %v1548
        %v1550 = vpop.xlane.xlu0 %1549
        %v1551 = vsel %vm715, %v1497, -inf
        %1552 = vmax.xlane.f32.xlu0 %v1551
        %v1553 = vpop.xlane.xlu0 %1552
        %v1554 = vsel %vm715, %v1502, -inf
        %1555 = vmax.xlane.f32.xlu0 %v1554
        %v1556 = vpop.xlane.xlu0 %1555
        %v1557 = vsel %vm715, %v1507, -inf
        %1558 = vmax.xlane.f32.xlu0 %v1557
        %v1559 = vpop.xlane.xlu0 %1558
        %v1560 = vsel %vm715, %v1512, -inf
        %1561 = vmax.xlane.f32.xlu0 %v1560
        %v1562 = vpop.xlane.xlu0 %1561
        %v1563 = vsub.f32 %v1437, %v1517
        %v1564 = vsub.f32 %v1442, %v1520
        %v1565 = vsub.f32 %v1447, %v1523
        %v1566 = vsub.f32 %v1452, %v1526
        %v1567 = vsub.f32 %v1457, %v1529
        %v1568 = vsub.f32 %v1462, %v1532
        %v1569 = vsub.f32 %v1467, %v1535
        %v1570 = vsub.f32 %v1472, %v1538
        %v1571 = vsub.f32 %v1477, %v1541
        %v1572 = vsub.f32 %v1482, %v1544
        %v1573 = vsub.f32 %v1487, %v1547
        %v1574 = vsub.f32 %v1492, %v1550
        %v1575 = vsub.f32 %v1497, %v1553
        %v1576 = vsub.f32 %v1502, %v1556
        %v1577 = vsub.f32 %v1507, %v1559
        %v1578 = vsub.f32 %v1512, %v1562
        %v1579 = vmul.f32 %v1563, 1.442695
        %v1580 = vpow.pop %v1579
        %v1581 = vmul.f32 %v1564, 1.442695
        %v1582 = vpow.pop %v1581
        %v1583 = vmul.f32 %v1565, 1.442695
        %v1584 = vpow.pop %v1583
        %v1585 = vmul.f32 %v1566, 1.442695
        %v1586 = vpow.pop %v1585
        %v1587 = vmul.f32 %v1567, 1.442695
        %v1588 = vpow.pop %v1587
        %v1589 = vmul.f32 %v1568, 1.442695
        %v1590 = vpow.pop %v1589
        %v1591 = vmul.f32 %v1569, 1.442695
        %v1592 = vpow.pop %v1591
        %v1593 = vmul.f32 %v1570, 1.442695
        %v1594 = vpow.pop %v1593
        %v1595 = vmul.f32 %v1571, 1.442695
        %v1596 = vpow.pop %v1595
        %v1597 = vmul.f32 %v1572, 1.442695
        %v1598 = vpow.pop %v1597
        %v1599 = vmul.f32 %v1573, 1.442695
        %v1600 = vpow.pop %v1599
        %v1601 = vmul.f32 %v1574, 1.442695
        %v1602 = vpow.pop %v1601
        %v1603 = vmul.f32 %v1575, 1.442695
        %v1604 = vpow.pop %v1603
        %v1605 = vmul.f32 %v1576, 1.442695
        %v1606 = vpow.pop %v1605
        %v1607 = vmul.f32 %v1577, 1.442695
        %v1608 = vpow.pop %v1607
        %v1609 = vmul.f32 %v1578, 1.442695
        %v1610 = vpow.pop %v1609
        %v1611 = vsel %vm715, %v1580, 0.0
        %1612 = vadd.xlane.f32.xlu0 %v1611
        %v1613 = vpop.xlane.xlu0 %1612
        %v1614 = vsel %vm715, %v1582, 0.0
        %1615 = vadd.xlane.f32.xlu0 %v1614
        %v1616 = vpop.xlane.xlu0 %1615
        %v1617 = vsel %vm715, %v1584, 0.0
        %1618 = vadd.xlane.f32.xlu0 %v1617
        %v1619 = vpop.xlane.xlu0 %1618
        %v1620 = vsel %vm715, %v1586, 0.0
        %1621 = vadd.xlane.f32.xlu0 %v1620
        %v1622 = vpop.xlane.xlu0 %1621
        %v1623 = vsel %vm715, %v1588, 0.0
        %1624 = vadd.xlane.f32.xlu0 %v1623
        %v1625 = vpop.xlane.xlu0 %1624
        %v1626 = vsel %vm715, %v1590, 0.0
        %1627 = vadd.xlane.f32.xlu0 %v1626
        %v1628 = vpop.xlane.xlu0 %1627
        %v1629 = vsel %vm715, %v1592, 0.0
        %1630 = vadd.xlane.f32.xlu0 %v1629
        %v1631 = vpop.xlane.xlu0 %1630
        %v1632 = vsel %vm715, %v1594, 0.0
        %1633 = vadd.xlane.f32.xlu0 %v1632
        %v1634 = vpop.xlane.xlu0 %1633
        %v1635 = vsel %vm715, %v1596, 0.0
        %1636 = vadd.xlane.f32.xlu0 %v1635
        %v1637 = vpop.xlane.xlu0 %1636
        %v1638 = vsel %vm715, %v1598, 0.0
        %1639 = vadd.xlane.f32.xlu0 %v1638
        %v1640 = vpop.xlane.xlu0 %1639
        %v1641 = vsel %vm715, %v1600, 0.0
        %1642 = vadd.xlane.f32.xlu0 %v1641
        %v1643 = vpop.xlane.xlu0 %1642
        %v1644 = vsel %vm715, %v1602, 0.0
        %1645 = vadd.xlane.f32.xlu0 %v1644
        %v1646 = vpop.xlane.xlu0 %1645
        %v1647 = vsel %vm715, %v1604, 0.0
        %1648 = vadd.xlane.f32.xlu0 %v1647
        %v1649 = vpop.xlane.xlu0 %1648
        %v1650 = vsel %vm715, %v1606, 0.0
        %1651 = vadd.xlane.f32.xlu0 %v1650
        %v1652 = vpop.xlane.xlu0 %1651
        %v1653 = vsel %vm715, %v1608, 0.0
        %1654 = vadd.xlane.f32.xlu0 %v1653
        %v1655 = vpop.xlane.xlu0 %1654
        %v1656 = vsel %vm715, %v1610, 0.0
        %1657 = vadd.xlane.f32.xlu0 %v1656
        %v1658 = vpop.xlane.xlu0 %1657
        %v1659 = vrcp.pop %v1613
        %v1660 = vrcp.pop %v1616
        %v1661 = vrcp.pop %v1619
        %v1662 = vrcp.pop %v1622
        %v1663 = vrcp.pop %v1625
        %v1664 = vrcp.pop %v1628
        %v1665 = vrcp.pop %v1631
        %v1666 = vrcp.pop %v1634
        %v1667 = vrcp.pop %v1637
        %v1668 = vrcp.pop %v1640
        %v1669 = vrcp.pop %v1643
        %v1670 = vrcp.pop %v1646
        %v1671 = vrcp.pop %v1649
        %v1672 = vrcp.pop %v1652
        %v1673 = vrcp.pop %v1655
        %v1674 = vrcp.pop %v1658
        %v1675 = vmul.f32 %v1580, %v1659
        %v1676 = vmul.f32 %v1582, %v1660
        %v1677 = vmul.f32 %v1584, %v1661
        %v1678 = vmul.f32 %v1586, %v1662
        %v1679 = vmul.f32 %v1588, %v1663
        %v1680 = vmul.f32 %v1590, %v1664
        %v1681 = vmul.f32 %v1592, %v1665
        %v1682 = vmul.f32 %v1594, %v1666
        %v1683 = vmul.f32 %v1596, %v1667
        %v1684 = vmul.f32 %v1598, %v1668
        %v1685 = vmul.f32 %v1600, %v1669
        %v1686 = vmul.f32 %v1602, %v1670
        %v1687 = vmul.f32 %v1604, %v1671
        %v1688 = vmul.f32 %v1606, %v1672
        %v1689 = vmul.f32 %v1608, %v1673
        %v1690 = vmul.f32 %v1610, %v1674
        %1695 = vrot.lane.b32.xlu0 %v711, 96
        %v1696 = vpop.permute.xlu0 %1695
        %1697 = vrot.lane.b32.xlu0 %v712, 96
        %v1698 = vpop.permute.xlu0 %1697
        %1699 = vrot.lane.b32.xlu0 %v713, 96
        %v1700 = vpop.permute.xlu0 %1699
        %1701 = vrot.lane.b32.xlu0 %v714, 96
        %v1702 = vpop.permute.xlu0 %1701
        %v1708 = vsel %vm715, %v1675, 0
        %v1711 = vsel %vm715, %v1676, 0
        %v1714 = vsel %vm715, %v1677, 0
        %v1717 = vsel %vm715, %v1678, 0
        %v1720 = vsel %vm715, %v1679, 0
        %v1723 = vsel %vm715, %v1680, 0
        %v1726 = vsel %vm715, %v1681, 0
        %v1729 = vsel %vm715, %v1682, 0
        %v1732 = vsel %vm715, %v1683, 0
        %v1735 = vsel %vm715, %v1684, 0
        %v1738 = vsel %vm715, %v1685, 0
        %v1741 = vsel %vm715, %v1686, 0
        %v1744 = vsel %vm715, %v1687, 0
        %v1747 = vsel %vm715, %v1688, 0
        %v1750 = vsel %vm715, %v1689, 0
        %v1753 = vsel %vm715, %v1690, 0
        %1755 = vmatprep.subr.mxu0 0.0
        %1756 = vmatpush1.msra.mxu0 0.0
        %1757 = vmatprep.subr.mxu0 0.0
        %1758 = vmatpush1.msra.mxu0 0.0
        %1759 = vmatprep.subr.mxu0 0.0
        %1760 = vmatpush1.msra.mxu0 0.0
        %1761 = vmatprep.subr.mxu0 0.0
        %1762 = vmatpush1.msra.mxu0 0.0
        %1763 = vmatprep.subr.mxu0 0.0
        %1764 = vmatpush1.msra.mxu0 0.0
        %1765 = vmatprep.subr.mxu0 0.0
        %1766 = vmatpush1.msra.mxu0 0.0
        %1767 = vmatprep.subr.mxu0 0.0
        %1768 = vmatpush1.msra.mxu0 0.0
        %1769 = vmatprep.subr.mxu0 0.0
        %1770 = vmatpush1.msra.mxu0 0.0
        %1771 = vmatprep.subr.mxu0 0.0
        %1772 = vmatpush1.msra.mxu0 0.0
        %1773 = vmatprep.subr.mxu0 0.0
        %1774 = vmatpush1.msra.mxu0 0.0
        %1775 = vmatprep.subr.mxu0 0.0
        %1776 = vmatpush1.msra.mxu0 0.0
        %1777 = vmatprep.subr.mxu0 0.0
        %1778 = vmatpush1.msra.mxu0 0.0
        %1779 = vmatprep.subr.mxu0 0.0
        %1780 = vmatpush1.msra.mxu0 %v1702
        %1781 = vmatprep.subr.mxu0 0.0
        %1782 = vmatpush1.msra.mxu0 %v1700
        %1783 = vmatprep.subr.mxu0 0.0
        %1784 = vmatpush1.msra.mxu0 %v1698
        %1785 = vmatprep.subr.mxu0 0.0
        %1786 = vmatpush1.msra.mxu0 %v1696
        %1787 = vmatprep.subr.mxu0 0.0
        %1788 = vmatpush2.msra.mxu0 0.0
        %1789 = vmatprep.subr.mxu0 0.0
        %1790 = vmatpush2.msra.mxu0 0.0
        %1791 = vmatprep.subr.mxu0 0.0
        %1792 = vmatpush2.msra.mxu0 0.0
        %1793 = vmatprep.subr.mxu0 0.0
        %1794 = vmatpush2.msra.mxu0 0.0
        %1795 = vmatprep.subr.mxu0 0.0
        %1796 = vmatpush2.msra.mxu0 0.0
        %1797 = vmatprep.subr.mxu0 0.0
        %1798 = vmatpush2.msra.mxu0 0.0
        %1799 = vmatprep.subr.mxu0 0.0
        %1800 = vmatpush2.msra.mxu0 0.0
        %1801 = vmatprep.subr.mxu0 0.0
        %1802 = vmatpush2.msra.mxu0 0.0
        %1803 = vmatprep.subr.mxu0 0.0
        %1804 = vmatpush2.msra.mxu0 0.0
        %1805 = vmatprep.subr.mxu0 0.0
        %1806 = vmatpush2.msra.mxu0 0.0
        %1807 = vmatprep.subr.mxu0 0.0
        %1808 = vmatpush2.msra.mxu0 0.0
        %1809 = vmatprep.subr.mxu0 0.0
        %1810 = vmatpush2.msra.mxu0 0.0
        %1811 = vmatprep.subr.mxu0 0.0
        %1812 = vmatpush2.msra.mxu0 0.0
        %1813 = vmatprep.subr.mxu0 0.0
        %1814 = vmatpush2.msra.mxu0 0.0
        %1815 = vmatprep.subr.mxu0 0.0
        %1816 = vmatpush2.msra.mxu0 0.0
        %1817 = vmatprep.subr.mxu0 0.0
        %1818 = vmatpush2.msra.mxu0 0.0
        %1819 = vmatprep.mubr.f32.mxu0 0.0
        %1820 = vmatmul.mubr.f32.gmra.mxu0 %v1708
        %v1821 = vpop.f32.mrf.mxu0
        %v1822 = vadd.f32 0.0, %v1821
        %v1823 = vpop.f32.mrf.mxu0
        %1824 = vmatprep.mubr.f32.mxu0 0.0
        %1825 = vmatmul.mubr.f32.gmra.mxu0 %v1711
        %v1826 = vpop.f32.mrf.mxu0
        %v1827 = vadd.f32 0.0, %v1826
        %v1828 = vpop.f32.mrf.mxu0
        %1829 = vmatprep.mubr.f32.mxu0 0.0
        %1830 = vmatmul.mubr.f32.gmra.mxu0 %v1714
        %v1831 = vpop.f32.mrf.mxu0
        %v1832 = vadd.f32 0.0, %v1831
        %v1833 = vpop.f32.mrf.mxu0
        %1834 = vmatprep.mubr.f32.mxu0 0.0
        %1835 = vmatmul.mubr.f32.gmra.mxu0 %v1717
        %v1836 = vpop.f32.mrf.mxu0
        %v1837 = vadd.f32 0.0, %v1836
        %v1838 = vpop.f32.mrf.mxu0
        %1839 = vmatprep.mubr.f32.mxu0 0.0
        %1840 = vmatmul.mubr.f32.gmra.mxu0 %v1720
        %v1841 = vpop.f32.mrf.mxu0
        %v1842 = vadd.f32 0.0, %v1841
        %v1843 = vpop.f32.mrf.mxu0
        %1844 = vmatprep.mubr.f32.mxu0 0.0
        %1845 = vmatmul.mubr.f32.gmra.mxu0 %v1723
        %v1846 = vpop.f32.mrf.mxu0
        %v1847 = vadd.f32 0.0, %v1846
        %v1848 = vpop.f32.mrf.mxu0
        %1849 = vmatprep.mubr.f32.mxu0 0.0
        %1850 = vmatmul.mubr.f32.gmra.mxu0 %v1726
        %v1851 = vpop.f32.mrf.mxu0
        %v1852 = vadd.f32 0.0, %v1851
        %v1853 = vpop.f32.mrf.mxu0
        %1854 = vmatprep.mubr.f32.mxu0 0.0
        %1855 = vmatmul.mubr.f32.gmra.mxu0 %v1729
        %v1856 = vpop.f32.mrf.mxu0
        %v1857 = vadd.f32 0.0, %v1856
        %v1858 = vpop.f32.mrf.mxu0
        %1859 = vmatprep.mubr.f32.mxu0 0.0
        %1860 = vmatmul.mubr.f32.gmra.mxu0 %v1732
        %v1861 = vpop.f32.mrf.mxu0
        %v1862 = vadd.f32 0.0, %v1861
        %v1863 = vpop.f32.mrf.mxu0
        %1864 = vmatprep.mubr.f32.mxu0 0.0
        %1865 = vmatmul.mubr.f32.gmra.mxu0 %v1735
        %v1866 = vpop.f32.mrf.mxu0
        %v1867 = vadd.f32 0.0, %v1866
        %v1868 = vpop.f32.mrf.mxu0
        %1869 = vmatprep.mubr.f32.mxu0 0.0
        %1870 = vmatmul.mubr.f32.gmra.mxu0 %v1738
        %v1871 = vpop.f32.mrf.mxu0
        %v1872 = vadd.f32 0.0, %v1871
        %v1873 = vpop.f32.mrf.mxu0
        %1874 = vmatprep.mubr.f32.mxu0 0.0
        %1875 = vmatmul.mubr.f32.gmra.mxu0 %v1741
        %v1876 = vpop.f32.mrf.mxu0
        %v1877 = vadd.f32 0.0, %v1876
        %v1878 = vpop.f32.mrf.mxu0
        %1879 = vmatprep.mubr.f32.mxu0 0.0
        %1880 = vmatmul.mubr.f32.gmra.mxu0 %v1744
        %v1881 = vpop.f32.mrf.mxu0
        %v1882 = vadd.f32 0.0, %v1881
        %v1883 = vpop.f32.mrf.mxu0
        %1884 = vmatprep.mubr.f32.mxu0 0.0
        %1885 = vmatmul.mubr.f32.gmra.mxu0 %v1747
        %v1886 = vpop.f32.mrf.mxu0
        %v1887 = vadd.f32 0.0, %v1886
        %v1888 = vpop.f32.mrf.mxu0
        %1889 = vmatprep.mubr.f32.mxu0 0.0
        %1890 = vmatmul.mubr.f32.gmra.mxu0 %v1750
        %v1891 = vpop.f32.mrf.mxu0
        %v1892 = vadd.f32 0.0, %v1891
        %v1893 = vpop.f32.mrf.mxu0
        %1894 = vmatprep.mubr.f32.mxu0 0.0
        %1895 = vmatmul.mubr.f32.gmra.mxu0 %v1753
        %v1896 = vpop.f32.mrf.mxu0
        %v1897 = vadd.f32 0.0, %v1896
        %v1898 = vpop.f32.mrf.mxu0
        %1899 = vdwg.mxu0
        %1900 = vrot.lane.b32.xlu0 %v691, 64
        %v1901 = vpop.permute.xlu0 %1900
        %1902 = vrot.lane.b32.xlu0 %v692, 64
        %v1903 = vpop.permute.xlu0 %1902
        %1904 = vrot.lane.b32.xlu0 %v693, 64
        %v1905 = vpop.permute.xlu0 %1904
        %1906 = vrot.lane.b32.xlu0 %v694, 64
        %v1907 = vpop.permute.xlu0 %1906
        %1908 = vrot.lane.b32.xlu0 %v695, 64
        %v1909 = vpop.permute.xlu0 %1908
        %1910 = vrot.lane.b32.xlu0 %v696, 64
        %v1911 = vpop.permute.xlu0 %1910
        %1912 = vrot.lane.b32.xlu0 %v697, 64
        %v1913 = vpop.permute.xlu0 %1912
        %1914 = vrot.lane.b32.xlu0 %v698, 64
        %v1915 = vpop.permute.xlu0 %1914
        %1916 = vrot.lane.b32.xlu0 %v699, 64
        %v1917 = vpop.permute.xlu0 %1916
        %1918 = vrot.lane.b32.xlu0 %v700, 64
        %v1919 = vpop.permute.xlu0 %1918
        %1920 = vrot.lane.b32.xlu0 %v701, 64
        %v1921 = vpop.permute.xlu0 %1920
        %1922 = vrot.lane.b32.xlu0 %v702, 64
        %v1923 = vpop.permute.xlu0 %1922
        %1924 = vrot.lane.b32.xlu0 %v703, 64
        %v1925 = vpop.permute.xlu0 %1924
        %1926 = vrot.lane.b32.xlu0 %v704, 64
        %v1927 = vpop.permute.xlu0 %1926
        %1928 = vrot.lane.b32.xlu0 %v705, 64
        %v1929 = vpop.permute.xlu0 %1928
        %1930 = vrot.lane.b32.xlu0 %v706, 64
        %v1931 = vpop.permute.xlu0 %1930
        %1932 = vrot.lane.b32.xlu0 %v707, 64
        %v1933 = vpop.permute.xlu0 %1932
        %1934 = vrot.lane.b32.xlu0 %v708, 64
        %v1935 = vpop.permute.xlu0 %1934
        %1936 = vrot.lane.b32.xlu0 %v709, 64
        %v1937 = vpop.permute.xlu0 %1936
        %1938 = vrot.lane.b32.xlu0 %v710, 64
        %v1939 = vpop.permute.xlu0 %1938
        %v1940 = vsel %vm715, %v1901, 0
        %v1942 = vsel %vm715, %v1903, 0
        %v1944 = vsel %vm715, %v1905, 0
        %v1946 = vsel %vm715, %v1907, 0
        %v1948 = vsel %vm715, %v1909, 0
        %v1950 = vsel %vm715, %v1911, 0
        %v1952 = vsel %vm715, %v1913, 0
        %v1954 = vsel %vm715, %v1915, 0
        %v1956 = vsel %vm715, %v1917, 0
        %v1958 = vsel %vm715, %v1919, 0
        %v1960 = vsel %vm715, %v1921, 0
        %v1962 = vsel %vm715, %v1923, 0
        %v1964 = vsel %vm715, %v1925, 0
        %v1966 = vsel %vm715, %v1927, 0
        %v1968 = vsel %vm715, %v1929, 0
        %v1970 = vsel %vm715, %v1931, 0
        %v1972 = vsel %vm715, %v1933, 0
        %v1974 = vsel %vm715, %v1935, 0
        %v1976 = vsel %vm715, %v1937, 0
        %v1978 = vsel %vm715, %v1939, 0
        %1980 = vmatprep.subr.mxu0 0.0
        %1981 = vmatpush1.xpose.msra.mxu0 0.0
        %1982 = vmatprep.subr.mxu0 0.0
        %1983 = vmatpush1.xpose.msra.mxu0 0.0
        %1984 = vmatprep.subr.mxu0 0.0
        %1985 = vmatpush1.xpose.msra.mxu0 0.0
        %1986 = vmatprep.subr.mxu0 0.0
        %1987 = vmatpush1.xpose.msra.mxu0 0.0
        %1988 = vmatprep.subr.mxu0 0.0
        %1989 = vmatpush1.xpose.msra.mxu0 0.0
        %1990 = vmatprep.subr.mxu0 0.0
        %1991 = vmatpush1.xpose.msra.mxu0 0.0
        %1992 = vmatprep.subr.mxu0 0.0
        %1993 = vmatpush1.xpose.msra.mxu0 0.0
        %1994 = vmatprep.subr.mxu0 0.0
        %1995 = vmatpush1.xpose.msra.mxu0 0.0
        %1996 = vmatprep.subr.mxu0 0.0
        %1997 = vmatpush1.xpose.msra.mxu0 0.0
        %1998 = vmatprep.subr.mxu0 0.0
        %1999 = vmatpush1.xpose.msra.mxu0 0.0
        %2000 = vmatprep.subr.mxu0 0.0
        %2001 = vmatpush1.xpose.msra.mxu0 0.0
        %2002 = vmatprep.subr.mxu0 0.0
        %2003 = vmatpush1.xpose.msra.mxu0 0.0
        %2004 = vmatprep.subr.mxu0 0.0
        %2005 = vmatpush1.xpose.msra.mxu0 %v1978
        %2006 = vmatprep.subr.mxu0 0.0
        %2007 = vmatpush1.xpose.msra.mxu0 %v1976
        %2008 = vmatprep.subr.mxu0 0.0
        %2009 = vmatpush1.xpose.msra.mxu0 %v1974
        %2010 = vmatprep.subr.mxu0 0.0
        %2011 = vmatpush1.xpose.msra.mxu0 %v1972
        %2012 = vmatprep.subr.mxu0 0.0
        %2013 = vmatpush2.xpose.msra.mxu0 0.0
        %2014 = vmatprep.subr.mxu0 0.0
        %2015 = vmatpush2.xpose.msra.mxu0 0.0
        %2016 = vmatprep.subr.mxu0 0.0
        %2017 = vmatpush2.xpose.msra.mxu0 0.0
        %2018 = vmatprep.subr.mxu0 0.0
        %2019 = vmatpush2.xpose.msra.mxu0 0.0
        %2020 = vmatprep.subr.mxu0 0.0
        %2021 = vmatpush2.xpose.msra.mxu0 0.0
        %2022 = vmatprep.subr.mxu0 0.0
        %2023 = vmatpush2.xpose.msra.mxu0 0.0
        %2024 = vmatprep.subr.mxu0 0.0
        %2025 = vmatpush2.xpose.msra.mxu0 0.0
        %2026 = vmatprep.subr.mxu0 0.0
        %2027 = vmatpush2.xpose.msra.mxu0 0.0
        %2028 = vmatprep.subr.mxu0 0.0
        %2029 = vmatpush2.xpose.msra.mxu0 0.0
        %2030 = vmatprep.subr.mxu0 0.0
        %2031 = vmatpush2.xpose.msra.mxu0 0.0
        %2032 = vmatprep.subr.mxu0 0.0
        %2033 = vmatpush2.xpose.msra.mxu0 0.0
        %2034 = vmatprep.subr.mxu0 0.0
        %2035 = vmatpush2.xpose.msra.mxu0 0.0
        %2036 = vmatprep.subr.mxu0 0.0
        %2037 = vmatpush2.xpose.msra.mxu0 0.0
        %2038 = vmatprep.subr.mxu0 0.0
        %2039 = vmatpush2.xpose.msra.mxu0 0.0
        %2040 = vmatprep.subr.mxu0 0.0
        %2041 = vmatpush2.xpose.msra.mxu0 0.0
        %2042 = vmatprep.subr.mxu0 0.0
        %2043 = vmatpush2.xpose.msra.mxu0 0.0
        %2044 = vmatprep.mubr.f32.mxu0 0.0
        %2045 = vmatmul.mubr.f32.gmra.mxu0 %v1940
        %v2046 = vpop.f32.mrf.mxu0
        %v2047 = vadd.f32 0.0, %v2046
        %v2048 = vpop.f32.mrf.mxu0
        %2049 = vmatprep.mubr.f32.mxu0 0.0
        %2050 = vmatmul.mubr.f32.gmra.mxu0 %v1942
        %v2051 = vpop.f32.mrf.mxu0
        %v2052 = vadd.f32 0.0, %v2051
        %v2053 = vpop.f32.mrf.mxu0
        %2054 = vmatprep.mubr.f32.mxu0 0.0
        %2055 = vmatmul.mubr.f32.gmra.mxu0 %v1944
        %v2056 = vpop.f32.mrf.mxu0
        %v2057 = vadd.f32 0.0, %v2056
        %v2058 = vpop.f32.mrf.mxu0
        %2059 = vmatprep.mubr.f32.mxu0 0.0
        %2060 = vmatmul.mubr.f32.gmra.mxu0 %v1946
        %v2061 = vpop.f32.mrf.mxu0
        %v2062 = vadd.f32 0.0, %v2061
        %v2063 = vpop.f32.mrf.mxu0
        %2064 = vmatprep.mubr.f32.mxu0 0.0
        %2065 = vmatmul.mubr.f32.gmra.mxu0 %v1948
        %v2066 = vpop.f32.mrf.mxu0
        %v2067 = vadd.f32 0.0, %v2066
        %v2068 = vpop.f32.mrf.mxu0
        %2069 = vmatprep.mubr.f32.mxu0 0.0
        %2070 = vmatmul.mubr.f32.gmra.mxu0 %v1950
        %v2071 = vpop.f32.mrf.mxu0
        %v2072 = vadd.f32 0.0, %v2071
        %v2073 = vpop.f32.mrf.mxu0
        %2074 = vmatprep.mubr.f32.mxu0 0.0
        %2075 = vmatmul.mubr.f32.gmra.mxu0 %v1952
        %v2076 = vpop.f32.mrf.mxu0
        %v2077 = vadd.f32 0.0, %v2076
        %v2078 = vpop.f32.mrf.mxu0
        %2079 = vmatprep.mubr.f32.mxu0 0.0
        %2080 = vmatmul.mubr.f32.gmra.mxu0 %v1954
        %v2081 = vpop.f32.mrf.mxu0
        %v2082 = vadd.f32 0.0, %v2081
        %v2083 = vpop.f32.mrf.mxu0
        %2084 = vmatprep.mubr.f32.mxu0 0.0
        %2085 = vmatmul.mubr.f32.gmra.mxu0 %v1956
        %v2086 = vpop.f32.mrf.mxu0
        %v2087 = vadd.f32 0.0, %v2086
        %v2088 = vpop.f32.mrf.mxu0
        %2089 = vmatprep.mubr.f32.mxu0 0.0
        %2090 = vmatmul.mubr.f32.gmra.mxu0 %v1958
        %v2091 = vpop.f32.mrf.mxu0
        %v2092 = vadd.f32 0.0, %v2091
        %v2093 = vpop.f32.mrf.mxu0
        %2094 = vmatprep.mubr.f32.mxu0 0.0
        %2095 = vmatmul.mubr.f32.gmra.mxu0 %v1960
        %v2096 = vpop.f32.mrf.mxu0
        %v2097 = vadd.f32 0.0, %v2096
        %v2098 = vpop.f32.mrf.mxu0
        %2099 = vmatprep.mubr.f32.mxu0 0.0
        %2100 = vmatmul.mubr.f32.gmra.mxu0 %v1962
        %v2101 = vpop.f32.mrf.mxu0
        %v2102 = vadd.f32 0.0, %v2101
        %v2103 = vpop.f32.mrf.mxu0
        %2104 = vmatprep.mubr.f32.mxu0 0.0
        %2105 = vmatmul.mubr.f32.gmra.mxu0 %v1964
        %v2106 = vpop.f32.mrf.mxu0
        %v2107 = vadd.f32 0.0, %v2106
        %v2108 = vpop.f32.mrf.mxu0
        %2109 = vmatprep.mubr.f32.mxu0 0.0
        %2110 = vmatmul.mubr.f32.gmra.mxu0 %v1966
        %v2111 = vpop.f32.mrf.mxu0
        %v2112 = vadd.f32 0.0, %v2111
        %v2113 = vpop.f32.mrf.mxu0
        %2114 = vmatprep.mubr.f32.mxu0 0.0
        %2115 = vmatmul.mubr.f32.gmra.mxu0 %v1968
        %v2116 = vpop.f32.mrf.mxu0
        %v2117 = vadd.f32 0.0, %v2116
        %v2118 = vpop.f32.mrf.mxu0
        %2119 = vmatprep.mubr.f32.mxu0 0.0
        %2120 = vmatmul.mubr.f32.gmra.mxu0 %v1970
        %v2121 = vpop.f32.mrf.mxu0
        %v2122 = vadd.f32 0.0, %v2121
        %v2123 = vpop.f32.mrf.mxu0
        %2124 = vdwg.mxu0
        %v2125 = vsel %vm715, %v2047, -inf
        %2126 = vmax.xlane.f32.xlu0 %v2125
        %v2127 = vpop.xlane.xlu0 %2126
        %v2128 = vsel %vm715, %v2052, -inf
        %2129 = vmax.xlane.f32.xlu0 %v2128
        %v2130 = vpop.xlane.xlu0 %2129
        %v2131 = vsel %vm715, %v2057, -inf
        %2132 = vmax.xlane.f32.xlu0 %v2131
        %v2133 = vpop.xlane.xlu0 %2132
        %v2134 = vsel %vm715, %v2062, -inf
        %2135 = vmax.xlane.f32.xlu0 %v2134
        %v2136 = vpop.xlane.xlu0 %2135
        %v2137 = vsel %vm715, %v2067, -inf
        %2138 = vmax.xlane.f32.xlu0 %v2137
        %v2139 = vpop.xlane.xlu0 %2138
        %v2140 = vsel %vm715, %v2072, -inf
        %2141 = vmax.xlane.f32.xlu0 %v2140
        %v2142 = vpop.xlane.xlu0 %2141
        %v2143 = vsel %vm715, %v2077, -inf
        %2144 = vmax.xlane.f32.xlu0 %v2143
        %v2145 = vpop.xlane.xlu0 %2144
        %v2146 = vsel %vm715, %v2082, -inf
        %2147 = vmax.xlane.f32.xlu0 %v2146
        %v2148 = vpop.xlane.xlu0 %2147
        %v2149 = vsel %vm715, %v2087, -inf
        %2150 = vmax.xlane.f32.xlu0 %v2149
        %v2151 = vpop.xlane.xlu0 %2150
        %v2152 = vsel %vm715, %v2092, -inf
        %2153 = vmax.xlane.f32.xlu0 %v2152
        %v2154 = vpop.xlane.xlu0 %2153
        %v2155 = vsel %vm715, %v2097, -inf
        %2156 = vmax.xlane.f32.xlu0 %v2155
        %v2157 = vpop.xlane.xlu0 %2156
        %v2158 = vsel %vm715, %v2102, -inf
        %2159 = vmax.xlane.f32.xlu0 %v2158
        %v2160 = vpop.xlane.xlu0 %2159
        %v2161 = vsel %vm715, %v2107, -inf
        %2162 = vmax.xlane.f32.xlu0 %v2161
        %v2163 = vpop.xlane.xlu0 %2162
        %v2164 = vsel %vm715, %v2112, -inf
        %2165 = vmax.xlane.f32.xlu0 %v2164
        %v2166 = vpop.xlane.xlu0 %2165
        %v2167 = vsel %vm715, %v2117, -inf
        %2168 = vmax.xlane.f32.xlu0 %v2167
        %v2169 = vpop.xlane.xlu0 %2168
        %v2170 = vsel %vm715, %v2122, -inf
        %2171 = vmax.xlane.f32.xlu0 %v2170
        %v2172 = vpop.xlane.xlu0 %2171
        %v2173 = vsub.f32 %v2047, %v2127
        %v2174 = vsub.f32 %v2052, %v2130
        %v2175 = vsub.f32 %v2057, %v2133
        %v2176 = vsub.f32 %v2062, %v2136
        %v2177 = vsub.f32 %v2067, %v2139
        %v2178 = vsub.f32 %v2072, %v2142
        %v2179 = vsub.f32 %v2077, %v2145
        %v2180 = vsub.f32 %v2082, %v2148
        %v2181 = vsub.f32 %v2087, %v2151
        %v2182 = vsub.f32 %v2092, %v2154
        %v2183 = vsub.f32 %v2097, %v2157
        %v2184 = vsub.f32 %v2102, %v2160
        %v2185 = vsub.f32 %v2107, %v2163
        %v2186 = vsub.f32 %v2112, %v2166
        %v2187 = vsub.f32 %v2117, %v2169
        %v2188 = vsub.f32 %v2122, %v2172
        %v2189 = vmul.f32 %v2173, 1.442695
        %v2190 = vpow.pop %v2189
        %v2191 = vmul.f32 %v2174, 1.442695
        %v2192 = vpow.pop %v2191
        %v2193 = vmul.f32 %v2175, 1.442695
        %v2194 = vpow.pop %v2193
        %v2195 = vmul.f32 %v2176, 1.442695
        %v2196 = vpow.pop %v2195
        %v2197 = vmul.f32 %v2177, 1.442695
        %v2198 = vpow.pop %v2197
        %v2199 = vmul.f32 %v2178, 1.442695
        %v2200 = vpow.pop %v2199
        %v2201 = vmul.f32 %v2179, 1.442695
        %v2202 = vpow.pop %v2201
        %v2203 = vmul.f32 %v2180, 1.442695
        %v2204 = vpow.pop %v2203
        %v2205 = vmul.f32 %v2181, 1.442695
        %v2206 = vpow.pop %v2205
        %v2207 = vmul.f32 %v2182, 1.442695
        %v2208 = vpow.pop %v2207
        %v2209 = vmul.f32 %v2183, 1.442695
        %v2210 = vpow.pop %v2209
        %v2211 = vmul.f32 %v2184, 1.442695
        %v2212 = vpow.pop %v2211
        %v2213 = vmul.f32 %v2185, 1.442695
        %v2214 = vpow.pop %v2213
        %v2215 = vmul.f32 %v2186, 1.442695
        %v2216 = vpow.pop %v2215
        %v2217 = vmul.f32 %v2187, 1.442695
        %v2218 = vpow.pop %v2217
        %v2219 = vmul.f32 %v2188, 1.442695
        %v2220 = vpow.pop %v2219
        %v2221 = vsel %vm715, %v2190, 0.0
        %2222 = vadd.xlane.f32.xlu0 %v2221
        %v2223 = vpop.xlane.xlu0 %2222
        %v2224 = vsel %vm715, %v2192, 0.0
        %2225 = vadd.xlane.f32.xlu0 %v2224
        %v2226 = vpop.xlane.xlu0 %2225
        %v2227 = vsel %vm715, %v2194, 0.0
        %2228 = vadd.xlane.f32.xlu0 %v2227
        %v2229 = vpop.xlane.xlu0 %2228
        %v2230 = vsel %vm715, %v2196, 0.0
        %2231 = vadd.xlane.f32.xlu0 %v2230
        %v2232 = vpop.xlane.xlu0 %2231
        %v2233 = vsel %vm715, %v2198, 0.0
        %2234 = vadd.xlane.f32.xlu0 %v2233
        %v2235 = vpop.xlane.xlu0 %2234
        %v2236 = vsel %vm715, %v2200, 0.0
        %2237 = vadd.xlane.f32.xlu0 %v2236
        %v2238 = vpop.xlane.xlu0 %2237
        %v2239 = vsel %vm715, %v2202, 0.0
        %2240 = vadd.xlane.f32.xlu0 %v2239
        %v2241 = vpop.xlane.xlu0 %2240
        %v2242 = vsel %vm715, %v2204, 0.0
        %2243 = vadd.xlane.f32.xlu0 %v2242
        %v2244 = vpop.xlane.xlu0 %2243
        %v2245 = vsel %vm715, %v2206, 0.0
        %2246 = vadd.xlane.f32.xlu0 %v2245
        %v2247 = vpop.xlane.xlu0 %2246
        %v2248 = vsel %vm715, %v2208, 0.0
        %2249 = vadd.xlane.f32.xlu0 %v2248
        %v2250 = vpop.xlane.xlu0 %2249
        %v2251 = vsel %vm715, %v2210, 0.0
        %2252 = vadd.xlane.f32.xlu0 %v2251
        %v2253 = vpop.xlane.xlu0 %2252
        %v2254 = vsel %vm715, %v2212, 0.0
        %2255 = vadd.xlane.f32.xlu0 %v2254
        %v2256 = vpop.xlane.xlu0 %2255
        %v2257 = vsel %vm715, %v2214, 0.0
        %2258 = vadd.xlane.f32.xlu0 %v2257
        %v2259 = vpop.xlane.xlu0 %2258
        %v2260 = vsel %vm715, %v2216, 0.0
        %2261 = vadd.xlane.f32.xlu0 %v2260
        %v2262 = vpop.xlane.xlu0 %2261
        %v2263 = vsel %vm715, %v2218, 0.0
        %2264 = vadd.xlane.f32.xlu0 %v2263
        %v2265 = vpop.xlane.xlu0 %2264
        %v2266 = vsel %vm715, %v2220, 0.0
        %2267 = vadd.xlane.f32.xlu0 %v2266
        %v2268 = vpop.xlane.xlu0 %2267
        %v2269 = vrcp.pop %v2223
        %v2270 = vrcp.pop %v2226
        %v2271 = vrcp.pop %v2229
        %v2272 = vrcp.pop %v2232
        %v2273 = vrcp.pop %v2235
        %v2274 = vrcp.pop %v2238
        %v2275 = vrcp.pop %v2241
        %v2276 = vrcp.pop %v2244
        %v2277 = vrcp.pop %v2247
        %v2278 = vrcp.pop %v2250
        %v2279 = vrcp.pop %v2253
        %v2280 = vrcp.pop %v2256
        %v2281 = vrcp.pop %v2259
        %v2282 = vrcp.pop %v2262
        %v2283 = vrcp.pop %v2265
        %v2284 = vrcp.pop %v2268
        %v2285 = vmul.f32 %v2190, %v2269
        %v2286 = vmul.f32 %v2192, %v2270
        %v2287 = vmul.f32 %v2194, %v2271
        %v2288 = vmul.f32 %v2196, %v2272
        %v2289 = vmul.f32 %v2198, %v2273
        %v2290 = vmul.f32 %v2200, %v2274
        %v2291 = vmul.f32 %v2202, %v2275
        %v2292 = vmul.f32 %v2204, %v2276
        %v2293 = vmul.f32 %v2206, %v2277
        %v2294 = vmul.f32 %v2208, %v2278
        %v2295 = vmul.f32 %v2210, %v2279
        %v2296 = vmul.f32 %v2212, %v2280
        %v2297 = vmul.f32 %v2214, %v2281
        %v2298 = vmul.f32 %v2216, %v2282
        %v2299 = vmul.f32 %v2218, %v2283
        %v2300 = vmul.f32 %v2220, %v2284
        %2301 = vrot.lane.b32.xlu0 %v711, 64
        %v2302 = vpop.permute.xlu0 %2301
        %2303 = vrot.lane.b32.xlu0 %v712, 64
        %v2304 = vpop.permute.xlu0 %2303
        %2305 = vrot.lane.b32.xlu0 %v713, 64
        %v2306 = vpop.permute.xlu0 %2305
        %2307 = vrot.lane.b32.xlu0 %v714, 64
        %v2308 = vpop.permute.xlu0 %2307
        %v2314 = vsel %vm715, %v2285, 0
        %v2317 = vsel %vm715, %v2286, 0
        %v2320 = vsel %vm715, %v2287, 0
        %v2323 = vsel %vm715, %v2288, 0
        %v2326 = vsel %vm715, %v2289, 0
        %v2329 = vsel %vm715, %v2290, 0
        %v2332 = vsel %vm715, %v2291, 0
        %v2335 = vsel %vm715, %v2292, 0
        %v2338 = vsel %vm715, %v2293, 0
        %v2341 = vsel %vm715, %v2294, 0
        %v2344 = vsel %vm715, %v2295, 0
        %v2347 = vsel %vm715, %v2296, 0
        %v2350 = vsel %vm715, %v2297, 0
        %v2353 = vsel %vm715, %v2298, 0
        %v2356 = vsel %vm715, %v2299, 0
        %v2359 = vsel %vm715, %v2300, 0
        %2361 = vmatprep.subr.mxu0 0.0
        %2362 = vmatpush1.msra.mxu0 0.0
        %2363 = vmatprep.subr.mxu0 0.0
        %2364 = vmatpush1.msra.mxu0 0.0
        %2365 = vmatprep.subr.mxu0 0.0
        %2366 = vmatpush1.msra.mxu0 0.0
        %2367 = vmatprep.subr.mxu0 0.0
        %2368 = vmatpush1.msra.mxu0 0.0
        %2369 = vmatprep.subr.mxu0 0.0
        %2370 = vmatpush1.msra.mxu0 0.0
        %2371 = vmatprep.subr.mxu0 0.0
        %2372 = vmatpush1.msra.mxu0 0.0
        %2373 = vmatprep.subr.mxu0 0.0
        %2374 = vmatpush1.msra.mxu0 0.0
        %2375 = vmatprep.subr.mxu0 0.0
        %2376 = vmatpush1.msra.mxu0 0.0
        %2377 = vmatprep.subr.mxu0 0.0
        %2378 = vmatpush1.msra.mxu0 0.0
        %2379 = vmatprep.subr.mxu0 0.0
        %2380 = vmatpush1.msra.mxu0 0.0
        %2381 = vmatprep.subr.mxu0 0.0
        %2382 = vmatpush1.msra.mxu0 0.0
        %2383 = vmatprep.subr.mxu0 0.0
        %2384 = vmatpush1.msra.mxu0 0.0
        %2385 = vmatprep.subr.mxu0 0.0
        %2386 = vmatpush1.msra.mxu0 %v2308
        %2387 = vmatprep.subr.mxu0 0.0
        %2388 = vmatpush1.msra.mxu0 %v2306
        %2389 = vmatprep.subr.mxu0 0.0
        %2390 = vmatpush1.msra.mxu0 %v2304
        %2391 = vmatprep.subr.mxu0 0.0
        %2392 = vmatpush1.msra.mxu0 %v2302
        %2393 = vmatprep.subr.mxu0 0.0
        %2394 = vmatpush2.msra.mxu0 0.0
        %2395 = vmatprep.subr.mxu0 0.0
        %2396 = vmatpush2.msra.mxu0 0.0
        %2397 = vmatprep.subr.mxu0 0.0
        %2398 = vmatpush2.msra.mxu0 0.0
        %2399 = vmatprep.subr.mxu0 0.0
        %2400 = vmatpush2.msra.mxu0 0.0
        %2401 = vmatprep.subr.mxu0 0.0
        %2402 = vmatpush2.msra.mxu0 0.0
        %2403 = vmatprep.subr.mxu0 0.0
        %2404 = vmatpush2.msra.mxu0 0.0
        %2405 = vmatprep.subr.mxu0 0.0
        %2406 = vmatpush2.msra.mxu0 0.0
        %2407 = vmatprep.subr.mxu0 0.0
        %2408 = vmatpush2.msra.mxu0 0.0
        %2409 = vmatprep.subr.mxu0 0.0
        %2410 = vmatpush2.msra.mxu0 0.0
        %2411 = vmatprep.subr.mxu0 0.0
        %2412 = vmatpush2.msra.mxu0 0.0
        %2413 = vmatprep.subr.mxu0 0.0
        %2414 = vmatpush2.msra.mxu0 0.0
        %2415 = vmatprep.subr.mxu0 0.0
        %2416 = vmatpush2.msra.mxu0 0.0
        %2417 = vmatprep.subr.mxu0 0.0
        %2418 = vmatpush2.msra.mxu0 0.0
        %2419 = vmatprep.subr.mxu0 0.0
        %2420 = vmatpush2.msra.mxu0 0.0
        %2421 = vmatprep.subr.mxu0 0.0
        %2422 = vmatpush2.msra.mxu0 0.0
        %2423 = vmatprep.subr.mxu0 0.0
        %2424 = vmatpush2.msra.mxu0 0.0
        %2425 = vmatprep.mubr.f32.mxu0 0.0
        %2426 = vmatmul.mubr.f32.gmra.mxu0 %v2314
        %v2427 = vpop.f32.mrf.mxu0
        %v2428 = vadd.f32 0.0, %v2427
        %v2429 = vpop.f32.mrf.mxu0
        %2430 = vmatprep.mubr.f32.mxu0 0.0
        %2431 = vmatmul.mubr.f32.gmra.mxu0 %v2317
        %v2432 = vpop.f32.mrf.mxu0
        %v2433 = vadd.f32 0.0, %v2432
        %v2434 = vpop.f32.mrf.mxu0
        %2435 = vmatprep.mubr.f32.mxu0 0.0
        %2436 = vmatmul.mubr.f32.gmra.mxu0 %v2320
        %v2437 = vpop.f32.mrf.mxu0
        %v2438 = vadd.f32 0.0, %v2437
        %v2439 = vpop.f32.mrf.mxu0
        %2440 = vmatprep.mubr.f32.mxu0 0.0
        %2441 = vmatmul.mubr.f32.gmra.mxu0 %v2323
        %v2442 = vpop.f32.mrf.mxu0
        %v2443 = vadd.f32 0.0, %v2442
        %v2444 = vpop.f32.mrf.mxu0
        %2445 = vmatprep.mubr.f32.mxu0 0.0
        %2446 = vmatmul.mubr.f32.gmra.mxu0 %v2326
        %v2447 = vpop.f32.mrf.mxu0
        %v2448 = vadd.f32 0.0, %v2447
        %v2449 = vpop.f32.mrf.mxu0
        %2450 = vmatprep.mubr.f32.mxu0 0.0
        %2451 = vmatmul.mubr.f32.gmra.mxu0 %v2329
        %v2452 = vpop.f32.mrf.mxu0
        %v2453 = vadd.f32 0.0, %v2452
        %v2454 = vpop.f32.mrf.mxu0
        %2455 = vmatprep.mubr.f32.mxu0 0.0
        %2456 = vmatmul.mubr.f32.gmra.mxu0 %v2332
        %v2457 = vpop.f32.mrf.mxu0
        %v2458 = vadd.f32 0.0, %v2457
        %v2459 = vpop.f32.mrf.mxu0
        %2460 = vmatprep.mubr.f32.mxu0 0.0
        %2461 = vmatmul.mubr.f32.gmra.mxu0 %v2335
        %v2462 = vpop.f32.mrf.mxu0
        %v2463 = vadd.f32 0.0, %v2462
        %v2464 = vpop.f32.mrf.mxu0
        %2465 = vmatprep.mubr.f32.mxu0 0.0
        %2466 = vmatmul.mubr.f32.gmra.mxu0 %v2338
        %v2467 = vpop.f32.mrf.mxu0
        %v2468 = vadd.f32 0.0, %v2467
        %v2469 = vpop.f32.mrf.mxu0
        %2470 = vmatprep.mubr.f32.mxu0 0.0
        %2471 = vmatmul.mubr.f32.gmra.mxu0 %v2341
        %v2472 = vpop.f32.mrf.mxu0
        %v2473 = vadd.f32 0.0, %v2472
        %v2474 = vpop.f32.mrf.mxu0
        %2475 = vmatprep.mubr.f32.mxu0 0.0
        %2476 = vmatmul.mubr.f32.gmra.mxu0 %v2344
        %v2477 = vpop.f32.mrf.mxu0
        %v2478 = vadd.f32 0.0, %v2477
        %v2479 = vpop.f32.mrf.mxu0
        %2480 = vmatprep.mubr.f32.mxu0 0.0
        %2481 = vmatmul.mubr.f32.gmra.mxu0 %v2347
        %v2482 = vpop.f32.mrf.mxu0
        %v2483 = vadd.f32 0.0, %v2482
        %v2484 = vpop.f32.mrf.mxu0
        %2485 = vmatprep.mubr.f32.mxu0 0.0
        %2486 = vmatmul.mubr.f32.gmra.mxu0 %v2350
        %v2487 = vpop.f32.mrf.mxu0
        %v2488 = vadd.f32 0.0, %v2487
        %v2489 = vpop.f32.mrf.mxu0
        %2490 = vmatprep.mubr.f32.mxu0 0.0
        %2491 = vmatmul.mubr.f32.gmra.mxu0 %v2353
        %v2492 = vpop.f32.mrf.mxu0
        %v2493 = vadd.f32 0.0, %v2492
        %v2494 = vpop.f32.mrf.mxu0
        %2495 = vmatprep.mubr.f32.mxu0 0.0
        %2496 = vmatmul.mubr.f32.gmra.mxu0 %v2356
        %v2497 = vpop.f32.mrf.mxu0
        %v2498 = vadd.f32 0.0, %v2497
        %v2499 = vpop.f32.mrf.mxu0
        %2500 = vmatprep.mubr.f32.mxu0 0.0
        %2501 = vmatmul.mubr.f32.gmra.mxu0 %v2359
        %v2502 = vpop.f32.mrf.mxu0
        %v2503 = vadd.f32 0.0, %v2502
        %v2504 = vpop.f32.mrf.mxu0
        %2505 = vdwg.mxu0
        %2506 = vrot.lane.b32.xlu0 %v691, 32
        %v2507 = vpop.permute.xlu0 %2506
        %2508 = vrot.lane.b32.xlu0 %v692, 32
        %v2509 = vpop.permute.xlu0 %2508
        %2510 = vrot.lane.b32.xlu0 %v693, 32
        %v2511 = vpop.permute.xlu0 %2510
        %2512 = vrot.lane.b32.xlu0 %v694, 32
        %v2513 = vpop.permute.xlu0 %2512
        %2514 = vrot.lane.b32.xlu0 %v695, 32
        %v2515 = vpop.permute.xlu0 %2514
        %2516 = vrot.lane.b32.xlu0 %v696, 32
        %v2517 = vpop.permute.xlu0 %2516
        %2518 = vrot.lane.b32.xlu0 %v697, 32
        %v2519 = vpop.permute.xlu0 %2518
        %2520 = vrot.lane.b32.xlu0 %v698, 32
        %v2521 = vpop.permute.xlu0 %2520
        %2522 = vrot.lane.b32.xlu0 %v699, 32
        %v2523 = vpop.permute.xlu0 %2522
        %2524 = vrot.lane.b32.xlu0 %v700, 32
        %v2525 = vpop.permute.xlu0 %2524
        %2526 = vrot.lane.b32.xlu0 %v701, 32
        %v2527 = vpop.permute.xlu0 %2526
        %2528 = vrot.lane.b32.xlu0 %v702, 32
        %v2529 = vpop.permute.xlu0 %2528
        %2530 = vrot.lane.b32.xlu0 %v703, 32
        %v2531 = vpop.permute.xlu0 %2530
        %2532 = vrot.lane.b32.xlu0 %v704, 32
        %v2533 = vpop.permute.xlu0 %2532
        %2534 = vrot.lane.b32.xlu0 %v705, 32
        %v2535 = vpop.permute.xlu0 %2534
        %2536 = vrot.lane.b32.xlu0 %v706, 32
        %v2537 = vpop.permute.xlu0 %2536
        %2538 = vrot.lane.b32.xlu0 %v707, 32
        %v2539 = vpop.permute.xlu0 %2538
        %2540 = vrot.lane.b32.xlu0 %v708, 32
        %v2541 = vpop.permute.xlu0 %2540
        %2542 = vrot.lane.b32.xlu0 %v709, 32
        %v2543 = vpop.permute.xlu0 %2542
        %2544 = vrot.lane.b32.xlu0 %v710, 32
        %v2545 = vpop.permute.xlu0 %2544
        %v2546 = vsel %vm715, %v2507, 0
        %v2548 = vsel %vm715, %v2509, 0
        %v2550 = vsel %vm715, %v2511, 0
        %v2552 = vsel %vm715, %v2513, 0
        %v2554 = vsel %vm715, %v2515, 0
        %v2556 = vsel %vm715, %v2517, 0
        %v2558 = vsel %vm715, %v2519, 0
        %v2560 = vsel %vm715, %v2521, 0
        %v2562 = vsel %vm715, %v2523, 0
        %v2564 = vsel %vm715, %v2525, 0
        %v2566 = vsel %vm715, %v2527, 0
        %v2568 = vsel %vm715, %v2529, 0
        %v2570 = vsel %vm715, %v2531, 0
        %v2572 = vsel %vm715, %v2533, 0
        %v2574 = vsel %vm715, %v2535, 0
        %v2576 = vsel %vm715, %v2537, 0
        %v2578 = vsel %vm715, %v2539, 0
        %v2580 = vsel %vm715, %v2541, 0
        %v2582 = vsel %vm715, %v2543, 0
        %v2584 = vsel %vm715, %v2545, 0
        %2586 = vmatprep.subr.mxu0 0.0
        %2587 = vmatpush1.xpose.msra.mxu0 0.0
        %2588 = vmatprep.subr.mxu0 0.0
        %2589 = vmatpush1.xpose.msra.mxu0 0.0
        %2590 = vmatprep.subr.mxu0 0.0
        %2591 = vmatpush1.xpose.msra.mxu0 0.0
        %2592 = vmatprep.subr.mxu0 0.0
        %2593 = vmatpush1.xpose.msra.mxu0 0.0
        %2594 = vmatprep.subr.mxu0 0.0
        %2595 = vmatpush1.xpose.msra.mxu0 0.0
        %2596 = vmatprep.subr.mxu0 0.0
        %2597 = vmatpush1.xpose.msra.mxu0 0.0
        %2598 = vmatprep.subr.mxu0 0.0
        %2599 = vmatpush1.xpose.msra.mxu0 0.0
        %2600 = vmatprep.subr.mxu0 0.0
        %2601 = vmatpush1.xpose.msra.mxu0 0.0
        %2602 = vmatprep.subr.mxu0 0.0
        %2603 = vmatpush1.xpose.msra.mxu0 0.0
        %2604 = vmatprep.subr.mxu0 0.0
        %2605 = vmatpush1.xpose.msra.mxu0 0.0
        %2606 = vmatprep.subr.mxu0 0.0
        %2607 = vmatpush1.xpose.msra.mxu0 0.0
        %2608 = vmatprep.subr.mxu0 0.0
        %2609 = vmatpush1.xpose.msra.mxu0 0.0
        %2610 = vmatprep.subr.mxu0 0.0
        %2611 = vmatpush1.xpose.msra.mxu0 %v2584
        %2612 = vmatprep.subr.mxu0 0.0
        %2613 = vmatpush1.xpose.msra.mxu0 %v2582
        %2614 = vmatprep.subr.mxu0 0.0
        %2615 = vmatpush1.xpose.msra.mxu0 %v2580
        %2616 = vmatprep.subr.mxu0 0.0
        %2617 = vmatpush1.xpose.msra.mxu0 %v2578
        %2618 = vmatprep.subr.mxu0 0.0
        %2619 = vmatpush2.xpose.msra.mxu0 0.0
        %2620 = vmatprep.subr.mxu0 0.0
        %2621 = vmatpush2.xpose.msra.mxu0 0.0
        %2622 = vmatprep.subr.mxu0 0.0
        %2623 = vmatpush2.xpose.msra.mxu0 0.0
        %2624 = vmatprep.subr.mxu0 0.0
        %2625 = vmatpush2.xpose.msra.mxu0 0.0
        %2626 = vmatprep.subr.mxu0 0.0
        %2627 = vmatpush2.xpose.msra.mxu0 0.0
        %2628 = vmatprep.subr.mxu0 0.0
        %2629 = vmatpush2.xpose.msra.mxu0 0.0
        %2630 = vmatprep.subr.mxu0 0.0
        %2631 = vmatpush2.xpose.msra.mxu0 0.0
        %2632 = vmatprep.subr.mxu0 0.0
        %2633 = vmatpush2.xpose.msra.mxu0 0.0
        %2634 = vmatprep.subr.mxu0 0.0
        %2635 = vmatpush2.xpose.msra.mxu0 0.0
        %2636 = vmatprep.subr.mxu0 0.0
        %2637 = vmatpush2.xpose.msra.mxu0 0.0
        %2638 = vmatprep.subr.mxu0 0.0
        %2639 = vmatpush2.xpose.msra.mxu0 0.0
        %2640 = vmatprep.subr.mxu0 0.0
        %2641 = vmatpush2.xpose.msra.mxu0 0.0
        %2642 = vmatprep.subr.mxu0 0.0
        %2643 = vmatpush2.xpose.msra.mxu0 0.0
        %2644 = vmatprep.subr.mxu0 0.0
        %2645 = vmatpush2.xpose.msra.mxu0 0.0
        %2646 = vmatprep.subr.mxu0 0.0
        %2647 = vmatpush2.xpose.msra.mxu0 0.0
        %2648 = vmatprep.subr.mxu0 0.0
        %2649 = vmatpush2.xpose.msra.mxu0 0.0
        %2650 = vmatprep.mubr.f32.mxu0 0.0
        %2651 = vmatmul.mubr.f32.gmra.mxu0 %v2546
        %v2652 = vpop.f32.mrf.mxu0
        %v2653 = vadd.f32 0.0, %v2652
        %v2654 = vpop.f32.mrf.mxu0
        %2655 = vmatprep.mubr.f32.mxu0 0.0
        %2656 = vmatmul.mubr.f32.gmra.mxu0 %v2548
        %v2657 = vpop.f32.mrf.mxu0
        %v2658 = vadd.f32 0.0, %v2657
        %v2659 = vpop.f32.mrf.mxu0
        %2660 = vmatprep.mubr.f32.mxu0 0.0
        %2661 = vmatmul.mubr.f32.gmra.mxu0 %v2550
        %v2662 = vpop.f32.mrf.mxu0
        %v2663 = vadd.f32 0.0, %v2662
        %v2664 = vpop.f32.mrf.mxu0
        %2665 = vmatprep.mubr.f32.mxu0 0.0
        %2666 = vmatmul.mubr.f32.gmra.mxu0 %v2552
        %v2667 = vpop.f32.mrf.mxu0
        %v2668 = vadd.f32 0.0, %v2667
        %v2669 = vpop.f32.mrf.mxu0
        %2670 = vmatprep.mubr.f32.mxu0 0.0
        %2671 = vmatmul.mubr.f32.gmra.mxu0 %v2554
        %v2672 = vpop.f32.mrf.mxu0
        %v2673 = vadd.f32 0.0, %v2672
        %v2674 = vpop.f32.mrf.mxu0
        %2675 = vmatprep.mubr.f32.mxu0 0.0
        %2676 = vmatmul.mubr.f32.gmra.mxu0 %v2556
        %v2677 = vpop.f32.mrf.mxu0
        %v2678 = vadd.f32 0.0, %v2677
        %v2679 = vpop.f32.mrf.mxu0
        %2680 = vmatprep.mubr.f32.mxu0 0.0
        %2681 = vmatmul.mubr.f32.gmra.mxu0 %v2558
        %v2682 = vpop.f32.mrf.mxu0
        %v2683 = vadd.f32 0.0, %v2682
        %v2684 = vpop.f32.mrf.mxu0
        %2685 = vmatprep.mubr.f32.mxu0 0.0
        %2686 = vmatmul.mubr.f32.gmra.mxu0 %v2560
        %v2687 = vpop.f32.mrf.mxu0
        %v2688 = vadd.f32 0.0, %v2687
        %v2689 = vpop.f32.mrf.mxu0
        %2690 = vmatprep.mubr.f32.mxu0 0.0
        %2691 = vmatmul.mubr.f32.gmra.mxu0 %v2562
        %v2692 = vpop.f32.mrf.mxu0
        %v2693 = vadd.f32 0.0, %v2692
        %v2694 = vpop.f32.mrf.mxu0
        %2695 = vmatprep.mubr.f32.mxu0 0.0
        %2696 = vmatmul.mubr.f32.gmra.mxu0 %v2564
        %v2697 = vpop.f32.mrf.mxu0
        %v2698 = vadd.f32 0.0, %v2697
        %v2699 = vpop.f32.mrf.mxu0
        %2700 = vmatprep.mubr.f32.mxu0 0.0
        %2701 = vmatmul.mubr.f32.gmra.mxu0 %v2566
        %v2702 = vpop.f32.mrf.mxu0
        %v2703 = vadd.f32 0.0, %v2702
        %v2704 = vpop.f32.mrf.mxu0
        %2705 = vmatprep.mubr.f32.mxu0 0.0
        %2706 = vmatmul.mubr.f32.gmra.mxu0 %v2568
        %v2707 = vpop.f32.mrf.mxu0
        %v2708 = vadd.f32 0.0, %v2707
        %v2709 = vpop.f32.mrf.mxu0
        %2710 = vmatprep.mubr.f32.mxu0 0.0
        %2711 = vmatmul.mubr.f32.gmra.mxu0 %v2570
        %v2712 = vpop.f32.mrf.mxu0
        %v2713 = vadd.f32 0.0, %v2712
        %v2714 = vpop.f32.mrf.mxu0
        %2715 = vmatprep.mubr.f32.mxu0 0.0
        %2716 = vmatmul.mubr.f32.gmra.mxu0 %v2572
        %v2717 = vpop.f32.mrf.mxu0
        %v2718 = vadd.f32 0.0, %v2717
        %v2719 = vpop.f32.mrf.mxu0
        %2720 = vmatprep.mubr.f32.mxu0 0.0
        %2721 = vmatmul.mubr.f32.gmra.mxu0 %v2574
        %v2722 = vpop.f32.mrf.mxu0
        %v2723 = vadd.f32 0.0, %v2722
        %v2724 = vpop.f32.mrf.mxu0
        %2725 = vmatprep.mubr.f32.mxu0 0.0
        %2726 = vmatmul.mubr.f32.gmra.mxu0 %v2576
        %v2727 = vpop.f32.mrf.mxu0
        %v2728 = vadd.f32 0.0, %v2727
        %v2729 = vpop.f32.mrf.mxu0
        %2730 = vdwg.mxu0
        %v2731 = vsel %vm715, %v2653, -inf
        %2732 = vmax.xlane.f32.xlu0 %v2731
        %v2733 = vpop.xlane.xlu0 %2732
        %v2734 = vsel %vm715, %v2658, -inf
        %2735 = vmax.xlane.f32.xlu0 %v2734
        %v2736 = vpop.xlane.xlu0 %2735
        %v2737 = vsel %vm715, %v2663, -inf
        %2738 = vmax.xlane.f32.xlu0 %v2737
        %v2739 = vpop.xlane.xlu0 %2738
        %v2740 = vsel %vm715, %v2668, -inf
        %2741 = vmax.xlane.f32.xlu0 %v2740
        %v2742 = vpop.xlane.xlu0 %2741
        %v2743 = vsel %vm715, %v2673, -inf
        %2744 = vmax.xlane.f32.xlu0 %v2743
        %v2745 = vpop.xlane.xlu0 %2744
        %v2746 = vsel %vm715, %v2678, -inf
        %2747 = vmax.xlane.f32.xlu0 %v2746
        %v2748 = vpop.xlane.xlu0 %2747
        %v2749 = vsel %vm715, %v2683, -inf
        %2750 = vmax.xlane.f32.xlu0 %v2749
        %v2751 = vpop.xlane.xlu0 %2750
        %v2752 = vsel %vm715, %v2688, -inf
        %2753 = vmax.xlane.f32.xlu0 %v2752
        %v2754 = vpop.xlane.xlu0 %2753
        %v2755 = vsel %vm715, %v2693, -inf
        %2756 = vmax.xlane.f32.xlu0 %v2755
        %v2757 = vpop.xlane.xlu0 %2756
        %v2758 = vsel %vm715, %v2698, -inf
        %2759 = vmax.xlane.f32.xlu0 %v2758
        %v2760 = vpop.xlane.xlu0 %2759
        %v2761 = vsel %vm715, %v2703, -inf
        %2762 = vmax.xlane.f32.xlu0 %v2761
        %v2763 = vpop.xlane.xlu0 %2762
        %v2764 = vsel %vm715, %v2708, -inf
        %2765 = vmax.xlane.f32.xlu0 %v2764
        %v2766 = vpop.xlane.xlu0 %2765
        %v2767 = vsel %vm715, %v2713, -inf
        %2768 = vmax.xlane.f32.xlu0 %v2767
        %v2769 = vpop.xlane.xlu0 %2768
        %v2770 = vsel %vm715, %v2718, -inf
        %2771 = vmax.xlane.f32.xlu0 %v2770
        %v2772 = vpop.xlane.xlu0 %2771
        %v2773 = vsel %vm715, %v2723, -inf
        %2774 = vmax.xlane.f32.xlu0 %v2773
        %v2775 = vpop.xlane.xlu0 %2774
        %v2776 = vsel %vm715, %v2728, -inf
        %2777 = vmax.xlane.f32.xlu0 %v2776
        %v2778 = vpop.xlane.xlu0 %2777
        %v2779 = vsub.f32 %v2653, %v2733
        %v2780 = vsub.f32 %v2658, %v2736
        %v2781 = vsub.f32 %v2663, %v2739
        %v2782 = vsub.f32 %v2668, %v2742
        %v2783 = vsub.f32 %v2673, %v2745
        %v2784 = vsub.f32 %v2678, %v2748
        %v2785 = vsub.f32 %v2683, %v2751
        %v2786 = vsub.f32 %v2688, %v2754
        %v2787 = vsub.f32 %v2693, %v2757
        %v2788 = vsub.f32 %v2698, %v2760
        %v2789 = vsub.f32 %v2703, %v2763
        %v2790 = vsub.f32 %v2708, %v2766
        %v2791 = vsub.f32 %v2713, %v2769
        %v2792 = vsub.f32 %v2718, %v2772
        %v2793 = vsub.f32 %v2723, %v2775
        %v2794 = vsub.f32 %v2728, %v2778
        %v2795 = vmul.f32 %v2779, 1.442695
        %v2796 = vpow.pop %v2795
        %v2797 = vmul.f32 %v2780, 1.442695
        %v2798 = vpow.pop %v2797
        %v2799 = vmul.f32 %v2781, 1.442695
        %v2800 = vpow.pop %v2799
        %v2801 = vmul.f32 %v2782, 1.442695
        %v2802 = vpow.pop %v2801
        %v2803 = vmul.f32 %v2783, 1.442695
        %v2804 = vpow.pop %v2803
        %v2805 = vmul.f32 %v2784, 1.442695
        %v2806 = vpow.pop %v2805
        %v2807 = vmul.f32 %v2785, 1.442695
        %v2808 = vpow.pop %v2807
        %v2809 = vmul.f32 %v2786, 1.442695
        %v2810 = vpow.pop %v2809
        %v2811 = vmul.f32 %v2787, 1.442695
        %v2812 = vpow.pop %v2811
        %v2813 = vmul.f32 %v2788, 1.442695
        %v2814 = vpow.pop %v2813
        %v2815 = vmul.f32 %v2789, 1.442695
        %v2816 = vpow.pop %v2815
        %v2817 = vmul.f32 %v2790, 1.442695
        %v2818 = vpow.pop %v2817
        %v2819 = vmul.f32 %v2791, 1.442695
        %v2820 = vpow.pop %v2819
        %v2821 = vmul.f32 %v2792, 1.442695
        %v2822 = vpow.pop %v2821
        %v2823 = vmul.f32 %v2793, 1.442695
        %v2824 = vpow.pop %v2823
        %v2825 = vmul.f32 %v2794, 1.442695
        %v2826 = vpow.pop %v2825
        %v2827 = vsel %vm715, %v2796, 0.0
        %2828 = vadd.xlane.f32.xlu0 %v2827
        %v2829 = vpop.xlane.xlu0 %2828
        %v2830 = vsel %vm715, %v2798, 0.0
        %2831 = vadd.xlane.f32.xlu0 %v2830
        %v2832 = vpop.xlane.xlu0 %2831
        %v2833 = vsel %vm715, %v2800, 0.0
        %2834 = vadd.xlane.f32.xlu0 %v2833
        %v2835 = vpop.xlane.xlu0 %2834
        %v2836 = vsel %vm715, %v2802, 0.0
        %2837 = vadd.xlane.f32.xlu0 %v2836
        %v2838 = vpop.xlane.xlu0 %2837
        %v2839 = vsel %vm715, %v2804, 0.0
        %2840 = vadd.xlane.f32.xlu0 %v2839
        %v2841 = vpop.xlane.xlu0 %2840
        %v2842 = vsel %vm715, %v2806, 0.0
        %2843 = vadd.xlane.f32.xlu0 %v2842
        %v2844 = vpop.xlane.xlu0 %2843
        %v2845 = vsel %vm715, %v2808, 0.0
        %2846 = vadd.xlane.f32.xlu0 %v2845
        %v2847 = vpop.xlane.xlu0 %2846
        %v2848 = vsel %vm715, %v2810, 0.0
        %2849 = vadd.xlane.f32.xlu0 %v2848
        %v2850 = vpop.xlane.xlu0 %2849
        %v2851 = vsel %vm715, %v2812, 0.0
        %2852 = vadd.xlane.f32.xlu0 %v2851
        %v2853 = vpop.xlane.xlu0 %2852
        %v2854 = vsel %vm715, %v2814, 0.0
        %2855 = vadd.xlane.f32.xlu0 %v2854
        %v2856 = vpop.xlane.xlu0 %2855
        %v2857 = vsel %vm715, %v2816, 0.0
        %2858 = vadd.xlane.f32.xlu0 %v2857
        %v2859 = vpop.xlane.xlu0 %2858
        %v2860 = vsel %vm715, %v2818, 0.0
        %2861 = vadd.xlane.f32.xlu0 %v2860
        %v2862 = vpop.xlane.xlu0 %2861
        %v2863 = vsel %vm715, %v2820, 0.0
        %2864 = vadd.xlane.f32.xlu0 %v2863
        %v2865 = vpop.xlane.xlu0 %2864
        %v2866 = vsel %vm715, %v2822, 0.0
        %2867 = vadd.xlane.f32.xlu0 %v2866
        %v2868 = vpop.xlane.xlu0 %2867
        %v2869 = vsel %vm715, %v2824, 0.0
        %2870 = vadd.xlane.f32.xlu0 %v2869
        %v2871 = vpop.xlane.xlu0 %2870
        %v2872 = vsel %vm715, %v2826, 0.0
        %2873 = vadd.xlane.f32.xlu0 %v2872
        %v2874 = vpop.xlane.xlu0 %2873
        %v2875 = vrcp.pop %v2829
        %v2876 = vrcp.pop %v2832
        %v2877 = vrcp.pop %v2835
        %v2878 = vrcp.pop %v2838
        %v2879 = vrcp.pop %v2841
        %v2880 = vrcp.pop %v2844
        %v2881 = vrcp.pop %v2847
        %v2882 = vrcp.pop %v2850
        %v2883 = vrcp.pop %v2853
        %v2884 = vrcp.pop %v2856
        %v2885 = vrcp.pop %v2859
        %v2886 = vrcp.pop %v2862
        %v2887 = vrcp.pop %v2865
        %v2888 = vrcp.pop %v2868
        %v2889 = vrcp.pop %v2871
        %v2890 = vrcp.pop %v2874
        %v2891 = vmul.f32 %v2796, %v2875
        %v2892 = vmul.f32 %v2798, %v2876
        %v2893 = vmul.f32 %v2800, %v2877
        %v2894 = vmul.f32 %v2802, %v2878
        %v2895 = vmul.f32 %v2804, %v2879
        %v2896 = vmul.f32 %v2806, %v2880
        %v2897 = vmul.f32 %v2808, %v2881
        %v2898 = vmul.f32 %v2810, %v2882
        %v2899 = vmul.f32 %v2812, %v2883
        %v2900 = vmul.f32 %v2814, %v2884
        %v2901 = vmul.f32 %v2816, %v2885
        %v2902 = vmul.f32 %v2818, %v2886
        %v2903 = vmul.f32 %v2820, %v2887
        %v2904 = vmul.f32 %v2822, %v2888
        %v2905 = vmul.f32 %v2824, %v2889
        %v2906 = vmul.f32 %v2826, %v2890
        %2907 = vrot.lane.b32.xlu0 %v711, 32
        %v2908 = vpop.permute.xlu0 %2907
        %2909 = vrot.lane.b32.xlu0 %v712, 32
        %v2910 = vpop.permute.xlu0 %2909
        %2911 = vrot.lane.b32.xlu0 %v713, 32
        %v2912 = vpop.permute.xlu0 %2911
        %2913 = vrot.lane.b32.xlu0 %v714, 32
        %v2914 = vpop.permute.xlu0 %2913
        %v2920 = vsel %vm715, %v2891, 0
        %v2923 = vsel %vm715, %v2892, 0
        %v2926 = vsel %vm715, %v2893, 0
        %v2929 = vsel %vm715, %v2894, 0
        %v2932 = vsel %vm715, %v2895, 0
        %v2935 = vsel %vm715, %v2896, 0
        %v2938 = vsel %vm715, %v2897, 0
        %v2941 = vsel %vm715, %v2898, 0
        %v2944 = vsel %vm715, %v2899, 0
        %v2947 = vsel %vm715, %v2900, 0
        %v2950 = vsel %vm715, %v2901, 0
        %v2953 = vsel %vm715, %v2902, 0
        %v2956 = vsel %vm715, %v2903, 0
        %v2959 = vsel %vm715, %v2904, 0
        %v2962 = vsel %vm715, %v2905, 0
        %v2965 = vsel %vm715, %v2906, 0
        %2967 = vmatprep.subr.mxu0 0.0
        %2968 = vmatpush1.msra.mxu0 0.0
        %2969 = vmatprep.subr.mxu0 0.0
        %2970 = vmatpush1.msra.mxu0 0.0
        %2971 = vmatprep.subr.mxu0 0.0
        %2972 = vmatpush1.msra.mxu0 0.0
        %2973 = vmatprep.subr.mxu0 0.0
        %2974 = vmatpush1.msra.mxu0 0.0
        %2975 = vmatprep.subr.mxu0 0.0
        %2976 = vmatpush1.msra.mxu0 0.0
        %2977 = vmatprep.subr.mxu0 0.0
        %2978 = vmatpush1.msra.mxu0 0.0
        %2979 = vmatprep.subr.mxu0 0.0
        %2980 = vmatpush1.msra.mxu0 0.0
        %2981 = vmatprep.subr.mxu0 0.0
        %2982 = vmatpush1.msra.mxu0 0.0
        %2983 = vmatprep.subr.mxu0 0.0
        %2984 = vmatpush1.msra.mxu0 0.0
        %2985 = vmatprep.subr.mxu0 0.0
        %2986 = vmatpush1.msra.mxu0 0.0
        %2987 = vmatprep.subr.mxu0 0.0
        %2988 = vmatpush1.msra.mxu0 0.0
        %2989 = vmatprep.subr.mxu0 0.0
        %2990 = vmatpush1.msra.mxu0 0.0
        %2991 = vmatprep.subr.mxu0 0.0
        %2992 = vmatpush1.msra.mxu0 %v2914
        %2993 = vmatprep.subr.mxu0 0.0
        %2994 = vmatpush1.msra.mxu0 %v2912
        %2995 = vmatprep.subr.mxu0 0.0
        %2996 = vmatpush1.msra.mxu0 %v2910
        %2997 = vmatprep.subr.mxu0 0.0
        %2998 = vmatpush1.msra.mxu0 %v2908
        %2999 = vmatprep.subr.mxu0 0.0
        %3000 = vmatpush2.msra.mxu0 0.0
        %3001 = vmatprep.subr.mxu0 0.0
        %3002 = vmatpush2.msra.mxu0 0.0
        %3003 = vmatprep.subr.mxu0 0.0
        %3004 = vmatpush2.msra.mxu0 0.0
        %3005 = vmatprep.subr.mxu0 0.0
        %3006 = vmatpush2.msra.mxu0 0.0
        %3007 = vmatprep.subr.mxu0 0.0
        %3008 = vmatpush2.msra.mxu0 0.0
        %3009 = vmatprep.subr.mxu0 0.0
        %3010 = vmatpush2.msra.mxu0 0.0
        %3011 = vmatprep.subr.mxu0 0.0
        %3012 = vmatpush2.msra.mxu0 0.0
        %3013 = vmatprep.subr.mxu0 0.0
        %3014 = vmatpush2.msra.mxu0 0.0
        %3015 = vmatprep.subr.mxu0 0.0
        %3016 = vmatpush2.msra.mxu0 0.0
        %3017 = vmatprep.subr.mxu0 0.0
        %3018 = vmatpush2.msra.mxu0 0.0
        %3019 = vmatprep.subr.mxu0 0.0
        %3020 = vmatpush2.msra.mxu0 0.0
        %3021 = vmatprep.subr.mxu0 0.0
        %3022 = vmatpush2.msra.mxu0 0.0
        %3023 = vmatprep.subr.mxu0 0.0
        %3024 = vmatpush2.msra.mxu0 0.0
        %3025 = vmatprep.subr.mxu0 0.0
        %3026 = vmatpush2.msra.mxu0 0.0
        %3027 = vmatprep.subr.mxu0 0.0
        %3028 = vmatpush2.msra.mxu0 0.0
        %3029 = vmatprep.subr.mxu0 0.0
        %3030 = vmatpush2.msra.mxu0 0.0
        %3031 = vmatprep.mubr.f32.mxu0 0.0
        %3032 = vmatmul.mubr.f32.gmra.mxu0 %v2920
        %v3033 = vpop.f32.mrf.mxu0
        %v3034 = vadd.f32 0.0, %v3033
        %v3035 = vpop.f32.mrf.mxu0
        %3036 = vmatprep.mubr.f32.mxu0 0.0
        %3037 = vmatmul.mubr.f32.gmra.mxu0 %v2923
        %v3038 = vpop.f32.mrf.mxu0
        %v3039 = vadd.f32 0.0, %v3038
        %v3040 = vpop.f32.mrf.mxu0
        %3041 = vmatprep.mubr.f32.mxu0 0.0
        %3042 = vmatmul.mubr.f32.gmra.mxu0 %v2926
        %v3043 = vpop.f32.mrf.mxu0
        %v3044 = vadd.f32 0.0, %v3043
        %v3045 = vpop.f32.mrf.mxu0
        %3046 = vmatprep.mubr.f32.mxu0 0.0
        %3047 = vmatmul.mubr.f32.gmra.mxu0 %v2929
        %v3048 = vpop.f32.mrf.mxu0
        %v3049 = vadd.f32 0.0, %v3048
        %v3050 = vpop.f32.mrf.mxu0
        %3051 = vmatprep.mubr.f32.mxu0 0.0
        %3052 = vmatmul.mubr.f32.gmra.mxu0 %v2932
        %v3053 = vpop.f32.mrf.mxu0
        %v3054 = vadd.f32 0.0, %v3053
        %v3055 = vpop.f32.mrf.mxu0
        %3056 = vmatprep.mubr.f32.mxu0 0.0
        %3057 = vmatmul.mubr.f32.gmra.mxu0 %v2935
        %v3058 = vpop.f32.mrf.mxu0
        %v3059 = vadd.f32 0.0, %v3058
        %v3060 = vpop.f32.mrf.mxu0
        %3061 = vmatprep.mubr.f32.mxu0 0.0
        %3062 = vmatmul.mubr.f32.gmra.mxu0 %v2938
        %v3063 = vpop.f32.mrf.mxu0
        %v3064 = vadd.f32 0.0, %v3063
        %v3065 = vpop.f32.mrf.mxu0
        %3066 = vmatprep.mubr.f32.mxu0 0.0
        %3067 = vmatmul.mubr.f32.gmra.mxu0 %v2941
        %v3068 = vpop.f32.mrf.mxu0
        %v3069 = vadd.f32 0.0, %v3068
        %v3070 = vpop.f32.mrf.mxu0
        %3071 = vmatprep.mubr.f32.mxu0 0.0
        %3072 = vmatmul.mubr.f32.gmra.mxu0 %v2944
        %v3073 = vpop.f32.mrf.mxu0
        %v3074 = vadd.f32 0.0, %v3073
        %v3075 = vpop.f32.mrf.mxu0
        %3076 = vmatprep.mubr.f32.mxu0 0.0
        %3077 = vmatmul.mubr.f32.gmra.mxu0 %v2947
        %v3078 = vpop.f32.mrf.mxu0
        %v3079 = vadd.f32 0.0, %v3078
        %v3080 = vpop.f32.mrf.mxu0
        %3081 = vmatprep.mubr.f32.mxu0 0.0
        %3082 = vmatmul.mubr.f32.gmra.mxu0 %v2950
        %v3083 = vpop.f32.mrf.mxu0
        %v3084 = vadd.f32 0.0, %v3083
        %v3085 = vpop.f32.mrf.mxu0
        %3086 = vmatprep.mubr.f32.mxu0 0.0
        %3087 = vmatmul.mubr.f32.gmra.mxu0 %v2953
        %v3088 = vpop.f32.mrf.mxu0
        %v3089 = vadd.f32 0.0, %v3088
        %v3090 = vpop.f32.mrf.mxu0
        %3091 = vmatprep.mubr.f32.mxu0 0.0
        %3092 = vmatmul.mubr.f32.gmra.mxu0 %v2956
        %v3093 = vpop.f32.mrf.mxu0
        %v3094 = vadd.f32 0.0, %v3093
        %v3095 = vpop.f32.mrf.mxu0
        %3096 = vmatprep.mubr.f32.mxu0 0.0
        %3097 = vmatmul.mubr.f32.gmra.mxu0 %v2959
        %v3098 = vpop.f32.mrf.mxu0
        %v3099 = vadd.f32 0.0, %v3098
        %v3100 = vpop.f32.mrf.mxu0
        %3101 = vmatprep.mubr.f32.mxu0 0.0
        %3102 = vmatmul.mubr.f32.gmra.mxu0 %v2962
        %v3103 = vpop.f32.mrf.mxu0
        %v3104 = vadd.f32 0.0, %v3103
        %v3105 = vpop.f32.mrf.mxu0
        %3106 = vmatprep.mubr.f32.mxu0 0.0
        %3107 = vmatmul.mubr.f32.gmra.mxu0 %v2965
        %v3108 = vpop.f32.mrf.mxu0
        %v3109 = vadd.f32 0.0, %v3108
        %v3110 = vpop.f32.mrf.mxu0
        %3111 = vdwg.mxu0
        %3128 = vrot.lane.b32.xlu0 %v1822, 32
        %v3129 = vpop.permute.xlu0 %3128
        %3130 = vrot.lane.b32.xlu0 %v1827, 32
        %v3131 = vpop.permute.xlu0 %3130
        %3132 = vrot.lane.b32.xlu0 %v1832, 32
        %v3133 = vpop.permute.xlu0 %3132
        %3134 = vrot.lane.b32.xlu0 %v1837, 32
        %v3135 = vpop.permute.xlu0 %3134
        %3136 = vrot.lane.b32.xlu0 %v1842, 32
        %v3137 = vpop.permute.xlu0 %3136
        %3138 = vrot.lane.b32.xlu0 %v1847, 32
        %v3139 = vpop.permute.xlu0 %3138
        %3140 = vrot.lane.b32.xlu0 %v1852, 32
        %v3141 = vpop.permute.xlu0 %3140
        %3142 = vrot.lane.b32.xlu0 %v1857, 32
        %v3143 = vpop.permute.xlu0 %3142
        %3144 = vrot.lane.b32.xlu0 %v1862, 32
        %v3145 = vpop.permute.xlu0 %3144
        %3146 = vrot.lane.b32.xlu0 %v1867, 32
        %v3147 = vpop.permute.xlu0 %3146
        %3148 = vrot.lane.b32.xlu0 %v1872, 32
        %v3149 = vpop.permute.xlu0 %3148
        %3150 = vrot.lane.b32.xlu0 %v1877, 32
        %v3151 = vpop.permute.xlu0 %3150
        %3152 = vrot.lane.b32.xlu0 %v1882, 32
        %v3153 = vpop.permute.xlu0 %3152
        %3154 = vrot.lane.b32.xlu0 %v1887, 32
        %v3155 = vpop.permute.xlu0 %3154
        %3156 = vrot.lane.b32.xlu0 %v1892, 32
        %v3157 = vpop.permute.xlu0 %3156
        %3158 = vrot.lane.b32.xlu0 %v1897, 32
        %v3159 = vpop.permute.xlu0 %3158
        %3192 = vrot.lane.b32.xlu0 %v2428, 64
        %v3193 = vpop.permute.xlu0 %3192
        %3194 = vrot.lane.b32.xlu0 %v2433, 64
        %v3195 = vpop.permute.xlu0 %3194
        %3196 = vrot.lane.b32.xlu0 %v2438, 64
        %v3197 = vpop.permute.xlu0 %3196
        %3198 = vrot.lane.b32.xlu0 %v2443, 64
        %v3199 = vpop.permute.xlu0 %3198
        %3200 = vrot.lane.b32.xlu0 %v2448, 64
        %v3201 = vpop.permute.xlu0 %3200
        %3202 = vrot.lane.b32.xlu0 %v2453, 64
        %v3203 = vpop.permute.xlu0 %3202
        %3204 = vrot.lane.b32.xlu0 %v2458, 64
        %v3205 = vpop.permute.xlu0 %3204
        %3206 = vrot.lane.b32.xlu0 %v2463, 64
        %v3207 = vpop.permute.xlu0 %3206
        %3208 = vrot.lane.b32.xlu0 %v2468, 64
        %v3209 = vpop.permute.xlu0 %3208
        %3210 = vrot.lane.b32.xlu0 %v2473, 64
        %v3211 = vpop.permute.xlu0 %3210
        %3212 = vrot.lane.b32.xlu0 %v2478, 64
        %v3213 = vpop.permute.xlu0 %3212
        %3214 = vrot.lane.b32.xlu0 %v2483, 64
        %v3215 = vpop.permute.xlu0 %3214
        %3216 = vrot.lane.b32.xlu0 %v2488, 64
        %v3217 = vpop.permute.xlu0 %3216
        %3218 = vrot.lane.b32.xlu0 %v2493, 64
        %v3219 = vpop.permute.xlu0 %3218
        %3220 = vrot.lane.b32.xlu0 %v2498, 64
        %v3221 = vpop.permute.xlu0 %3220
        %3222 = vrot.lane.b32.xlu0 %v2503, 64
        %v3223 = vpop.permute.xlu0 %3222
        %3256 = vrot.lane.b32.xlu0 %v3034, 96
        %v3257 = vpop.permute.xlu0 %3256
        %3258 = vrot.lane.b32.xlu0 %v3039, 96
        %v3259 = vpop.permute.xlu0 %3258
        %3260 = vrot.lane.b32.xlu0 %v3044, 96
        %v3261 = vpop.permute.xlu0 %3260
        %3262 = vrot.lane.b32.xlu0 %v3049, 96
        %v3263 = vpop.permute.xlu0 %3262
        %3264 = vrot.lane.b32.xlu0 %v3054, 96
        %v3265 = vpop.permute.xlu0 %3264
        %3266 = vrot.lane.b32.xlu0 %v3059, 96
        %v3267 = vpop.permute.xlu0 %3266
        %3268 = vrot.lane.b32.xlu0 %v3064, 96
        %v3269 = vpop.permute.xlu0 %3268
        %3270 = vrot.lane.b32.xlu0 %v3069, 96
        %v3271 = vpop.permute.xlu0 %3270
        %3272 = vrot.lane.b32.xlu0 %v3074, 96
        %v3273 = vpop.permute.xlu0 %3272
        %3274 = vrot.lane.b32.xlu0 %v3079, 96
        %v3275 = vpop.permute.xlu0 %3274
        %3276 = vrot.lane.b32.xlu0 %v3084, 96
        %v3277 = vpop.permute.xlu0 %3276
        %3278 = vrot.lane.b32.xlu0 %v3089, 96
        %v3279 = vpop.permute.xlu0 %3278
        %3280 = vrot.lane.b32.xlu0 %v3094, 96
        %v3281 = vpop.permute.xlu0 %3280
        %3282 = vrot.lane.b32.xlu0 %v3099, 96
        %v3283 = vpop.permute.xlu0 %3282
        %3284 = vrot.lane.b32.xlu0 %v3104, 96
        %v3285 = vpop.permute.xlu0 %3284
        %3286 = vrot.lane.b32.xlu0 %v3109, 96
        %v3287 = vpop.permute.xlu0 %3286
        %v3304 = vsel %vm715, %v1212, %v3129
        %v3305 = vsel %vm715, %v1217, %v3131
        %v3306 = vsel %vm715, %v1222, %v3133
        %v3307 = vsel %vm715, %v1227, %v3135
        %v3308 = vsel %vm715, %v1232, %v3137
        %v3309 = vsel %vm715, %v1237, %v3139
        %v3310 = vsel %vm715, %v1242, %v3141
        %v3311 = vsel %vm715, %v1247, %v3143
        %v3312 = vsel %vm715, %v1252, %v3145
        %v3313 = vsel %vm715, %v1257, %v3147
        %v3314 = vsel %vm715, %v1262, %v3149
        %v3315 = vsel %vm715, %v1267, %v3151
        %v3316 = vsel %vm715, %v1272, %v3153
        %v3317 = vsel %vm715, %v1277, %v3155
        %v3318 = vsel %vm715, %v1282, %v3157
        %v3319 = vsel %vm715, %v1287, %v3159
        %vm3320 = vcmask 523264
        %v3321 = vsel %vm3320, %v3304, %v3193
        %v3322 = vsel %vm3320, %v3305, %v3195
        %v3323 = vsel %vm3320, %v3306, %v3197
        %v3324 = vsel %vm3320, %v3307, %v3199
        %v3325 = vsel %vm3320, %v3308, %v3201
        %v3326 = vsel %vm3320, %v3309, %v3203
        %v3327 = vsel %vm3320, %v3310, %v3205
        %v3328 = vsel %vm3320, %v3311, %v3207
        %v3329 = vsel %vm3320, %v3312, %v3209
        %v3330 = vsel %vm3320, %v3313, %v3211
        %v3331 = vsel %vm3320, %v3314, %v3213
        %v3332 = vsel %vm3320, %v3315, %v3215
        %v3333 = vsel %vm3320, %v3316, %v3217
        %v3334 = vsel %vm3320, %v3317, %v3219
        %v3335 = vsel %vm3320, %v3318, %v3221
        %v3336 = vsel %vm3320, %v3319, %v3223
        %vm3337 = vcmask 785408
        %v3338 = vsel %vm3337, %v3321, %v3257
        %v3339 = vsel %vm3337, %v3322, %v3259
        %v3340 = vsel %vm3337, %v3323, %v3261
        %v3341 = vsel %vm3337, %v3324, %v3263
        %v3342 = vsel %vm3337, %v3325, %v3265
        %v3343 = vsel %vm3337, %v3326, %v3267
        %v3344 = vsel %vm3337, %v3327, %v3269
        %v3345 = vsel %vm3337, %v3328, %v3271
        %v3346 = vsel %vm3337, %v3329, %v3273
        %v3347 = vsel %vm3337, %v3330, %v3275
        %v3348 = vsel %vm3337, %v3331, %v3277
        %v3349 = vsel %vm3337, %v3332, %v3279
        %v3350 = vsel %vm3337, %v3333, %v3281
        %v3351 = vsel %vm3337, %v3334, %v3283
        %v3352 = vsel %vm3337, %v3335, %v3285
        %v3353 = vsel %vm3337, %v3336, %v3287
        %3354 = vst [vmem:[%s374] sm:$0xff] %v3338
        %3355 = vst [vmem:[%s374 + $0x8] sm:$0xff] %v3339
        %3356 = vst [vmem:[%s374 + $0x10] sm:$0xff] %v3340
        %3357 = vst [vmem:[%s374 + $0x18] sm:$0xff] %v3341
        %3358 = vst [vmem:[%s374 + $0x20] sm:$0xff] %v3342
        %3359 = vst [vmem:[%s374 + $0x28] sm:$0xff] %v3343
        %3360 = vst [vmem:[%s374 + $0x30] sm:$0xff] %v3344
        %3361 = vst [vmem:[%s374 + $0x38] sm:$0xff] %v3345
        %3362 = vst [vmem:[%s374 + $0x40] sm:$0xff] %v3346
        %3363 = vst [vmem:[%s374 + $0x48] sm:$0xff] %v3347
        %3364 = vst [vmem:[%s374 + $0x50] sm:$0xff] %v3348
        %3365 = vst [vmem:[%s374 + $0x58] sm:$0xff] %v3349
        %3366 = vst [vmem:[%s374 + $0x60] sm:$0xff] %v3350
        %3367 = vst [vmem:[%s374 + $0x68] sm:$0xff] %v3351
        %3368 = vst [vmem:[%s374 + $0x70] sm:$0xff] %v3352
        %3369 = vst [vmem:[%s374 + $0x78] sm:$0xff] %v3353
        %s3370 = sand.u32 %s212, 1
        %s3371 = scalar_lea.sflag [#allocation6], %s3370
        %s3372 = sand.u32 %s212, 1
        %s3373 = smul.addr %s3372, 128
        %s3374 = scalar_lea.vmem [#allocation12], %s3373
        // Predicated region
        $region69: #{tpu_custom_call.1} parent=47 // pred_check
          %p3375 = pneg %p222
        $region70: #{tpu_custom_call.1} parent=47 // pred_check_branch
          %3377 = sbr.rel (%p3375) target = $region72
        $region71: #{tpu_custom_call.1} parent=47 // pred_region
          %s3378 = smul.u32 16, %s31
          %s3380 = ssub.s32 2048, 2048
          %3381 = vsyncadd %s3371, %s3380
          %s3382 = smul.addr %s30, 32
          %s3383 = sadd.s32 %s3378, %s3382
          %s3384 = smul.addr %s3383, 128
          %s3385 = scalar_lea.hbm %s7, %s3384
          %s3386 = sshll.u32 %s3374, 4
          %s3387 = int_to_ptr.vmem [resolvable:$true] %s3386
          %3392 = dma.vmem_to_hbm [thread:$0]  %s3387, 2048, %s3385, %s3371, 128, 128, 8
        $region72: #{tpu_custom_call.1} parent=47 // pred_fallthru
          _
      $region48: #{tpu_custom_call.1} parent=5 // pred_fallthru
        _
      %p3393 = scmp.le.s32.totalorder 2, %s21
      // Predicated region
      $region73: #{tpu_custom_call.1} parent=5 // pred_check
        %p3394 = pneg %p3393
      $region74: #{tpu_custom_call.1} parent=5 // pred_check_branch
        %3396 = sbr.rel (%p3394) target = $region76
      $region75: #{tpu_custom_call.1} parent=5 // pred_region
        %s3397 = ssub.s32 %s21, 2
        // Predicated region
        $region77: #{tpu_custom_call.1} parent=75 // pred_check
          %p3398 = pneg %p228
        $region78: #{tpu_custom_call.1} parent=75 // pred_check_branch
          %3400 = sbr.rel (%p3398) target = $region80
        $region79: #{tpu_custom_call.1} parent=75 // pred_region
          %s3401 = sand.u32 %s213, 1
          %s3402 = scalar_lea.sflag [#allocation6], %s3401
          %s3403 = sand.u32 %s213, 1
          %s3404 = smul.addr %s3403, 128
          %s3405 = scalar_lea.vmem [#allocation12], %s3404
          %3406 = dma.done %s3402, 2048
        $region80: #{tpu_custom_call.1} parent=75 // pred_fallthru
          _
      $region76: #{tpu_custom_call.1} parent=5 // pred_fallthru
        _
    $region6: #{tpu_custom_call.1} parent=1 // loop_footer
      %s25 = sadd.s32 1, %s21
    $region7: #{tpu_custom_call.1} parent=1 // loop_footer_branch
      %20 = sbr.rel target = $region3
    $region8: #{tpu_custom_call.1} parent=1 // loop_exit
      _
    %3407 = vsyncpa [#allocation5], 1
    %s3408 = scalar_lea.sflag [#allocation5], 1
    %3409 = vsyncpa %s3408, 1
    %3410 = vsyncpa [#allocation8], 1
    %3411 = vsyncpa [#allocation11], 1
    %3412 = vsyncpa [#allocation6], 1
    %s3413 = scalar_lea.sflag [#allocation6], 1
    %3414 = vsyncpa %s3413, 1

</llo_original>
